<compile_context>
chip_gen: v7x
topology: tpu7x:2x2x1
jax: 0.10.0
libtpu: 0.0.40
codegen_flags: <defaults>
</compile_context>

<pallas_src>
import numpy as np
import jax
import jax.numpy as jnp
from jax.experimental import pallas as pl
from jax.experimental.pallas import tpu as pltpu

# ----- small, module-consistent sizes -----
T = 2               # time steps (batch dim of the backbone features)
C = 4               # nPlans
H = 8               # fsize
W = 8               # fsize
HW = H * W          # 64 flattened spatial positions
HWP = 128           # lane-padded spatial dim (full vreg width)
CP = 8              # sublane-padded channel block
NTAPS = 9           # 3x3 conv taps
K = NTAPS * CP      # 72 im2col rows (no zero-pad rows)
NGATE = 3 * CP      # 24 gate rows (r, u, o) per direction
HIDDEN = 128        # stand-in for the 4096-wide classifier hidden layers
NUM_CLASSES = 1
F_IN = 2 * C * HW   # 512 = flattened cat(forward, backward) hidden state

# Optional pure-JAX reference comparison (off in the smoke test so only the kernel
# path is exercised; flip on locally to validate numerics end-to-end).
RUN_REFERENCE_CHECK = False


# ============================ host-side constants ============================

def _make_masks():
    """(NTAPS+1, HWP) f32: rows 0..8 = per-tap validity masks (only the dx!=0 rows
    are used at runtime), row 9 = live-lane mask."""
    m = np.zeros((NTAPS + 1, HWP), np.float32)
    p = np.arange(HWP)
    xcol = p % W
    live = p < HW
    for k in range(NTAPS):
        ky, kx = divmod(k, 3)
        dyo, dxo = ky - 1, kx - 1
        off = dyo * W + dxo
        ok = (live & (p + off >= 0) & (p + off < HW)
              & (xcol + dxo >= 0) & (xcol + dxo < W))
        m[k] = ok
    m[NTAPS] = live
    return m


def pick_mxu_dtype():
    """bf16 MXU operands on v6e / v7x (bf16 VPU, fast bf16 MXU); f32 elsewhere (v5e
    has no bf16 VPU/EUP, so the extra casts are not worth it at these tiny shapes)."""
    try:
        kind = jax.devices()[0].device_kind.lower()
    except Exception:
        return jnp.float32
    return jnp.bfloat16 if any(s in kind for s in ("v6", "v7", "7x")) else jnp.float32


# ============================ Pallas kernel ============================

def _make_kernel(mxu_dtype):
    def kernel(x_ref, masks_ref, wx_all_ref, b_all_ref,
               g1_whru_ref, g1_who_ref, g2_whru_ref, g2_who_ref,
               w1_ref, b1_ref, w2_ref, b2_ref, w3_ref, b3_ref,
               out_ref):
        """One sample: bidirectional ConvGRU over T steps + MLP classifier."""
        masks = masks_ref[...]                       # (NTAPS+1, HWP)
        live = masks[NTAPS:NTAPS + 1, :]             # (1, HWP) valid-lane mask

        def build_patches(a):
            # a: (CP, HWP) zero-padded tile -> (K=72, HWP) im2col patch matrix
            # (row k*CP + c holds channel c shifted to tap k's neighbour).
            parts = []
            for k in range(NTAPS):
                ky, kx = divmod(k, 3)
                off = (ky - 1) * W + (kx - 1)
                # pltpu.roll == jnp.roll: out[p] = a[(p + off) % HWP] with shift=-off
                rolled = a if off == 0 else pltpu.roll(a, (-off) % HWP, 1)
                if kx != 1:   # dx != 0: mask row-boundary wraps; dx == 0 taps land in zero pad
                    rolled = rolled * masks[k:k + 1, :]
                parts.append(rolled)
            return jnp.concatenate(parts, axis=0).astype(mxu_dtype)

        # ---- input-gate matmul: hoisted off the recurrence and fused over both
        # directions (48 gate rows) and both time steps (256 lanes): one MXU pass. ----
        xp_cat = jnp.concatenate([build_patches(x_ref[0, t]) for t in range(T)], axis=1)
        xg_all = (jnp.dot(wx_all_ref[...], xp_cat, preferred_element_type=jnp.float32)
                  + b_all_ref[...])                  # (48, T*HWP), biases pre-broadcast

        def convgru_cell(d, t, h, whru_ref, who_ref):
            # r = sig(conv(x;Wr)+conv(h;Ur)+br), u likewise,
            # o = tanh(conv(x;Wo)+conv(h*r;Uo)+bo), h' = h*(1-u) + o*u.
            xg = xg_all[d * NGATE:(d + 1) * NGATE, t * HWP:(t + 1) * HWP]   # (24, HWP)
            hp = build_patches(h)
            hg = jnp.dot(whru_ref[...], hp, preferred_element_type=jnp.float32)  # (16, HWP)
            r = jax.nn.sigmoid(xg[0:CP] + hg[0:CP])
            u = jax.nn.sigmoid(xg[CP:2 * CP] + hg[CP:2 * CP])
            hrp = build_patches(h * r)
            o = jnp.tanh(xg[2 * CP:3 * CP]
                         + jnp.dot(who_ref[...], hrp, preferred_element_type=jnp.float32))
            # keep padded lanes of the state exactly zero for the next step's patches
            return (h * (1.0 - u) + o * u) * live

        # ---- forward direction (ConvGRU_1), h0 = zeros ----
        h = jnp.zeros((CP, HWP), jnp.float32)
        fwd = []
        for t in range(T):
            h = convgru_cell(0, t, h, g1_whru_ref, g1_who_ref)
            fwd.append(h)

        # ---- backward direction (ConvGRU_2); faithful to the source: h carries over
        # from the forward loop and the backward list is kept in append order ----
        bwd = []
        for t in reversed(range(T)):
            h = convgru_cell(1, t, h, g2_whru_ref, g2_who_ref)
            bwd.append(h)

        # ---- classifier: Linear(512->HIDDEN) -> ReLU -> (Dropout=id) -> Linear ->
        # ReLU -> (Dropout=id) -> Linear(->1).  First layer is a single (T,512)x(512,H)
        # MXU matmul on a lane-concatenated LHS in PyTorch flatten order (half, c, y, x).
        rows = []
        for t in range(T):
            segs = [hmap[c:c + 1, 0:HW] for hmap in (fwd[t], bwd[t]) for c in range(C)]
            rows.append(jnp.concatenate(segs, axis=1))              # (1, F_IN)
        lhs = jnp.concatenate(rows, axis=0).astype(mxu_dtype)       # (T, F_IN)
        x1 = jnp.dot(lhs, w1_ref[...], preferred_element_type=jnp.float32) + b1_ref[...]
        h1 = jnp.maximum(x1, 0.0)
        h2 = jnp.maximum(jnp.dot(h1.astype(mxu_dtype), w2_ref[...],
                                 preferred_element_type=jnp.float32) + b2_ref[...], 0.0)
        # final (HIDDEN -> 1) projection as a VPU dot instead of an N=1 MXU matmul
        out_ref[0] = jnp.sum(h2 * w3_ref[...], axis=-1, keepdims=True) + b3_ref[...]

    return kernel


def build_thicknessnet_forward(batch, mxu_dtype=jnp.float32):
    """Returns a jitted forward: (batch, T, C, H, W) features -> (batch, T, NUM_CLASSES)."""
    kernel = _make_kernel(mxu_dtype)

    def const_spec(shape):
        zeros = (0,) * len(shape)
        return pl.BlockSpec(shape, lambda b: zeros)

    in_specs = [
        pl.BlockSpec((1, T, CP, HWP), lambda b: (b, 0, 0, 0)),    # per-sample features
        const_spec((NTAPS + 1, HWP)),                             # tap / live masks
        const_spec((2 * NGATE, K)),                               # fused input-gate weights
        const_spec((2 * NGATE, T * HWP)),                         # pre-broadcast gate biases
        const_spec((2 * CP, K)),                                  # gru1 hidden r/u weights
        const_spec((CP, K)),                                      # gru1 hidden o weights
        const_spec((2 * CP, K)),                                  # gru2 hidden r/u weights
        const_spec((CP, K)),                                      # gru2 hidden o weights
        const_spec((F_IN, HIDDEN)), const_spec((1, HIDDEN)),      # classifier layer 1
        const_spec((HIDDEN, HIDDEN)), const_spec((1, HIDDEN)),    # classifier layer 2
        const_spec((1, HIDDEN)), const_spec((1, 1)),              # classifier layer 3 (transposed)
    ]

    call = pl.pallas_call(
        kernel,
        out_shape=jax.ShapeDtypeStruct((batch, T, NUM_CLASSES), jnp.float32),
        grid=(batch,),
        in_specs=in_specs,
        out_specs=pl.BlockSpec((1, T, NUM_CLASSES), lambda b: (b, 0, 0)),
        compiler_params=pltpu.CompilerParams(dimension_semantics=("parallel",)),
        cost_estimate=pl.CostEstimate(flops=batch * 4_000_000,
                                      transcendentals=batch * 12_288,
                                      bytes_accessed=batch * 16_000 + 420_000),
    )

    @jax.jit
    def forward(feat, packed):
        x = feat.reshape(batch, T, C, HW)
        x = jnp.pad(x, ((0, 0), (0, 0), (0, CP - C), (0, HWP - HW)))  # pad channels / lanes
        return call(x, *packed)

    return forward


# ============================ parameter init & packing ============================

def init_convgru_params(key):
    """Raw ConvGRUCell(nPlans, nPlans, 3) params: three Conv2d(2C -> C, 3x3, pad=1)
    gates (reset r, update u, candidate o) acting on cat([x, h])."""
    ks = jax.random.split(key, 6)
    p = {}
    for i, g in enumerate(("r", "u", "o")):
        p[f"w_{g}"] = 0.1 * jax.random.normal(ks[2 * i], (C, 2 * C, 3, 3), jnp.float32)
        p[f"b_{g}"] = 0.1 * jax.random.normal(ks[2 * i + 1], (C,), jnp.float32)
    return p


def init_classifier_params(key):
    """Linear(F_IN->HIDDEN) -> ReLU -> Dropout -> Linear -> ReLU -> Dropout -> Linear(->1).
    w1 rows follow the PyTorch flatten order of cat((fwd, bwd), dim=1): (half, c, y, x)."""
    ks = jax.random.split(key, 3)
    return {
        "w1": 0.05 * jax.random.normal(ks[0], (F_IN, HIDDEN), jnp.float32),
        "b1": jnp.zeros((1, HIDDEN), jnp.float32),
        "w2": 0.05 * jax.random.normal(ks[1], (HIDDEN, HIDDEN), jnp.float32),
        "b2": jnp.zeros((1, HIDDEN), jnp.float32),
        "w3": 0.05 * jax.random.normal(ks[2], (1, HIDDEN), jnp.float32),  # final layer (transposed)
        "b3": jnp.zeros((1, 1), jnp.float32),
    }


def _dense_gate_w(w_half):
    """(C, C, 3, 3) conv-weight half -> (CP, K) dense im2col gate weights."""
    w = np.asarray(w_half, np.float32)
    out = np.zeros((CP, K), np.float32)
    for co in range(C):
        for ci in range(C):
            for ky in range(3):
                for kx in range(3):
                    out[co, (ky * 3 + kx) * CP + ci] = w[co, ci, ky, kx]
    return out


def _pack_gru(p):
    wx = np.concatenate([_dense_gate_w(np.asarray(p[f"w_{g}"])[:, :C]) for g in ("r", "u", "o")], 0)
    whru = np.concatenate([_dense_gate_w(np.asarray(p[f"w_{g}"])[:, C:]) for g in ("r", "u")], 0)
    who = _dense_gate_w(np.asarray(p["w_o"])[:, C:])
    b = np.zeros((NGATE,), np.float32)
    for i, g in enumerate(("r", "u", "o")):
        b[i * CP:i * CP + C] = np.asarray(p[f"b_{g}"])
    return wx, whru, who, b


def pack_params(gru1, gru2, cls, mxu_dtype=jnp.float32):
    """Packs both ConvGRU directions + classifier into the kernel's dense layouts."""
    wx1, whru1, who1, b1g = _pack_gru(gru1)
    wx2, whru2, who2, b2g = _pack_gru(gru2)
    wx_all = np.concatenate([wx1, wx2], axis=0)                   # (48, 72)
    # gate biases pre-broadcast over the live lanes of both time-step halves
    b_all = np.zeros((2 * NGATE, T * HWP), np.float32)
    bvec = np.concatenate([b1g, b2g])[:, None]
    for t in range(T):
        b_all[:, t * HWP: t * HWP + HW] = bvec
    jd = lambda a: jnp.asarray(np.asarray(a), mxu_dtype)          # MXU operands
    jf = lambda a: jnp.asarray(np.asarray(a), jnp.float32)        # VPU operands
    return (jf(_make_masks()),
            jd(wx_all), jf(b_all),
            jd(whru1), jd(who1), jd(whru2), jd(who2),
            jd(cls["w1"]), jf(cls["b1"]), jd(cls["w2"]), jf(cls["b2"]),
            jf(cls["w3"]), jf(cls["b3"]))


# ============================ pure-JAX reference (optional check) ============================

def _conv3x3_same(x, w):
    return jax.lax.conv_general_dilated(
        x, w, window_strides=(1, 1), padding="SAME",
        dimension_numbers=("NCHW", "OIHW", "NCHW"),
        precision=jax.lax.Precision.HIGHEST)


def _convgru_cell_ref(x, h, p):
    xh = jnp.concatenate([x, h], axis=1)
    r = jax.nn.sigmoid(_conv3x3_same(xh, p["w_r"]) + p["b_r"][None, :, None, None])
    u = jax.nn.sigmoid(_conv3x3_same(xh, p["w_u"]) + p["b_u"][None, :, None, None])
    o = jnp.tanh(_conv3x3_same(jnp.concatenate([x, h * r], axis=1), p["w_o"])
                 + p["b_o"][None, :, None, None])
    return h * (1.0 - u) + o * u


def thicknessnet_reference(feat, gru1, gru2, cls):
    """Reference semantics for one (T, C, H, W) sequence (matches the source module)."""
    hi = jax.lax.Precision.HIGHEST
    h = jnp.zeros((1, C, H, W), jnp.float32)
    fwd, bwd = [], []
    for t in range(T):
        h = _convgru_cell_ref(feat[t:t + 1], h, gru1)
        fwd.append(h)
    for t in reversed(range(T)):                     # h carries over; append order kept
        h = _convgru_cell_ref(feat[t:t + 1], h, gru2)
        bwd.append(h)
    outs = []
    for t in range(T):
        flat = jnp.concatenate([fwd[t], bwd[t]], axis=1).reshape(1, F_IN)
        h1 = jax.nn.relu(jnp.dot(flat, cls["w1"], precision=hi) + cls["b1"])
        h2 = jax.nn.relu(jnp.dot(h1, cls["w2"], precision=hi) + cls["b2"])
        outs.append(jnp.dot(h2, cls["w3"].T, precision=hi) + cls["b3"])
    return jnp.concatenate(outs, axis=0)             # (T, NUM_CLASSES)


# ============================ main ============================

if __name__ == "__main__":
    key = jax.random.PRNGKey(0)
    k_feat, k_g1, k_g2, k_cls = jax.random.split(key, 4)

    B = 2  # batch of independent sequences -> "parallel" grid axis (2nd TC on v7x, amortization elsewhere)
    feat = jax.random.normal(k_feat, (B, T, C, H, W), jnp.float32)   # backbone features, NCHW per step
    gru1 = init_convgru_params(k_g1)    # ConvGRU_1
    gru2 = init_convgru_params(k_g2)    # ConvGRU_2
    cls = init_classifier_params(k_cls)

    mxu_dtype = pick_mxu_dtype()
    packed = pack_params(gru1, gru2, cls, mxu_dtype)
    forward = build_thicknessnet_forward(B, mxu_dtype)

    out = jax.block_until_ready(forward(feat, packed))
    assert out.shape == (B, T, NUM_CLASSES), out.shape
    assert bool(jnp.all(jnp.isfinite(out)))

    if RUN_REFERENCE_CHECK:
        ref = jnp.stack([thicknessnet_reference(feat[b], gru1, gru2, cls) for b in range(B)])
        np.testing.assert_allclose(np.asarray(out), np.asarray(ref), rtol=5e-2, atol=5e-2)

    print("KERNEL_OK")
</pallas_src>

<mosaic_0001>
module attributes {stable_mosaic.version = 11 : i64} {
  func.func @kernel(%arg0: i32, %arg1: memref<1x2x8x128xf32, #tpu.memory_space<vmem>>, %arg2: memref<10x128xf32, #tpu.memory_space<vmem>>, %arg3: memref<48x72xf32, #tpu.memory_space<vmem>>, %arg4: memref<48x256xf32, #tpu.memory_space<vmem>>, %arg5: memref<16x72xf32, #tpu.memory_space<vmem>>, %arg6: memref<8x72xf32, #tpu.memory_space<vmem>>, %arg7: memref<16x72xf32, #tpu.memory_space<vmem>>, %arg8: memref<8x72xf32, #tpu.memory_space<vmem>>, %arg9: memref<512x128xf32, #tpu.memory_space<vmem>>, %arg10: memref<1x128xf32, #tpu.memory_space<vmem>>, %arg11: memref<128x128xf32, #tpu.memory_space<vmem>>, %arg12: memref<1x128xf32, #tpu.memory_space<vmem>>, %arg13: memref<1x128xf32, #tpu.memory_space<vmem>>, %arg14: memref<1x1xf32, #tpu.memory_space<vmem>>, %arg15: memref<1x2x1xf32, #tpu.memory_space<vmem>>) attributes {dimension_semantics = [#tpu.dimension_semantics<parallel>], iteration_bounds = array<i64: 2>, scalar_prefetch = 0 : i64, scratch_operands = 0 : i64, tpu.core_type = #tpu.core_type<tc>, window_params = [{transform_indices = @transform_0, window_bounds = array<i64: 1, 2, 8, 128>}, {pipeline_mode = #tpu.pipeline_mode<synchronous>, transform_indices = @transform_1, window_bounds = array<i64: 10, 128>}, {pipeline_mode = #tpu.pipeline_mode<synchronous>, transform_indices = @transform_2, window_bounds = array<i64: 48, 72>}, {pipeline_mode = #tpu.pipeline_mode<synchronous>, transform_indices = @transform_3, window_bounds = array<i64: 48, 256>}, {pipeline_mode = #tpu.pipeline_mode<synchronous>, transform_indices = @transform_4, window_bounds = array<i64: 16, 72>}, {pipeline_mode = #tpu.pipeline_mode<synchronous>, transform_indices = @transform_5, window_bounds = array<i64: 8, 72>}, {pipeline_mode = #tpu.pipeline_mode<synchronous>, transform_indices = @transform_6, window_bounds = array<i64: 16, 72>}, {pipeline_mode = #tpu.pipeline_mode<synchronous>, transform_indices = @transform_7, window_bounds = array<i64: 8, 72>}, {pipeline_mode = #tpu.pipeline_mode<synchronous>, transform_indices = @transform_8, window_bounds = array<i64: 512, 128>}, {pipeline_mode = #tpu.pipeline_mode<synchronous>, transform_indices = @transform_9, window_bounds = array<i64: 1, 128>}, {pipeline_mode = #tpu.pipeline_mode<synchronous>, transform_indices = @transform_10, window_bounds = array<i64: 128, 128>}, {pipeline_mode = #tpu.pipeline_mode<synchronous>, transform_indices = @transform_11, window_bounds = array<i64: 1, 128>}, {pipeline_mode = #tpu.pipeline_mode<synchronous>, transform_indices = @transform_12, window_bounds = array<i64: 1, 128>}, {pipeline_mode = #tpu.pipeline_mode<synchronous>, transform_indices = @transform_13, window_bounds = array<i64: 1, 1>}, {transform_indices = @transform_14, window_bounds = array<i64: 1, 2, 1>}]} {
    %c0 = arith.constant 0 : index
    %c0_0 = arith.constant 0 : index
    %0 = vector.load %arg2[%c0, %c0_0] : memref<10x128xf32, #tpu.memory_space<vmem>>, vector<10x128xf32>
    %1 = vector.extract_strided_slice %0 {offsets = [9, 0], sizes = [1, 128], strides = [1, 1]} : vector<10x128xf32> to vector<1x128xf32>
    %c0_1 = arith.constant 0 : index
    %c0_2 = arith.constant 0 : index
    %c0_3 = arith.constant 0 : index
    %c0_4 = arith.constant 0 : index
    %2 = vector.load %arg1[%c0_1, %c0_2, %c0_3, %c0_4] : memref<1x2x8x128xf32, #tpu.memory_space<vmem>>, vector<1x1x8x128xf32>
    %3 = vector.shape_cast %2 : vector<1x1x8x128xf32> to vector<8x128xf32>
    %c9_i32 = arith.constant 9 : i32
    %4 = tpu.dynamic_rotate %3 by %c9_i32 dim 1 : vector<8x128xf32>, i32 -> vector<8x128xf32>
    %5 = vector.extract_strided_slice %0 {offsets = [0, 0], sizes = [1, 128], strides = [1, 1]} : vector<10x128xf32> to vector<1x128xf32>
    %6 = vector.broadcast %5 : vector<1x128xf32> to vector<8x128xf32>
    %7 = arith.mulf %4, %6 : vector<8x128xf32>
    %c8_i32 = arith.constant 8 : i32
    %8 = tpu.dynamic_rotate %3 by %c8_i32 dim 1 : vector<8x128xf32>, i32 -> vector<8x128xf32>
    %c7_i32 = arith.constant 7 : i32
    %9 = tpu.dynamic_rotate %3 by %c7_i32 dim 1 : vector<8x128xf32>, i32 -> vector<8x128xf32>
    %10 = vector.extract_strided_slice %0 {offsets = [2, 0], sizes = [1, 128], strides = [1, 1]} : vector<10x128xf32> to vector<1x128xf32>
    %11 = vector.broadcast %10 : vector<1x128xf32> to vector<8x128xf32>
    %12 = arith.mulf %9, %11 : vector<8x128xf32>
    %c1_i32 = arith.constant 1 : i32
    %13 = tpu.dynamic_rotate %3 by %c1_i32 dim 1 : vector<8x128xf32>, i32 -> vector<8x128xf32>
    %14 = vector.extract_strided_slice %0 {offsets = [3, 0], sizes = [1, 128], strides = [1, 1]} : vector<10x128xf32> to vector<1x128xf32>
    %15 = vector.broadcast %14 : vector<1x128xf32> to vector<8x128xf32>
    %16 = arith.mulf %13, %15 : vector<8x128xf32>
    %c127_i32 = arith.constant 127 : i32
    %17 = tpu.dynamic_rotate %3 by %c127_i32 dim 1 : vector<8x128xf32>, i32 -> vector<8x128xf32>
    %18 = vector.extract_strided_slice %0 {offsets = [5, 0], sizes = [1, 128], strides = [1, 1]} : vector<10x128xf32> to vector<1x128xf32>
    %19 = vector.broadcast %18 : vector<1x128xf32> to vector<8x128xf32>
    %20 = arith.mulf %17, %19 : vector<8x128xf32>
    %c121_i32 = arith.constant 121 : i32
    %21 = tpu.dynamic_rotate %3 by %c121_i32 dim 1 : vector<8x128xf32>, i32 -> vector<8x128xf32>
    %22 = vector.extract_strided_slice %0 {offsets = [6, 0], sizes = [1, 128], strides = [1, 1]} : vector<10x128xf32> to vector<1x128xf32>
    %23 = vector.broadcast %22 : vector<1x128xf32> to vector<8x128xf32>
    %24 = arith.mulf %21, %23 : vector<8x128xf32>
    %c120_i32 = arith.constant 120 : i32
    %25 = tpu.dynamic_rotate %3 by %c120_i32 dim 1 : vector<8x128xf32>, i32 -> vector<8x128xf32>
    %c119_i32 = arith.constant 119 : i32
    %26 = tpu.dynamic_rotate %3 by %c119_i32 dim 1 : vector<8x128xf32>, i32 -> vector<8x128xf32>
    %27 = vector.extract_strided_slice %0 {offsets = [8, 0], sizes = [1, 128], strides = [1, 1]} : vector<10x128xf32> to vector<1x128xf32>
    %28 = vector.broadcast %27 : vector<1x128xf32> to vector<8x128xf32>
    %29 = arith.mulf %26, %28 : vector<8x128xf32>
    %30 = tpu.concatenate %7, %8, %12, %16, %3, %20, %24, %25, %29 in 0 : vector<8x128xf32>, vector<8x128xf32>, vector<8x128xf32>, vector<8x128xf32>, vector<8x128xf32>, vector<8x128xf32>, vector<8x128xf32>, vector<8x128xf32>, vector<8x128xf32> -> vector<72x128xf32>
    %c0_5 = arith.constant 0 : index
    %c1 = arith.constant 1 : index
    %c0_6 = arith.constant 0 : index
    %c0_7 = arith.constant 0 : index
    %31 = vector.load %arg1[%c0_5, %c1, %c0_6, %c0_7] : memref<1x2x8x128xf32, #tpu.memory_space<vmem>>, vector<1x1x8x128xf32>
    %32 = vector.shape_cast %31 : vector<1x1x8x128xf32> to vector<8x128xf32>
    %c9_i32_8 = arith.constant 9 : i32
    %33 = tpu.dynamic_rotate %32 by %c9_i32_8 dim 1 : vector<8x128xf32>, i32 -> vector<8x128xf32>
    %34 = vector.extract_strided_slice %0 {offsets = [0, 0], sizes = [1, 128], strides = [1, 1]} : vector<10x128xf32> to vector<1x128xf32>
    %35 = vector.broadcast %34 : vector<1x128xf32> to vector<8x128xf32>
    %36 = arith.mulf %33, %35 : vector<8x128xf32>
    %c8_i32_9 = arith.constant 8 : i32
    %37 = tpu.dynamic_rotate %32 by %c8_i32_9 dim 1 : vector<8x128xf32>, i32 -> vector<8x128xf32>
    %c7_i32_10 = arith.constant 7 : i32
    %38 = tpu.dynamic_rotate %32 by %c7_i32_10 dim 1 : vector<8x128xf32>, i32 -> vector<8x128xf32>
    %39 = vector.extract_strided_slice %0 {offsets = [2, 0], sizes = [1, 128], strides = [1, 1]} : vector<10x128xf32> to vector<1x128xf32>
    %40 = vector.broadcast %39 : vector<1x128xf32> to vector<8x128xf32>
    %41 = arith.mulf %38, %40 : vector<8x128xf32>
    %c1_i32_11 = arith.constant 1 : i32
    %42 = tpu.dynamic_rotate %32 by %c1_i32_11 dim 1 : vector<8x128xf32>, i32 -> vector<8x128xf32>
    %43 = vector.extract_strided_slice %0 {offsets = [3, 0], sizes = [1, 128], strides = [1, 1]} : vector<10x128xf32> to vector<1x128xf32>
    %44 = vector.broadcast %43 : vector<1x128xf32> to vector<8x128xf32>
    %45 = arith.mulf %42, %44 : vector<8x128xf32>
    %c127_i32_12 = arith.constant 127 : i32
    %46 = tpu.dynamic_rotate %32 by %c127_i32_12 dim 1 : vector<8x128xf32>, i32 -> vector<8x128xf32>
    %47 = vector.extract_strided_slice %0 {offsets = [5, 0], sizes = [1, 128], strides = [1, 1]} : vector<10x128xf32> to vector<1x128xf32>
    %48 = vector.broadcast %47 : vector<1x128xf32> to vector<8x128xf32>
    %49 = arith.mulf %46, %48 : vector<8x128xf32>
    %c121_i32_13 = arith.constant 121 : i32
    %50 = tpu.dynamic_rotate %32 by %c121_i32_13 dim 1 : vector<8x128xf32>, i32 -> vector<8x128xf32>
    %51 = vector.extract_strided_slice %0 {offsets = [6, 0], sizes = [1, 128], strides = [1, 1]} : vector<10x128xf32> to vector<1x128xf32>
    %52 = vector.broadcast %51 : vector<1x128xf32> to vector<8x128xf32>
    %53 = arith.mulf %50, %52 : vector<8x128xf32>
    %c120_i32_14 = arith.constant 120 : i32
    %54 = tpu.dynamic_rotate %32 by %c120_i32_14 dim 1 : vector<8x128xf32>, i32 -> vector<8x128xf32>
    %c119_i32_15 = arith.constant 119 : i32
    %55 = tpu.dynamic_rotate %32 by %c119_i32_15 dim 1 : vector<8x128xf32>, i32 -> vector<8x128xf32>
    %56 = vector.extract_strided_slice %0 {offsets = [8, 0], sizes = [1, 128], strides = [1, 1]} : vector<10x128xf32> to vector<1x128xf32>
    %57 = vector.broadcast %56 : vector<1x128xf32> to vector<8x128xf32>
    %58 = arith.mulf %55, %57 : vector<8x128xf32>
    %59 = tpu.concatenate %36, %37, %41, %45, %32, %49, %53, %54, %58 in 0 : vector<8x128xf32>, vector<8x128xf32>, vector<8x128xf32>, vector<8x128xf32>, vector<8x128xf32>, vector<8x128xf32>, vector<8x128xf32>, vector<8x128xf32>, vector<8x128xf32> -> vector<72x128xf32>
    %60 = tpu.concatenate %30, %59 in 1 : vector<72x128xf32>, vector<72x128xf32> -> vector<72x256xf32>
    %c0_16 = arith.constant 0 : index
    %c0_17 = arith.constant 0 : index
    %61 = vector.load %arg3[%c0_16, %c0_17] : memref<48x72xf32, #tpu.memory_space<vmem>>, vector<48x72xf32>
    %cst = arith.constant dense<0.000000e+00> : vector<48x256xf32>
    %62 = tpu.matmul %61, %60, %cst {dimension_numbers = #tpu.dot_dimension_numbers<[1], [0], [0], [1], [0, 0, 1, 1], [], []>} : vector<48x72xf32>, vector<72x256xf32>, vector<48x256xf32> -> vector<48x256xf32>
    %c0_18 = arith.constant 0 : index
    %c0_19 = arith.constant 0 : index
    %63 = vector.load %arg4[%c0_18, %c0_19] : memref<48x256xf32, #tpu.memory_space<vmem>>, vector<48x256xf32>
    %64 = arith.addf %62, %63 : vector<48x256xf32>
    %cst_20 = arith.constant 0.000000e+00 : f32
    %65 = vector.broadcast %cst_20 : f32 to vector<8x128xf32>
    %66 = vector.extract_strided_slice %64 {offsets = [0, 0], sizes = [24, 128], strides = [1, 1]} : vector<48x256xf32> to vector<24x128xf32>
    %c9_i32_21 = arith.constant 9 : i32
    %67 = tpu.dynamic_rotate %65 by %c9_i32_21 dim 1 : vector<8x128xf32>, i32 -> vector<8x128xf32>
    %68 = vector.extract_strided_slice %0 {offsets = [0, 0], sizes = [1, 128], strides = [1, 1]} : vector<10x128xf32> to vector<1x128xf32>
    %69 = vector.broadcast %68 : vector<1x128xf32> to vector<8x128xf32>
    %70 = arith.mulf %67, %69 : vector<8x128xf32>
    %c8_i32_22 = arith.constant 8 : i32
    %71 = tpu.dynamic_rotate %65 by %c8_i32_22 dim 1 : vector<8x128xf32>, i32 -> vector<8x128xf32>
    %c7_i32_23 = arith.constant 7 : i32
    %72 = tpu.dynamic_rotate %65 by %c7_i32_23 dim 1 : vector<8x128xf32>, i32 -> vector<8x128xf32>
    %73 = vector.extract_strided_slice %0 {offsets = [2, 0], sizes = [1, 128], strides = [1, 1]} : vector<10x128xf32> to vector<1x128xf32>
    %74 = vector.broadcast %73 : vector<1x128xf32> to vector<8x128xf32>
    %75 = arith.mulf %72, %74 : vector<8x128xf32>
    %c1_i32_24 = arith.constant 1 : i32
    %76 = tpu.dynamic_rotate %65 by %c1_i32_24 dim 1 : vector<8x128xf32>, i32 -> vector<8x128xf32>
    %77 = vector.extract_strided_slice %0 {offsets = [3, 0], sizes = [1, 128], strides = [1, 1]} : vector<10x128xf32> to vector<1x128xf32>
    %78 = vector.broadcast %77 : vector<1x128xf32> to vector<8x128xf32>
    %79 = arith.mulf %76, %78 : vector<8x128xf32>
    %c127_i32_25 = arith.constant 127 : i32
    %80 = tpu.dynamic_rotate %65 by %c127_i32_25 dim 1 : vector<8x128xf32>, i32 -> vector<8x128xf32>
    %81 = vector.extract_strided_slice %0 {offsets = [5, 0], sizes = [1, 128], strides = [1, 1]} : vector<10x128xf32> to vector<1x128xf32>
    %82 = vector.broadcast %81 : vector<1x128xf32> to vector<8x128xf32>
    %83 = arith.mulf %80, %82 : vector<8x128xf32>
    %c121_i32_26 = arith.constant 121 : i32
    %84 = tpu.dynamic_rotate %65 by %c121_i32_26 dim 1 : vector<8x128xf32>, i32 -> vector<8x128xf32>
    %85 = vector.extract_strided_slice %0 {offsets = [6, 0], sizes = [1, 128], strides = [1, 1]} : vector<10x128xf32> to vector<1x128xf32>
    %86 = vector.broadcast %85 : vector<1x128xf32> to vector<8x128xf32>
    %87 = arith.mulf %84, %86 : vector<8x128xf32>
    %c120_i32_27 = arith.constant 120 : i32
    %88 = tpu.dynamic_rotate %65 by %c120_i32_27 dim 1 : vector<8x128xf32>, i32 -> vector<8x128xf32>
    %c119_i32_28 = arith.constant 119 : i32
    %89 = tpu.dynamic_rotate %65 by %c119_i32_28 dim 1 : vector<8x128xf32>, i32 -> vector<8x128xf32>
    %90 = vector.extract_strided_slice %0 {offsets = [8, 0], sizes = [1, 128], strides = [1, 1]} : vector<10x128xf32> to vector<1x128xf32>
    %91 = vector.broadcast %90 : vector<1x128xf32> to vector<8x128xf32>
    %92 = arith.mulf %89, %91 : vector<8x128xf32>
    %93 = tpu.concatenate %70, %71, %75, %79, %65, %83, %87, %88, %92 in 0 : vector<8x128xf32>, vector<8x128xf32>, vector<8x128xf32>, vector<8x128xf32>, vector<8x128xf32>, vector<8x128xf32>, vector<8x128xf32>, vector<8x128xf32>, vector<8x128xf32> -> vector<72x128xf32>
    %c0_29 = arith.constant 0 : index
    %c0_30 = arith.constant 0 : index
    %94 = vector.load %arg5[%c0_29, %c0_30] : memref<16x72xf32, #tpu.memory_space<vmem>>, vector<16x72xf32>
    %cst_31 = arith.constant dense<0.000000e+00> : vector<16x128xf32>
    %95 = tpu.matmul %94, %93, %cst_31 {dimension_numbers = #tpu.dot_dimension_numbers<[1], [0], [0], [1], [0, 0, 1, 1], [], []>} : vector<16x72xf32>, vector<72x128xf32>, vector<16x128xf32> -> vector<16x128xf32>
    %96 = vector.extract_strided_slice %66 {offsets = [0, 0], sizes = [8, 128], strides = [1, 1]} : vector<24x128xf32> to vector<8x128xf32>
    %97 = vector.extract_strided_slice %95 {offsets = [0, 0], sizes = [8, 128], strides = [1, 1]} : vector<16x128xf32> to vector<8x128xf32>
    %98 = arith.addf %96, %97 : vector<8x128xf32>
    %99 = arith.negf %98 : vector<8x128xf32>
    %100 = math.exp %99 : vector<8x128xf32>
    %cst_32 = arith.constant 1.000000e+00 : f32
    %101 = vector.broadcast %cst_32 : f32 to vector<8x128xf32>
    %102 = arith.addf %101, %100 : vector<8x128xf32>
    %103 = arith.divf %101, %102 : vector<8x128xf32>
    %104 = vector.extract_strided_slice %66 {offsets = [8, 0], sizes = [8, 128], strides = [1, 1]} : vector<24x128xf32> to vector<8x128xf32>
    %105 = vector.extract_strided_slice %95 {offsets = [8, 0], sizes = [8, 128], strides = [1, 1]} : vector<16x128xf32> to vector<8x128xf32>
    %106 = arith.addf %104, %105 : vector<8x128xf32>
    %107 = arith.negf %106 : vector<8x128xf32>
    %108 = math.exp %107 : vector<8x128xf32>
    %cst_33 = arith.constant 1.000000e+00 : f32
    %109 = vector.broadcast %cst_33 : f32 to vector<8x128xf32>
    %110 = arith.addf %109, %108 : vector<8x128xf32>
    %111 = arith.divf %109, %110 : vector<8x128xf32>
    %112 = arith.mulf %65, %103 : vector<8x128xf32>
    %c9_i32_34 = arith.constant 9 : i32
    %113 = tpu.dynamic_rotate %112 by %c9_i32_34 dim 1 : vector<8x128xf32>, i32 -> vector<8x128xf32>
    %114 = vector.extract_strided_slice %0 {offsets = [0, 0], sizes = [1, 128], strides = [1, 1]} : vector<10x128xf32> to vector<1x128xf32>
    %115 = vector.broadcast %114 : vector<1x128xf32> to vector<8x128xf32>
    %116 = arith.mulf %113, %115 : vector<8x128xf32>
    %c8_i32_35 = arith.constant 8 : i32
    %117 = tpu.dynamic_rotate %112 by %c8_i32_35 dim 1 : vector<8x128xf32>, i32 -> vector<8x128xf32>
    %c7_i32_36 = arith.constant 7 : i32
    %118 = tpu.dynamic_rotate %112 by %c7_i32_36 dim 1 : vector<8x128xf32>, i32 -> vector<8x128xf32>
    %119 = vector.extract_strided_slice %0 {offsets = [2, 0], sizes = [1, 128], strides = [1, 1]} : vector<10x128xf32> to vector<1x128xf32>
    %120 = vector.broadcast %119 : vector<1x128xf32> to vector<8x128xf32>
    %121 = arith.mulf %118, %120 : vector<8x128xf32>
    %c1_i32_37 = arith.constant 1 : i32
    %122 = tpu.dynamic_rotate %112 by %c1_i32_37 dim 1 : vector<8x128xf32>, i32 -> vector<8x128xf32>
    %123 = vector.extract_strided_slice %0 {offsets = [3, 0], sizes = [1, 128], strides = [1, 1]} : vector<10x128xf32> to vector<1x128xf32>
    %124 = vector.broadcast %123 : vector<1x128xf32> to vector<8x128xf32>
    %125 = arith.mulf %122, %124 : vector<8x128xf32>
    %c127_i32_38 = arith.constant 127 : i32
    %126 = tpu.dynamic_rotate %112 by %c127_i32_38 dim 1 : vector<8x128xf32>, i32 -> vector<8x128xf32>
    %127 = vector.extract_strided_slice %0 {offsets = [5, 0], sizes = [1, 128], strides = [1, 1]} : vector<10x128xf32> to vector<1x128xf32>
    %128 = vector.broadcast %127 : vector<1x128xf32> to vector<8x128xf32>
    %129 = arith.mulf %126, %128 : vector<8x128xf32>
    %c121_i32_39 = arith.constant 121 : i32
    %130 = tpu.dynamic_rotate %112 by %c121_i32_39 dim 1 : vector<8x128xf32>, i32 -> vector<8x128xf32>
    %131 = vector.extract_strided_slice %0 {offsets = [6, 0], sizes = [1, 128], strides = [1, 1]} : vector<10x128xf32> to vector<1x128xf32>
    %132 = vector.broadcast %131 : vector<1x128xf32> to vector<8x128xf32>
    %133 = arith.mulf %130, %132 : vector<8x128xf32>
    %c120_i32_40 = arith.constant 120 : i32
    %134 = tpu.dynamic_rotate %112 by %c120_i32_40 dim 1 : vector<8x128xf32>, i32 -> vector<8x128xf32>
    %c119_i32_41 = arith.constant 119 : i32
    %135 = tpu.dynamic_rotate %112 by %c119_i32_41 dim 1 : vector<8x128xf32>, i32 -> vector<8x128xf32>
    %136 = vector.extract_strided_slice %0 {offsets = [8, 0], sizes = [1, 128], strides = [1, 1]} : vector<10x128xf32> to vector<1x128xf32>
    %137 = vector.broadcast %136 : vector<1x128xf32> to vector<8x128xf32>
    %138 = arith.mulf %135, %137 : vector<8x128xf32>
    %139 = tpu.concatenate %116, %117, %121, %125, %112, %129, %133, %134, %138 in 0 : vector<8x128xf32>, vector<8x128xf32>, vector<8x128xf32>, vector<8x128xf32>, vector<8x128xf32>, vector<8x128xf32>, vector<8x128xf32>, vector<8x128xf32>, vector<8x128xf32> -> vector<72x128xf32>
    %140 = vector.extract_strided_slice %66 {offsets = [16, 0], sizes = [8, 128], strides = [1, 1]} : vector<24x128xf32> to vector<8x128xf32>
    %c0_42 = arith.constant 0 : index
    %c0_43 = arith.constant 0 : index
    %141 = vector.load %arg6[%c0_42, %c0_43] : memref<8x72xf32, #tpu.memory_space<vmem>>, vector<8x72xf32>
    %cst_44 = arith.constant dense<0.000000e+00> : vector<8x128xf32>
    %142 = tpu.matmul %141, %139, %cst_44 {dimension_numbers = #tpu.dot_dimension_numbers<[1], [0], [0], [1], [0, 0, 1, 1], [], []>} : vector<8x72xf32>, vector<72x128xf32>, vector<8x128xf32> -> vector<8x128xf32>
    %143 = arith.addf %140, %142 : vector<8x128xf32>
    %144 = math.tanh %143 : vector<8x128xf32>
    %cst_45 = arith.constant 1.000000e+00 : f32
    %145 = vector.broadcast %cst_45 : f32 to vector<8x128xf32>
    %146 = arith.subf %145, %111 : vector<8x128xf32>
    %147 = arith.mulf %65, %146 : vector<8x128xf32>
    %148 = arith.mulf %144, %111 : vector<8x128xf32>
    %149 = arith.addf %147, %148 : vector<8x128xf32>
    %150 = vector.broadcast %1 : vector<1x128xf32> to vector<8x128xf32>
    %151 = arith.mulf %149, %150 : vector<8x128xf32>
    %152 = vector.extract_strided_slice %64 {offsets = [0, 128], sizes = [24, 128], strides = [1, 1]} : vector<48x256xf32> to vector<24x128xf32>
    %c9_i32_46 = arith.constant 9 : i32
    %153 = tpu.dynamic_rotate %151 by %c9_i32_46 dim 1 : vector<8x128xf32>, i32 -> vector<8x128xf32>
    %154 = vector.extract_strided_slice %0 {offsets = [0, 0], sizes = [1, 128], strides = [1, 1]} : vector<10x128xf32> to vector<1x128xf32>
    %155 = vector.broadcast %154 : vector<1x128xf32> to vector<8x128xf32>
    %156 = arith.mulf %153, %155 : vector<8x128xf32>
    %c8_i32_47 = arith.constant 8 : i32
    %157 = tpu.dynamic_rotate %151 by %c8_i32_47 dim 1 : vector<8x128xf32>, i32 -> vector<8x128xf32>
    %c7_i32_48 = arith.constant 7 : i32
    %158 = tpu.dynamic_rotate %151 by %c7_i32_48 dim 1 : vector<8x128xf32>, i32 -> vector<8x128xf32>
    %159 = vector.extract_strided_slice %0 {offsets = [2, 0], sizes = [1, 128], strides = [1, 1]} : vector<10x128xf32> to vector<1x128xf32>
    %160 = vector.broadcast %159 : vector<1x128xf32> to vector<8x128xf32>
    %161 = arith.mulf %158, %160 : vector<8x128xf32>
    %c1_i32_49 = arith.constant 1 : i32
    %162 = tpu.dynamic_rotate %151 by %c1_i32_49 dim 1 : vector<8x128xf32>, i32 -> vector<8x128xf32>
    %163 = vector.extract_strided_slice %0 {offsets = [3, 0], sizes = [1, 128], strides = [1, 1]} : vector<10x128xf32> to vector<1x128xf32>
    %164 = vector.broadcast %163 : vector<1x128xf32> to vector<8x128xf32>
    %165 = arith.mulf %162, %164 : vector<8x128xf32>
    %c127_i32_50 = arith.constant 127 : i32
    %166 = tpu.dynamic_rotate %151 by %c127_i32_50 dim 1 : vector<8x128xf32>, i32 -> vector<8x128xf32>
    %167 = vector.extract_strided_slice %0 {offsets = [5, 0], sizes = [1, 128], strides = [1, 1]} : vector<10x128xf32> to vector<1x128xf32>
    %168 = vector.broadcast %167 : vector<1x128xf32> to vector<8x128xf32>
    %169 = arith.mulf %166, %168 : vector<8x128xf32>
    %c121_i32_51 = arith.constant 121 : i32
    %170 = tpu.dynamic_rotate %151 by %c121_i32_51 dim 1 : vector<8x128xf32>, i32 -> vector<8x128xf32>
    %171 = vector.extract_strided_slice %0 {offsets = [6, 0], sizes = [1, 128], strides = [1, 1]} : vector<10x128xf32> to vector<1x128xf32>
    %172 = vector.broadcast %171 : vector<1x128xf32> to vector<8x128xf32>
    %173 = arith.mulf %170, %172 : vector<8x128xf32>
    %c120_i32_52 = arith.constant 120 : i32
    %174 = tpu.dynamic_rotate %151 by %c120_i32_52 dim 1 : vector<8x128xf32>, i32 -> vector<8x128xf32>
    %c119_i32_53 = arith.constant 119 : i32
    %175 = tpu.dynamic_rotate %151 by %c119_i32_53 dim 1 : vector<8x128xf32>, i32 -> vector<8x128xf32>
    %176 = vector.extract_strided_slice %0 {offsets = [8, 0], sizes = [1, 128], strides = [1, 1]} : vector<10x128xf32> to vector<1x128xf32>
    %177 = vector.broadcast %176 : vector<1x128xf32> to vector<8x128xf32>
    %178 = arith.mulf %175, %177 : vector<8x128xf32>
    %179 = tpu.concatenate %156, %157, %161, %165, %151, %169, %173, %174, %178 in 0 : vector<8x128xf32>, vector<8x128xf32>, vector<8x128xf32>, vector<8x128xf32>, vector<8x128xf32>, vector<8x128xf32>, vector<8x128xf32>, vector<8x128xf32>, vector<8x128xf32> -> vector<72x128xf32>
    %c0_54 = arith.constant 0 : index
    %c0_55 = arith.constant 0 : index
    %180 = vector.load %arg5[%c0_54, %c0_55] : memref<16x72xf32, #tpu.memory_space<vmem>>, vector<16x72xf32>
    %cst_56 = arith.constant dense<0.000000e+00> : vector<16x128xf32>
    %181 = tpu.matmul %180, %179, %cst_56 {dimension_numbers = #tpu.dot_dimension_numbers<[1], [0], [0], [1], [0, 0, 1, 1], [], []>} : vector<16x72xf32>, vector<72x128xf32>, vector<16x128xf32> -> vector<16x128xf32>
    %182 = vector.extract_strided_slice %152 {offsets = [0, 0], sizes = [8, 128], strides = [1, 1]} : vector<24x128xf32> to vector<8x128xf32>
    %183 = vector.extract_strided_slice %181 {offsets = [0, 0], sizes = [8, 128], strides = [1, 1]} : vector<16x128xf32> to vector<8x128xf32>
    %184 = arith.addf %182, %183 : vector<8x128xf32>
    %185 = arith.negf %184 : vector<8x128xf32>
    %186 = math.exp %185 : vector<8x128xf32>
    %cst_57 = arith.constant 1.000000e+00 : f32
    %187 = vector.broadcast %cst_57 : f32 to vector<8x128xf32>
    %188 = arith.addf %187, %186 : vector<8x128xf32>
    %189 = arith.divf %187, %188 : vector<8x128xf32>
    %190 = vector.extract_strided_slice %152 {offsets = [8, 0], sizes = [8, 128], strides = [1, 1]} : vector<24x128xf32> to vector<8x128xf32>
    %191 = vector.extract_strided_slice %181 {offsets = [8, 0], sizes = [8, 128], strides = [1, 1]} : vector<16x128xf32> to vector<8x128xf32>
    %192 = arith.addf %190, %191 : vector<8x128xf32>
    %193 = arith.negf %192 : vector<8x128xf32>
    %194 = math.exp %193 : vector<8x128xf32>
    %cst_58 = arith.constant 1.000000e+00 : f32
    %195 = vector.broadcast %cst_58 : f32 to vector<8x128xf32>
    %196 = arith.addf %195, %194 : vector<8x128xf32>
    %197 = arith.divf %195, %196 : vector<8x128xf32>
    %198 = arith.mulf %151, %189 : vector<8x128xf32>
    %c9_i32_59 = arith.constant 9 : i32
    %199 = tpu.dynamic_rotate %198 by %c9_i32_59 dim 1 : vector<8x128xf32>, i32 -> vector<8x128xf32>
    %200 = vector.extract_strided_slice %0 {offsets = [0, 0], sizes = [1, 128], strides = [1, 1]} : vector<10x128xf32> to vector<1x128xf32>
    %201 = vector.broadcast %200 : vector<1x128xf32> to vector<8x128xf32>
    %202 = arith.mulf %199, %201 : vector<8x128xf32>
    %c8_i32_60 = arith.constant 8 : i32
    %203 = tpu.dynamic_rotate %198 by %c8_i32_60 dim 1 : vector<8x128xf32>, i32 -> vector<8x128xf32>
    %c7_i32_61 = arith.constant 7 : i32
    %204 = tpu.dynamic_rotate %198 by %c7_i32_61 dim 1 : vector<8x128xf32>, i32 -> vector<8x128xf32>
    %205 = vector.extract_strided_slice %0 {offsets = [2, 0], sizes = [1, 128], strides = [1, 1]} : vector<10x128xf32> to vector<1x128xf32>
    %206 = vector.broadcast %205 : vector<1x128xf32> to vector<8x128xf32>
    %207 = arith.mulf %204, %206 : vector<8x128xf32>
    %c1_i32_62 = arith.constant 1 : i32
    %208 = tpu.dynamic_rotate %198 by %c1_i32_62 dim 1 : vector<8x128xf32>, i32 -> vector<8x128xf32>
    %209 = vector.extract_strided_slice %0 {offsets = [3, 0], sizes = [1, 128], strides = [1, 1]} : vector<10x128xf32> to vector<1x128xf32>
    %210 = vector.broadcast %209 : vector<1x128xf32> to vector<8x128xf32>
    %211 = arith.mulf %208, %210 : vector<8x128xf32>
    %c127_i32_63 = arith.constant 127 : i32
    %212 = tpu.dynamic_rotate %198 by %c127_i32_63 dim 1 : vector<8x128xf32>, i32 -> vector<8x128xf32>
    %213 = vector.extract_strided_slice %0 {offsets = [5, 0], sizes = [1, 128], strides = [1, 1]} : vector<10x128xf32> to vector<1x128xf32>
    %214 = vector.broadcast %213 : vector<1x128xf32> to vector<8x128xf32>
    %215 = arith.mulf %212, %214 : vector<8x128xf32>
    %c121_i32_64 = arith.constant 121 : i32
    %216 = tpu.dynamic_rotate %198 by %c121_i32_64 dim 1 : vector<8x128xf32>, i32 -> vector<8x128xf32>
    %217 = vector.extract_strided_slice %0 {offsets = [6, 0], sizes = [1, 128], strides = [1, 1]} : vector<10x128xf32> to vector<1x128xf32>
    %218 = vector.broadcast %217 : vector<1x128xf32> to vector<8x128xf32>
    %219 = arith.mulf %216, %218 : vector<8x128xf32>
    %c120_i32_65 = arith.constant 120 : i32
    %220 = tpu.dynamic_rotate %198 by %c120_i32_65 dim 1 : vector<8x128xf32>, i32 -> vector<8x128xf32>
    %c119_i32_66 = arith.constant 119 : i32
    %221 = tpu.dynamic_rotate %198 by %c119_i32_66 dim 1 : vector<8x128xf32>, i32 -> vector<8x128xf32>
    %222 = vector.extract_strided_slice %0 {offsets = [8, 0], sizes = [1, 128], strides = [1, 1]} : vector<10x128xf32> to vector<1x128xf32>
    %223 = vector.broadcast %222 : vector<1x128xf32> to vector<8x128xf32>
    %224 = arith.mulf %221, %223 : vector<8x128xf32>
    %225 = tpu.concatenate %202, %203, %207, %211, %198, %215, %219, %220, %224 in 0 : vector<8x128xf32>, vector<8x128xf32>, vector<8x128xf32>, vector<8x128xf32>, vector<8x128xf32>, vector<8x128xf32>, vector<8x128xf32>, vector<8x128xf32>, vector<8x128xf32> -> vector<72x128xf32>
    %226 = vector.extract_strided_slice %152 {offsets = [16, 0], sizes = [8, 128], strides = [1, 1]} : vector<24x128xf32> to vector<8x128xf32>
    %c0_67 = arith.constant 0 : index
    %c0_68 = arith.constant 0 : index
    %227 = vector.load %arg6[%c0_67, %c0_68] : memref<8x72xf32, #tpu.memory_space<vmem>>, vector<8x72xf32>
    %cst_69 = arith.constant dense<0.000000e+00> : vector<8x128xf32>
    %228 = tpu.matmul %227, %225, %cst_69 {dimension_numbers = #tpu.dot_dimension_numbers<[1], [0], [0], [1], [0, 0, 1, 1], [], []>} : vector<8x72xf32>, vector<72x128xf32>, vector<8x128xf32> -> vector<8x128xf32>
    %229 = arith.addf %226, %228 : vector<8x128xf32>
    %230 = math.tanh %229 : vector<8x128xf32>
    %cst_70 = arith.constant 1.000000e+00 : f32
    %231 = vector.broadcast %cst_70 : f32 to vector<8x128xf32>
    %232 = arith.subf %231, %197 : vector<8x128xf32>
    %233 = arith.mulf %151, %232 : vector<8x128xf32>
    %234 = arith.mulf %230, %197 : vector<8x128xf32>
    %235 = arith.addf %233, %234 : vector<8x128xf32>
    %236 = vector.broadcast %1 : vector<1x128xf32> to vector<8x128xf32>
    %237 = arith.mulf %235, %236 : vector<8x128xf32>
    %238 = vector.extract_strided_slice %64 {offsets = [24, 128], sizes = [24, 128], strides = [1, 1]} : vector<48x256xf32> to vector<24x128xf32>
    %c9_i32_71 = arith.constant 9 : i32
    %239 = tpu.dynamic_rotate %237 by %c9_i32_71 dim 1 : vector<8x128xf32>, i32 -> vector<8x128xf32>
    %240 = vector.extract_strided_slice %0 {offsets = [0, 0], sizes = [1, 128], strides = [1, 1]} : vector<10x128xf32> to vector<1x128xf32>
    %241 = vector.broadcast %240 : vector<1x128xf32> to vector<8x128xf32>
    %242 = arith.mulf %239, %241 : vector<8x128xf32>
    %c8_i32_72 = arith.constant 8 : i32
    %243 = tpu.dynamic_rotate %237 by %c8_i32_72 dim 1 : vector<8x128xf32>, i32 -> vector<8x128xf32>
    %c7_i32_73 = arith.constant 7 : i32
    %244 = tpu.dynamic_rotate %237 by %c7_i32_73 dim 1 : vector<8x128xf32>, i32 -> vector<8x128xf32>
    %245 = vector.extract_strided_slice %0 {offsets = [2, 0], sizes = [1, 128], strides = [1, 1]} : vector<10x128xf32> to vector<1x128xf32>
    %246 = vector.broadcast %245 : vector<1x128xf32> to vector<8x128xf32>
    %247 = arith.mulf %244, %246 : vector<8x128xf32>
    %c1_i32_74 = arith.constant 1 : i32
    %248 = tpu.dynamic_rotate %237 by %c1_i32_74 dim 1 : vector<8x128xf32>, i32 -> vector<8x128xf32>
    %249 = vector.extract_strided_slice %0 {offsets = [3, 0], sizes = [1, 128], strides = [1, 1]} : vector<10x128xf32> to vector<1x128xf32>
    %250 = vector.broadcast %249 : vector<1x128xf32> to vector<8x128xf32>
    %251 = arith.mulf %248, %250 : vector<8x128xf32>
    %c127_i32_75 = arith.constant 127 : i32
    %252 = tpu.dynamic_rotate %237 by %c127_i32_75 dim 1 : vector<8x128xf32>, i32 -> vector<8x128xf32>
    %253 = vector.extract_strided_slice %0 {offsets = [5, 0], sizes = [1, 128], strides = [1, 1]} : vector<10x128xf32> to vector<1x128xf32>
    %254 = vector.broadcast %253 : vector<1x128xf32> to vector<8x128xf32>
    %255 = arith.mulf %252, %254 : vector<8x128xf32>
    %c121_i32_76 = arith.constant 121 : i32
    %256 = tpu.dynamic_rotate %237 by %c121_i32_76 dim 1 : vector<8x128xf32>, i32 -> vector<8x128xf32>
    %257 = vector.extract_strided_slice %0 {offsets = [6, 0], sizes = [1, 128], strides = [1, 1]} : vector<10x128xf32> to vector<1x128xf32>
    %258 = vector.broadcast %257 : vector<1x128xf32> to vector<8x128xf32>
    %259 = arith.mulf %256, %258 : vector<8x128xf32>
    %c120_i32_77 = arith.constant 120 : i32
    %260 = tpu.dynamic_rotate %237 by %c120_i32_77 dim 1 : vector<8x128xf32>, i32 -> vector<8x128xf32>
    %c119_i32_78 = arith.constant 119 : i32
    %261 = tpu.dynamic_rotate %237 by %c119_i32_78 dim 1 : vector<8x128xf32>, i32 -> vector<8x128xf32>
    %262 = vector.extract_strided_slice %0 {offsets = [8, 0], sizes = [1, 128], strides = [1, 1]} : vector<10x128xf32> to vector<1x128xf32>
    %263 = vector.broadcast %262 : vector<1x128xf32> to vector<8x128xf32>
    %264 = arith.mulf %261, %263 : vector<8x128xf32>
    %265 = tpu.concatenate %242, %243, %247, %251, %237, %255, %259, %260, %264 in 0 : vector<8x128xf32>, vector<8x128xf32>, vector<8x128xf32>, vector<8x128xf32>, vector<8x128xf32>, vector<8x128xf32>, vector<8x128xf32>, vector<8x128xf32>, vector<8x128xf32> -> vector<72x128xf32>
    %c0_79 = arith.constant 0 : index
    %c0_80 = arith.constant 0 : index
    %266 = vector.load %arg7[%c0_79, %c0_80] : memref<16x72xf32, #tpu.memory_space<vmem>>, vector<16x72xf32>
    %cst_81 = arith.constant dense<0.000000e+00> : vector<16x128xf32>
    %267 = tpu.matmul %266, %265, %cst_81 {dimension_numbers = #tpu.dot_dimension_numbers<[1], [0], [0], [1], [0, 0, 1, 1], [], []>} : vector<16x72xf32>, vector<72x128xf32>, vector<16x128xf32> -> vector<16x128xf32>
    %268 = vector.extract_strided_slice %238 {offsets = [0, 0], sizes = [8, 128], strides = [1, 1]} : vector<24x128xf32> to vector<8x128xf32>
    %269 = vector.extract_strided_slice %267 {offsets = [0, 0], sizes = [8, 128], strides = [1, 1]} : vector<16x128xf32> to vector<8x128xf32>
    %270 = arith.addf %268, %269 : vector<8x128xf32>
    %271 = arith.negf %270 : vector<8x128xf32>
    %272 = math.exp %271 : vector<8x128xf32>
    %cst_82 = arith.constant 1.000000e+00 : f32
    %273 = vector.broadcast %cst_82 : f32 to vector<8x128xf32>
    %274 = arith.addf %273, %272 : vector<8x128xf32>
    %275 = arith.divf %273, %274 : vector<8x128xf32>
    %276 = vector.extract_strided_slice %238 {offsets = [8, 0], sizes = [8, 128], strides = [1, 1]} : vector<24x128xf32> to vector<8x128xf32>
    %277 = vector.extract_strided_slice %267 {offsets = [8, 0], sizes = [8, 128], strides = [1, 1]} : vector<16x128xf32> to vector<8x128xf32>
    %278 = arith.addf %276, %277 : vector<8x128xf32>
    %279 = arith.negf %278 : vector<8x128xf32>
    %280 = math.exp %279 : vector<8x128xf32>
    %cst_83 = arith.constant 1.000000e+00 : f32
    %281 = vector.broadcast %cst_83 : f32 to vector<8x128xf32>
    %282 = arith.addf %281, %280 : vector<8x128xf32>
    %283 = arith.divf %281, %282 : vector<8x128xf32>
    %284 = arith.mulf %237, %275 : vector<8x128xf32>
    %c9_i32_84 = arith.constant 9 : i32
    %285 = tpu.dynamic_rotate %284 by %c9_i32_84 dim 1 : vector<8x128xf32>, i32 -> vector<8x128xf32>
    %286 = vector.extract_strided_slice %0 {offsets = [0, 0], sizes = [1, 128], strides = [1, 1]} : vector<10x128xf32> to vector<1x128xf32>
    %287 = vector.broadcast %286 : vector<1x128xf32> to vector<8x128xf32>
    %288 = arith.mulf %285, %287 : vector<8x128xf32>
    %c8_i32_85 = arith.constant 8 : i32
    %289 = tpu.dynamic_rotate %284 by %c8_i32_85 dim 1 : vector<8x128xf32>, i32 -> vector<8x128xf32>
    %c7_i32_86 = arith.constant 7 : i32
    %290 = tpu.dynamic_rotate %284 by %c7_i32_86 dim 1 : vector<8x128xf32>, i32 -> vector<8x128xf32>
    %291 = vector.extract_strided_slice %0 {offsets = [2, 0], sizes = [1, 128], strides = [1, 1]} : vector<10x128xf32> to vector<1x128xf32>
    %292 = vector.broadcast %291 : vector<1x128xf32> to vector<8x128xf32>
    %293 = arith.mulf %290, %292 : vector<8x128xf32>
    %c1_i32_87 = arith.constant 1 : i32
    %294 = tpu.dynamic_rotate %284 by %c1_i32_87 dim 1 : vector<8x128xf32>, i32 -> vector<8x128xf32>
    %295 = vector.extract_strided_slice %0 {offsets = [3, 0], sizes = [1, 128], strides = [1, 1]} : vector<10x128xf32> to vector<1x128xf32>
    %296 = vector.broadcast %295 : vector<1x128xf32> to vector<8x128xf32>
    %297 = arith.mulf %294, %296 : vector<8x128xf32>
    %c127_i32_88 = arith.constant 127 : i32
    %298 = tpu.dynamic_rotate %284 by %c127_i32_88 dim 1 : vector<8x128xf32>, i32 -> vector<8x128xf32>
    %299 = vector.extract_strided_slice %0 {offsets = [5, 0], sizes = [1, 128], strides = [1, 1]} : vector<10x128xf32> to vector<1x128xf32>
    %300 = vector.broadcast %299 : vector<1x128xf32> to vector<8x128xf32>
    %301 = arith.mulf %298, %300 : vector<8x128xf32>
    %c121_i32_89 = arith.constant 121 : i32
    %302 = tpu.dynamic_rotate %284 by %c121_i32_89 dim 1 : vector<8x128xf32>, i32 -> vector<8x128xf32>
    %303 = vector.extract_strided_slice %0 {offsets = [6, 0], sizes = [1, 128], strides = [1, 1]} : vector<10x128xf32> to vector<1x128xf32>
    %304 = vector.broadcast %303 : vector<1x128xf32> to vector<8x128xf32>
    %305 = arith.mulf %302, %304 : vector<8x128xf32>
    %c120_i32_90 = arith.constant 120 : i32
    %306 = tpu.dynamic_rotate %284 by %c120_i32_90 dim 1 : vector<8x128xf32>, i32 -> vector<8x128xf32>
    %c119_i32_91 = arith.constant 119 : i32
    %307 = tpu.dynamic_rotate %284 by %c119_i32_91 dim 1 : vector<8x128xf32>, i32 -> vector<8x128xf32>
    %308 = vector.extract_strided_slice %0 {offsets = [8, 0], sizes = [1, 128], strides = [1, 1]} : vector<10x128xf32> to vector<1x128xf32>
    %309 = vector.broadcast %308 : vector<1x128xf32> to vector<8x128xf32>
    %310 = arith.mulf %307, %309 : vector<8x128xf32>
    %311 = tpu.concatenate %288, %289, %293, %297, %284, %301, %305, %306, %310 in 0 : vector<8x128xf32>, vector<8x128xf32>, vector<8x128xf32>, vector<8x128xf32>, vector<8x128xf32>, vector<8x128xf32>, vector<8x128xf32>, vector<8x128xf32>, vector<8x128xf32> -> vector<72x128xf32>
    %312 = vector.extract_strided_slice %238 {offsets = [16, 0], sizes = [8, 128], strides = [1, 1]} : vector<24x128xf32> to vector<8x128xf32>
    %c0_92 = arith.constant 0 : index
    %c0_93 = arith.constant 0 : index
    %313 = vector.load %arg8[%c0_92, %c0_93] : memref<8x72xf32, #tpu.memory_space<vmem>>, vector<8x72xf32>
    %cst_94 = arith.constant dense<0.000000e+00> : vector<8x128xf32>
    %314 = tpu.matmul %313, %311, %cst_94 {dimension_numbers = #tpu.dot_dimension_numbers<[1], [0], [0], [1], [0, 0, 1, 1], [], []>} : vector<8x72xf32>, vector<72x128xf32>, vector<8x128xf32> -> vector<8x128xf32>
    %315 = arith.addf %312, %314 : vector<8x128xf32>
    %316 = math.tanh %315 : vector<8x128xf32>
    %cst_95 = arith.constant 1.000000e+00 : f32
    %317 = vector.broadcast %cst_95 : f32 to vector<8x128xf32>
    %318 = arith.subf %317, %283 : vector<8x128xf32>
    %319 = arith.mulf %237, %318 : vector<8x128xf32>
    %320 = arith.mulf %316, %283 : vector<8x128xf32>
    %321 = arith.addf %319, %320 : vector<8x128xf32>
    %322 = vector.broadcast %1 : vector<1x128xf32> to vector<8x128xf32>
    %323 = arith.mulf %321, %322 : vector<8x128xf32>
    %324 = vector.extract_strided_slice %64 {offsets = [24, 0], sizes = [24, 128], strides = [1, 1]} : vector<48x256xf32> to vector<24x128xf32>
    %c9_i32_96 = arith.constant 9 : i32
    %325 = tpu.dynamic_rotate %323 by %c9_i32_96 dim 1 : vector<8x128xf32>, i32 -> vector<8x128xf32>
    %326 = vector.extract_strided_slice %0 {offsets = [0, 0], sizes = [1, 128], strides = [1, 1]} : vector<10x128xf32> to vector<1x128xf32>
    %327 = vector.broadcast %326 : vector<1x128xf32> to vector<8x128xf32>
    %328 = arith.mulf %325, %327 : vector<8x128xf32>
    %c8_i32_97 = arith.constant 8 : i32
    %329 = tpu.dynamic_rotate %323 by %c8_i32_97 dim 1 : vector<8x128xf32>, i32 -> vector<8x128xf32>
    %c7_i32_98 = arith.constant 7 : i32
    %330 = tpu.dynamic_rotate %323 by %c7_i32_98 dim 1 : vector<8x128xf32>, i32 -> vector<8x128xf32>
    %331 = vector.extract_strided_slice %0 {offsets = [2, 0], sizes = [1, 128], strides = [1, 1]} : vector<10x128xf32> to vector<1x128xf32>
    %332 = vector.broadcast %331 : vector<1x128xf32> to vector<8x128xf32>
    %333 = arith.mulf %330, %332 : vector<8x128xf32>
    %c1_i32_99 = arith.constant 1 : i32
    %334 = tpu.dynamic_rotate %323 by %c1_i32_99 dim 1 : vector<8x128xf32>, i32 -> vector<8x128xf32>
    %335 = vector.extract_strided_slice %0 {offsets = [3, 0], sizes = [1, 128], strides = [1, 1]} : vector<10x128xf32> to vector<1x128xf32>
    %336 = vector.broadcast %335 : vector<1x128xf32> to vector<8x128xf32>
    %337 = arith.mulf %334, %336 : vector<8x128xf32>
    %c127_i32_100 = arith.constant 127 : i32
    %338 = tpu.dynamic_rotate %323 by %c127_i32_100 dim 1 : vector<8x128xf32>, i32 -> vector<8x128xf32>
    %339 = vector.extract_strided_slice %0 {offsets = [5, 0], sizes = [1, 128], strides = [1, 1]} : vector<10x128xf32> to vector<1x128xf32>
    %340 = vector.broadcast %339 : vector<1x128xf32> to vector<8x128xf32>
    %341 = arith.mulf %338, %340 : vector<8x128xf32>
    %c121_i32_101 = arith.constant 121 : i32
    %342 = tpu.dynamic_rotate %323 by %c121_i32_101 dim 1 : vector<8x128xf32>, i32 -> vector<8x128xf32>
    %343 = vector.extract_strided_slice %0 {offsets = [6, 0], sizes = [1, 128], strides = [1, 1]} : vector<10x128xf32> to vector<1x128xf32>
    %344 = vector.broadcast %343 : vector<1x128xf32> to vector<8x128xf32>
    %345 = arith.mulf %342, %344 : vector<8x128xf32>
    %c120_i32_102 = arith.constant 120 : i32
    %346 = tpu.dynamic_rotate %323 by %c120_i32_102 dim 1 : vector<8x128xf32>, i32 -> vector<8x128xf32>
    %c119_i32_103 = arith.constant 119 : i32
    %347 = tpu.dynamic_rotate %323 by %c119_i32_103 dim 1 : vector<8x128xf32>, i32 -> vector<8x128xf32>
    %348 = vector.extract_strided_slice %0 {offsets = [8, 0], sizes = [1, 128], strides = [1, 1]} : vector<10x128xf32> to vector<1x128xf32>
    %349 = vector.broadcast %348 : vector<1x128xf32> to vector<8x128xf32>
    %350 = arith.mulf %347, %349 : vector<8x128xf32>
    %351 = tpu.concatenate %328, %329, %333, %337, %323, %341, %345, %346, %350 in 0 : vector<8x128xf32>, vector<8x128xf32>, vector<8x128xf32>, vector<8x128xf32>, vector<8x128xf32>, vector<8x128xf32>, vector<8x128xf32>, vector<8x128xf32>, vector<8x128xf32> -> vector<72x128xf32>
    %c0_104 = arith.constant 0 : index
    %c0_105 = arith.constant 0 : index
    %352 = vector.load %arg7[%c0_104, %c0_105] : memref<16x72xf32, #tpu.memory_space<vmem>>, vector<16x72xf32>
    %cst_106 = arith.constant dense<0.000000e+00> : vector<16x128xf32>
    %353 = tpu.matmul %352, %351, %cst_106 {dimension_numbers = #tpu.dot_dimension_numbers<[1], [0], [0], [1], [0, 0, 1, 1], [], []>} : vector<16x72xf32>, vector<72x128xf32>, vector<16x128xf32> -> vector<16x128xf32>
    %354 = vector.extract_strided_slice %324 {offsets = [0, 0], sizes = [8, 128], strides = [1, 1]} : vector<24x128xf32> to vector<8x128xf32>
    %355 = vector.extract_strided_slice %353 {offsets = [0, 0], sizes = [8, 128], strides = [1, 1]} : vector<16x128xf32> to vector<8x128xf32>
    %356 = arith.addf %354, %355 : vector<8x128xf32>
    %357 = arith.negf %356 : vector<8x128xf32>
    %358 = math.exp %357 : vector<8x128xf32>
    %cst_107 = arith.constant 1.000000e+00 : f32
    %359 = vector.broadcast %cst_107 : f32 to vector<8x128xf32>
    %360 = arith.addf %359, %358 : vector<8x128xf32>
    %361 = arith.divf %359, %360 : vector<8x128xf32>
    %362 = vector.extract_strided_slice %324 {offsets = [8, 0], sizes = [8, 128], strides = [1, 1]} : vector<24x128xf32> to vector<8x128xf32>
    %363 = vector.extract_strided_slice %353 {offsets = [8, 0], sizes = [8, 128], strides = [1, 1]} : vector<16x128xf32> to vector<8x128xf32>
    %364 = arith.addf %362, %363 : vector<8x128xf32>
    %365 = arith.negf %364 : vector<8x128xf32>
    %366 = math.exp %365 : vector<8x128xf32>
    %cst_108 = arith.constant 1.000000e+00 : f32
    %367 = vector.broadcast %cst_108 : f32 to vector<8x128xf32>
    %368 = arith.addf %367, %366 : vector<8x128xf32>
    %369 = arith.divf %367, %368 : vector<8x128xf32>
    %370 = arith.mulf %323, %361 : vector<8x128xf32>
    %c9_i32_109 = arith.constant 9 : i32
    %371 = tpu.dynamic_rotate %370 by %c9_i32_109 dim 1 : vector<8x128xf32>, i32 -> vector<8x128xf32>
    %372 = vector.extract_strided_slice %0 {offsets = [0, 0], sizes = [1, 128], strides = [1, 1]} : vector<10x128xf32> to vector<1x128xf32>
    %373 = vector.broadcast %372 : vector<1x128xf32> to vector<8x128xf32>
    %374 = arith.mulf %371, %373 : vector<8x128xf32>
    %c8_i32_110 = arith.constant 8 : i32
    %375 = tpu.dynamic_rotate %370 by %c8_i32_110 dim 1 : vector<8x128xf32>, i32 -> vector<8x128xf32>
    %c7_i32_111 = arith.constant 7 : i32
    %376 = tpu.dynamic_rotate %370 by %c7_i32_111 dim 1 : vector<8x128xf32>, i32 -> vector<8x128xf32>
    %377 = vector.extract_strided_slice %0 {offsets = [2, 0], sizes = [1, 128], strides = [1, 1]} : vector<10x128xf32> to vector<1x128xf32>
    %378 = vector.broadcast %377 : vector<1x128xf32> to vector<8x128xf32>
    %379 = arith.mulf %376, %378 : vector<8x128xf32>
    %c1_i32_112 = arith.constant 1 : i32
    %380 = tpu.dynamic_rotate %370 by %c1_i32_112 dim 1 : vector<8x128xf32>, i32 -> vector<8x128xf32>
    %381 = vector.extract_strided_slice %0 {offsets = [3, 0], sizes = [1, 128], strides = [1, 1]} : vector<10x128xf32> to vector<1x128xf32>
    %382 = vector.broadcast %381 : vector<1x128xf32> to vector<8x128xf32>
    %383 = arith.mulf %380, %382 : vector<8x128xf32>
    %c127_i32_113 = arith.constant 127 : i32
    %384 = tpu.dynamic_rotate %370 by %c127_i32_113 dim 1 : vector<8x128xf32>, i32 -> vector<8x128xf32>
    %385 = vector.extract_strided_slice %0 {offsets = [5, 0], sizes = [1, 128], strides = [1, 1]} : vector<10x128xf32> to vector<1x128xf32>
    %386 = vector.broadcast %385 : vector<1x128xf32> to vector<8x128xf32>
    %387 = arith.mulf %384, %386 : vector<8x128xf32>
    %c121_i32_114 = arith.constant 121 : i32
    %388 = tpu.dynamic_rotate %370 by %c121_i32_114 dim 1 : vector<8x128xf32>, i32 -> vector<8x128xf32>
    %389 = vector.extract_strided_slice %0 {offsets = [6, 0], sizes = [1, 128], strides = [1, 1]} : vector<10x128xf32> to vector<1x128xf32>
    %390 = vector.broadcast %389 : vector<1x128xf32> to vector<8x128xf32>
    %391 = arith.mulf %388, %390 : vector<8x128xf32>
    %c120_i32_115 = arith.constant 120 : i32
    %392 = tpu.dynamic_rotate %370 by %c120_i32_115 dim 1 : vector<8x128xf32>, i32 -> vector<8x128xf32>
    %c119_i32_116 = arith.constant 119 : i32
    %393 = tpu.dynamic_rotate %370 by %c119_i32_116 dim 1 : vector<8x128xf32>, i32 -> vector<8x128xf32>
    %394 = vector.extract_strided_slice %0 {offsets = [8, 0], sizes = [1, 128], strides = [1, 1]} : vector<10x128xf32> to vector<1x128xf32>
    %395 = vector.broadcast %394 : vector<1x128xf32> to vector<8x128xf32>
    %396 = arith.mulf %393, %395 : vector<8x128xf32>
    %397 = tpu.concatenate %374, %375, %379, %383, %370, %387, %391, %392, %396 in 0 : vector<8x128xf32>, vector<8x128xf32>, vector<8x128xf32>, vector<8x128xf32>, vector<8x128xf32>, vector<8x128xf32>, vector<8x128xf32>, vector<8x128xf32>, vector<8x128xf32> -> vector<72x128xf32>
    %398 = vector.extract_strided_slice %324 {offsets = [16, 0], sizes = [8, 128], strides = [1, 1]} : vector<24x128xf32> to vector<8x128xf32>
    %c0_117 = arith.constant 0 : index
    %c0_118 = arith.constant 0 : index
    %399 = vector.load %arg8[%c0_117, %c0_118] : memref<8x72xf32, #tpu.memory_space<vmem>>, vector<8x72xf32>
    %cst_119 = arith.constant dense<0.000000e+00> : vector<8x128xf32>
    %400 = tpu.matmul %399, %397, %cst_119 {dimension_numbers = #tpu.dot_dimension_numbers<[1], [0], [0], [1], [0, 0, 1, 1], [], []>} : vector<8x72xf32>, vector<72x128xf32>, vector<8x128xf32> -> vector<8x128xf32>
    %401 = arith.addf %398, %400 : vector<8x128xf32>
    %402 = math.tanh %401 : vector<8x128xf32>
    %cst_120 = arith.constant 1.000000e+00 : f32
    %403 = vector.broadcast %cst_120 : f32 to vector<8x128xf32>
    %404 = arith.subf %403, %369 : vector<8x128xf32>
    %405 = arith.mulf %323, %404 : vector<8x128xf32>
    %406 = arith.mulf %402, %369 : vector<8x128xf32>
    %407 = arith.addf %405, %406 : vector<8x128xf32>
    %408 = vector.broadcast %1 : vector<1x128xf32> to vector<8x128xf32>
    %409 = arith.mulf %407, %408 : vector<8x128xf32>
    %410 = vector.extract_strided_slice %151 {offsets = [0, 0], sizes = [1, 64], strides = [1, 1]} : vector<8x128xf32> to vector<1x64xf32>
    %411 = vector.extract_strided_slice %151 {offsets = [1, 0], sizes = [1, 64], strides = [1, 1]} : vector<8x128xf32> to vector<1x64xf32>
    %412 = vector.extract_strided_slice %151 {offsets = [2, 0], sizes = [1, 64], strides = [1, 1]} : vector<8x128xf32> to vector<1x64xf32>
    %413 = vector.extract_strided_slice %151 {offsets = [3, 0], sizes = [1, 64], strides = [1, 1]} : vector<8x128xf32> to vector<1x64xf32>
    %414 = vector.extract_strided_slice %323 {offsets = [0, 0], sizes = [1, 64], strides = [1, 1]} : vector<8x128xf32> to vector<1x64xf32>
    %415 = vector.extract_strided_slice %323 {offsets = [1, 0], sizes = [1, 64], strides = [1, 1]} : vector<8x128xf32> to vector<1x64xf32>
    %416 = vector.extract_strided_slice %323 {offsets = [2, 0], sizes = [1, 64], strides = [1, 1]} : vector<8x128xf32> to vector<1x64xf32>
    %417 = vector.extract_strided_slice %323 {offsets = [3, 0], sizes = [1, 64], strides = [1, 1]} : vector<8x128xf32> to vector<1x64xf32>
    %418 = tpu.concatenate %410, %411, %412, %413, %414, %415, %416, %417 in 1 : vector<1x64xf32>, vector<1x64xf32>, vector<1x64xf32>, vector<1x64xf32>, vector<1x64xf32>, vector<1x64xf32>, vector<1x64xf32>, vector<1x64xf32> -> vector<1x512xf32>
    %419 = vector.extract_strided_slice %237 {offsets = [0, 0], sizes = [1, 64], strides = [1, 1]} : vector<8x128xf32> to vector<1x64xf32>
    %420 = vector.extract_strided_slice %237 {offsets = [1, 0], sizes = [1, 64], strides = [1, 1]} : vector<8x128xf32> to vector<1x64xf32>
    %421 = vector.extract_strided_slice %237 {offsets = [2, 0], sizes = [1, 64], strides = [1, 1]} : vector<8x128xf32> to vector<1x64xf32>
    %422 = vector.extract_strided_slice %237 {offsets = [3, 0], sizes = [1, 64], strides = [1, 1]} : vector<8x128xf32> to vector<1x64xf32>
    %423 = vector.extract_strided_slice %409 {offsets = [0, 0], sizes = [1, 64], strides = [1, 1]} : vector<8x128xf32> to vector<1x64xf32>
    %424 = vector.extract_strided_slice %409 {offsets = [1, 0], sizes = [1, 64], strides = [1, 1]} : vector<8x128xf32> to vector<1x64xf32>
    %425 = vector.extract_strided_slice %409 {offsets = [2, 0], sizes = [1, 64], strides = [1, 1]} : vector<8x128xf32> to vector<1x64xf32>
    %426 = vector.extract_strided_slice %409 {offsets = [3, 0], sizes = [1, 64], strides = [1, 1]} : vector<8x128xf32> to vector<1x64xf32>
    %427 = tpu.concatenate %419, %420, %421, %422, %423, %424, %425, %426 in 1 : vector<1x64xf32>, vector<1x64xf32>, vector<1x64xf32>, vector<1x64xf32>, vector<1x64xf32>, vector<1x64xf32>, vector<1x64xf32>, vector<1x64xf32> -> vector<1x512xf32>
    %428 = tpu.concatenate %418, %427 in 0 : vector<1x512xf32>, vector<1x512xf32> -> vector<2x512xf32>
    %c0_121 = arith.constant 0 : index
    %c0_122 = arith.constant 0 : index
    %429 = vector.load %arg9[%c0_121, %c0_122] : memref<512x128xf32, #tpu.memory_space<vmem>>, vector<512x128xf32>
    %cst_123 = arith.constant dense<0.000000e+00> : vector<2x128xf32>
    %430 = tpu.matmul %428, %429, %cst_123 {dimension_numbers = #tpu.dot_dimension_numbers<[1], [0], [0], [1], [0, 0, 1, 1], [], []>} : vector<2x512xf32>, vector<512x128xf32>, vector<2x128xf32> -> vector<2x128xf32>
    %c0_124 = arith.constant 0 : index
    %c0_125 = arith.constant 0 : index
    %431 = vector.load %arg10[%c0_124, %c0_125] : memref<1x128xf32, #tpu.memory_space<vmem>>, vector<1x128xf32>
    %432 = vector.broadcast %431 : vector<1x128xf32> to vector<2x128xf32>
    %433 = arith.addf %430, %432 : vector<2x128xf32>
    %cst_126 = arith.constant 0.000000e+00 : f32
    %434 = vector.broadcast %cst_126 : f32 to vector<2x128xf32>
    %435 = arith.maximumf %433, %434 : vector<2x128xf32>
    %c0_127 = arith.constant 0 : index
    %c0_128 = arith.constant 0 : index
    %436 = vector.load %arg11[%c0_127, %c0_128] : memref<128x128xf32, #tpu.memory_space<vmem>>, vector<128x128xf32>
    %cst_129 = arith.constant dense<0.000000e+00> : vector<2x128xf32>
    %437 = tpu.matmul %435, %436, %cst_129 {dimension_numbers = #tpu.dot_dimension_numbers<[1], [0], [0], [1], [0, 0, 1, 1], [], []>} : vector<2x128xf32>, vector<128x128xf32>, vector<2x128xf32> -> vector<2x128xf32>
    %c0_130 = arith.constant 0 : index
    %c0_131 = arith.constant 0 : index
    %438 = vector.load %arg12[%c0_130, %c0_131] : memref<1x128xf32, #tpu.memory_space<vmem>>, vector<1x128xf32>
    %439 = vector.broadcast %438 : vector<1x128xf32> to vector<2x128xf32>
    %440 = arith.addf %437, %439 : vector<2x128xf32>
    %cst_132 = arith.constant 0.000000e+00 : f32
    %441 = vector.broadcast %cst_132 : f32 to vector<2x128xf32>
    %442 = arith.maximumf %440, %441 : vector<2x128xf32>
    %c0_133 = arith.constant 0 : index
    %c0_134 = arith.constant 0 : index
    %443 = vector.load %arg13[%c0_133, %c0_134] : memref<1x128xf32, #tpu.memory_space<vmem>>, vector<1x128xf32>
    %444 = vector.broadcast %443 : vector<1x128xf32> to vector<2x128xf32>
    %445 = arith.mulf %442, %444 : vector<2x128xf32>
    %cst_135 = arith.constant dense<0.000000e+00> : vector<2xf32>
    %446 = vector.multi_reduction <add>, %445, %cst_135 [1] : vector<2x128xf32> to vector<2xf32>
    %447 = vector.shape_cast %446 : vector<2xf32> to vector<2x1xf32>
    %c0_136 = arith.constant 0 : index
    %c0_137 = arith.constant 0 : index
    %448 = vector.load %arg14[%c0_136, %c0_137] : memref<1x1xf32, #tpu.memory_space<vmem>>, vector<1x1xf32>
    %449 = vector.broadcast %448 : vector<1x1xf32> to vector<2x1xf32>
    %450 = arith.addf %447, %449 : vector<2x1xf32>
    %c0_138 = arith.constant 0 : index
    %c0_139 = arith.constant 0 : index
    %c0_140 = arith.constant 0 : index
    %451 = vector.load %arg15[%c0_138, %c0_139, %c0_140] : memref<1x2x1xf32, #tpu.memory_space<vmem>>, vector<1x2x1xf32>
    %452 = vector.shape_cast %451 : vector<1x2x1xf32> to vector<2x1xf32>
    %453 = vector.shape_cast %450 : vector<2x1xf32> to vector<1x2x1xf32>
    tpu.vector_store %arg15[%c0_138, %c0_139, %c0_140], %453 {strides = array<i32>} : memref<1x2x1xf32, #tpu.memory_space<vmem>>, vector<1x2x1xf32>,
    return
  }
  func.func @transform_0(%arg0: i32) -> (i32, i32, i32, i32) {
    %c0_i32 = arith.constant 0 : i32
    %c0_i32_0 = arith.constant 0 : i32
    %c0_i32_1 = arith.constant 0 : i32
    %c0_i32_2 = arith.constant 0 : i32
    return %arg0, %c0_i32, %c0_i32_0, %c0_i32_1 : i32, i32, i32, i32
  }
  func.func @transform_1(%arg0: i32) -> (i32, i32) {
    %c0_i32 = arith.constant 0 : i32
    %c0_i32_0 = arith.constant 0 : i32
    %c0_i32_1 = arith.constant 0 : i32
    return %c0_i32, %c0_i32_0 : i32, i32
  }
  func.func @transform_2(%arg0: i32) -> (i32, i32) {
    %c0_i32 = arith.constant 0 : i32
    %c0_i32_0 = arith.constant 0 : i32
    %c0_i32_1 = arith.constant 0 : i32
    return %c0_i32, %c0_i32_0 : i32, i32
  }
  func.func @transform_3(%arg0: i32) -> (i32, i32) {
    %c0_i32 = arith.constant 0 : i32
    %c0_i32_0 = arith.constant 0 : i32
    %c0_i32_1 = arith.constant 0 : i32
    return %c0_i32, %c0_i32_0 : i32, i32
  }
  func.func @transform_4(%arg0: i32) -> (i32, i32) {
    %c0_i32 = arith.constant 0 : i32
    %c0_i32_0 = arith.constant 0 : i32
    %c0_i32_1 = arith.constant 0 : i32
    return %c0_i32, %c0_i32_0 : i32, i32
  }
  func.func @transform_5(%arg0: i32) -> (i32, i32) {
    %c0_i32 = arith.constant 0 : i32
    %c0_i32_0 = arith.constant 0 : i32
    %c0_i32_1 = arith.constant 0 : i32
    return %c0_i32, %c0_i32_0 : i32, i32
  }
  func.func @transform_6(%arg0: i32) -> (i32, i32) {
    %c0_i32 = arith.constant 0 : i32
    %c0_i32_0 = arith.constant 0 : i32
    %c0_i32_1 = arith.constant 0 : i32
    return %c0_i32, %c0_i32_0 : i32, i32
  }
  func.func @transform_7(%arg0: i32) -> (i32, i32) {
    %c0_i32 = arith.constant 0 : i32
    %c0_i32_0 = arith.constant 0 : i32
    %c0_i32_1 = arith.constant 0 : i32
    return %c0_i32, %c0_i32_0 : i32, i32
  }
  func.func @transform_8(%arg0: i32) -> (i32, i32) {
    %c0_i32 = arith.constant 0 : i32
    %c0_i32_0 = arith.constant 0 : i32
    %c0_i32_1 = arith.constant 0 : i32
    return %c0_i32, %c0_i32_0 : i32, i32
  }
  func.func @transform_9(%arg0: i32) -> (i32, i32) {
    %c0_i32 = arith.constant 0 : i32
    %c0_i32_0 = arith.constant 0 : i32
    %c0_i32_1 = arith.constant 0 : i32
    return %c0_i32, %c0_i32_0 : i32, i32
  }
  func.func @transform_10(%arg0: i32) -> (i32, i32) {
    %c0_i32 = arith.constant 0 : i32
    %c0_i32_0 = arith.constant 0 : i32
    %c0_i32_1 = arith.constant 0 : i32
    return %c0_i32, %c0_i32_0 : i32, i32
  }
  func.func @transform_11(%arg0: i32) -> (i32, i32) {
    %c0_i32 = arith.constant 0 : i32
    %c0_i32_0 = arith.constant 0 : i32
    %c0_i32_1 = arith.constant 0 : i32
    return %c0_i32, %c0_i32_0 : i32, i32
  }
  func.func @transform_12(%arg0: i32) -> (i32, i32) {
    %c0_i32 = arith.constant 0 : i32
    %c0_i32_0 = arith.constant 0 : i32
    %c0_i32_1 = arith.constant 0 : i32
    return %c0_i32, %c0_i32_0 : i32, i32
  }
  func.func @transform_13(%arg0: i32) -> (i32, i32) {
    %c0_i32 = arith.constant 0 : i32
    %c0_i32_0 = arith.constant 0 : i32
    %c0_i32_1 = arith.constant 0 : i32
    return %c0_i32, %c0_i32_0 : i32, i32
  }
  func.func @transform_14(%arg0: i32) -> (i32, i32, i32) {
    %c0_i32 = arith.constant 0 : i32
    %c0_i32_0 = arith.constant 0 : i32
    %c0_i32_1 = arith.constant 0 : i32
    return %arg0, %c0_i32, %c0_i32_0 : i32, i32, i32
  }
}

</mosaic_0001>

<llo_original>
// kernel: forward.1
$region0: #{forward.1}
  #allocation0 [shape = 'u32[]', space=smem, size = 0x4, offset = 0x4, fixed_abs, tag = 'smem constant byte address 0x4 - core index']
  #allocation1 [shape = 'u32[144,128]{1,0:T(1,128)}', space=vmem, size = 0x12000, scoped, tag = 'internal scratch']
  #allocation2 [shape = 'f32[1,1]{1,0:T(1,128)S(1)}', space=vmem, size = 0x200, scoped, tag = 'scoped memory for forward.1']
  %s0 = inlined_call_operand.vmem [shape: f32[2,2,8,128], index: 0, kind: input, shape index: {}]
  %s1 = inlined_call_operand.vmem [shape: f32[10,128], index: 1, kind: input, shape index: {}]
  %s2 = inlined_call_operand.vmem [shape: f32[48,72], index: 2, kind: input, shape index: {}]
  %s3 = inlined_call_operand.hbm [shape: f32[48,256], index: 3, kind: input, shape index: {}]
  %s4 = inlined_call_operand.vmem [shape: f32[16,72], index: 4, kind: input, shape index: {}]
  %s5 = inlined_call_operand.hbm [shape: f32[8,72], index: 5, kind: input, shape index: {}]
  %s6 = inlined_call_operand.hbm [shape: f32[16,72], index: 6, kind: input, shape index: {}]
  %s7 = inlined_call_operand.hbm [shape: f32[8,72], index: 7, kind: input, shape index: {}]
  %s8 = inlined_call_operand.hbm [shape: f32[512,128], index: 8, kind: input, shape index: {}]
  %s9 = inlined_call_operand.hbm [shape: f32[1,128], index: 9, kind: input, shape index: {}]
  %s10 = inlined_call_operand.vmem [shape: f32[128,128], index: 10, kind: input, shape index: {}]
  %s11 = inlined_call_operand.vmem [shape: f32[1,128], index: 11, kind: input, shape index: {}]
  %s12 = inlined_call_operand.vmem [shape: f32[1,128], index: 12, kind: input, shape index: {}]
  %s13 = inlined_call_operand.<no memory space> [shape: f32[1,1], index: 13, kind: input, shape index: {}]
  %s14 = inlined_call_operand.vmem [shape: f32[2,2,1], index: 14, kind: output, shape index: {}]
  %s15 = sld [smem:[#allocation0]]
  $region113: #{forward.1} parent=0
    _
  %s17 = ssub.s32 1, %s15
  %s18 = scalar_select 0, %s17, %s15
  %v19 = vstv %s13
  %20 = vst [vmem:[#allocation2] sm:$0x1] %v19
  $region1: #{forward.1} parent=0
    #allocation3 [shape = 'u8[49152]{0}', space=vmem, size = 0xc000, scoped, tag = 'input window, operand 3, single buffered']
    #allocation4 [shape = 's32[2]{0}', space=sflag, size = 0x8, scoped, tag = 'scoped memory for forward.1']
    #allocation5 [shape = 'u8[4096]{0}', space=vmem, size = 0x1000, scoped, tag = 'input window, operand 5, single buffered']
    #allocation6 [shape = 's32[1]{0}', space=sflag, size = 0x4, scoped, tag = 'scoped memory for forward.1']
    #allocation7 [shape = 'u8[8192]{0}', space=vmem, size = 0x2000, scoped, tag = 'input window, operand 6, single buffered']
    #allocation8 [shape = 'u8[4096]{0}', space=vmem, size = 0x1000, scoped, tag = 'input window, operand 7, single buffered']
    #allocation9 [shape = 's32[1]{0}', space=sflag, size = 0x4, scoped, tag = 'scoped memory for forward.1']
    #allocation10 [shape = 'u8[262144]{0}', space=vmem, size = 0x40000, scoped, tag = 'input window, operand 8, single buffered']
    #allocation11 [shape = 'u8[512]{0}', space=vmem, size = 0x400, scoped, tag = 'input window, operand 9, single buffered']
    #allocation12 [shape = 's32[1]{0}', space=sflag, size = 0x4, scoped, tag = 'scoped memory for forward.1']
    %21 = vsyncpa [#allocation4], 0
    %22 = vsyncpa [#allocation6], 0
    %23 = vsyncpa [#allocation9], 0
    %24 = vsyncpa [#allocation12], 0
    loop: start=0, step=1, limit=4
    $region2: #{forward.1} parent=1 // loop_pre_header
      _
    $region3: #{forward.1} parent=1 // loop_header
      %s26 = sphi 0, %s30
      %p27 = scmp.ge.s32.totalorder %s26, 4
      %s36 = sphi 0, %s38
      %s39 = sphi 0, %s36
      %s40 = sphi 0, %s39
      %s56 = sphi 0, %s40
      %s60 = sphi 0, %s60
      %s62 = sphi 0, %s60
      %s63 = sphi 0, %s62
      %s77 = sphi 0, %s63
      %s81 = sphi 0, %s81
      %s83 = sphi 0, %s81
      %s84 = sphi 0, %s83
      %s98 = sphi 0, %s84
      %s102 = sphi 0, %s102
      %s104 = sphi 0, %s102
      %s105 = sphi 0, %s104
      %s119 = sphi 0, %s105
      %s123 = sphi 0, %s123
      %s125 = sphi 0, %s123
      %s126 = sphi 0, %s125
      %s140 = sphi 0, %s126
      %s144 = sphi 0, %s144
      %s146 = sphi 0, %s144
      %s147 = sphi 0, %s146
      %s161 = sphi 0, %s147
      %s165 = sphi 0, %s165
      %s167 = sphi 0, %s165
      %s168 = sphi 0, %s167
      %s182 = sphi 0, %s168
      %s186 = sphi 0, %s186
      %s188 = sphi 0, %s186
      %s189 = sphi 0, %s188
      %s203 = sphi 0, %s189
      %s207 = sphi 0, %s207
      %s209 = sphi 0, %s207
      %s210 = sphi 0, %s209
      %s224 = sphi 0, %s210
      %s228 = sphi 0, %s228
      %s230 = sphi 0, %s228
      %s231 = sphi 0, %s230
      %s245 = sphi 0, %s231
      %s249 = sphi 0, %s249
      %s251 = sphi 0, %s249
      %s252 = sphi 0, %s251
      %s266 = sphi 0, %s252
      %s270 = sphi 0, %s270
      %s272 = sphi 0, %s270
      %s273 = sphi 0, %s272
      %s287 = sphi 0, %s273
      %s291 = sphi 0, %s291
      %s293 = sphi 0, %s291
      %s294 = sphi 0, %s293
      %s308 = sphi 0, %s294
      %s312 = sphi 0, %s312
      %s314 = sphi 0, %s312
      %s315 = sphi 0, %s314
      %s329 = sphi 0, %s315
      %s335 = sphi 0, %s337
      %s338 = sphi 0, %s335
      %s339 = sphi 0, %s338
      %s355 = sphi 0, %s339
    $region4: #{forward.1} parent=1 // loop_header_branch
      %29 = sbr.rel (%p27) target = $region8
    $region5: #{forward.1} parent=1 // loop_body
      %s31 = ssub.s32 %s26, 1
      %s32 = ssub.s32 %s26, 2
      %s33 = sadd.s32 %s26, 1
      %s34 = ssub.s32 %s26, %s33
      %p35 = scmp.eq.s32.totalorder %s34, 0
      %s37 = sadd.s32 %s36, 1
      %s38 = scalar_select %p35, %s36, %s37
      %p41 = pneg %p35
      %p42 = scmp.eq.s32.totalorder %s26, 1
      %p43 = por %p41, %p42
      %p44 = scmp.ne.s32.totalorder %s36, %s39
      %p45 = scmp.eq.s32.totalorder %s26, 0
      %p46 = por %p44, %p45
      %p47 = scmp.ne.s32.totalorder %s36, %s39
      %p48 = scmp.eq.s32.totalorder %s31, 1
      %p49 = por %p47, %p48
      %p50 = scmp.ne.s32.totalorder %s39, %s40
      %p51 = scmp.eq.s32.totalorder %s31, 0
      %p52 = por %p50, %p51
      %p53 = scmp.ne.s32.totalorder %s39, %s40
      %p54 = scmp.eq.s32.totalorder %s32, 1
      %p55 = por %p53, %p54
      %p57 = scmp.ne.s32.totalorder %s40, %s56
      %p58 = scmp.eq.s32.totalorder %s32, 0
      %p59 = por %p57, %p58
      %s61 = sadd.s32 %s60, 1
      %p64 = scmp.eq.s32.totalorder %s26, 1
      %p65 = scmp.ne.s32.totalorder %s60, %s62
      %p66 = scmp.eq.s32.totalorder %s26, 0
      %p67 = por %p65, %p66
      %p68 = scmp.ne.s32.totalorder %s60, %s62
      %p69 = scmp.eq.s32.totalorder %s31, 1
      %p70 = por %p68, %p69
      %p71 = scmp.ne.s32.totalorder %s62, %s63
      %p72 = scmp.eq.s32.totalorder %s31, 0
      %p73 = por %p71, %p72
      %p74 = scmp.ne.s32.totalorder %s62, %s63
      %p75 = scmp.eq.s32.totalorder %s32, 1
      %p76 = por %p74, %p75
      %p78 = scmp.ne.s32.totalorder %s63, %s77
      %p79 = scmp.eq.s32.totalorder %s32, 0
      %p80 = por %p78, %p79
      %s82 = sadd.s32 %s81, 1
      %p85 = scmp.eq.s32.totalorder %s26, 1
      %p86 = scmp.ne.s32.totalorder %s81, %s83
      %p87 = scmp.eq.s32.totalorder %s26, 0
      %p88 = por %p86, %p87
      %p89 = scmp.ne.s32.totalorder %s81, %s83
      %p90 = scmp.eq.s32.totalorder %s31, 1
      %p91 = por %p89, %p90
      %p92 = scmp.ne.s32.totalorder %s83, %s84
      %p93 = scmp.eq.s32.totalorder %s31, 0
      %p94 = por %p92, %p93
      %p95 = scmp.ne.s32.totalorder %s83, %s84
      %p96 = scmp.eq.s32.totalorder %s32, 1
      %p97 = por %p95, %p96
      %p99 = scmp.ne.s32.totalorder %s84, %s98
      %p100 = scmp.eq.s32.totalorder %s32, 0
      %p101 = por %p99, %p100
      %s103 = sadd.s32 %s102, 1
      %p106 = scmp.eq.s32.totalorder %s26, 1
      %p107 = scmp.ne.s32.totalorder %s102, %s104
      %p108 = scmp.eq.s32.totalorder %s26, 0
      %p109 = por %p107, %p108
      %p110 = scmp.ne.s32.totalorder %s102, %s104
      %p111 = scmp.eq.s32.totalorder %s31, 1
      %p112 = por %p110, %p111
      %p113 = scmp.ne.s32.totalorder %s104, %s105
      %p114 = scmp.eq.s32.totalorder %s31, 0
      %p115 = por %p113, %p114
      %p116 = scmp.ne.s32.totalorder %s104, %s105
      %p117 = scmp.eq.s32.totalorder %s32, 1
      %p118 = por %p116, %p117
      %p120 = scmp.ne.s32.totalorder %s105, %s119
      %p121 = scmp.eq.s32.totalorder %s32, 0
      %p122 = por %p120, %p121
      %s124 = sadd.s32 %s123, 1
      %p127 = scmp.eq.s32.totalorder %s26, 1
      %p128 = scmp.ne.s32.totalorder %s123, %s125
      %p129 = scmp.eq.s32.totalorder %s26, 0
      %p130 = por %p128, %p129
      %p131 = scmp.ne.s32.totalorder %s123, %s125
      %p132 = scmp.eq.s32.totalorder %s31, 1
      %p133 = por %p131, %p132
      %p134 = scmp.ne.s32.totalorder %s125, %s126
      %p135 = scmp.eq.s32.totalorder %s31, 0
      %p136 = por %p134, %p135
      %p137 = scmp.ne.s32.totalorder %s125, %s126
      %p138 = scmp.eq.s32.totalorder %s32, 1
      %p139 = por %p137, %p138
      %p141 = scmp.ne.s32.totalorder %s126, %s140
      %p142 = scmp.eq.s32.totalorder %s32, 0
      %p143 = por %p141, %p142
      %s145 = sadd.s32 %s144, 1
      %p148 = scmp.eq.s32.totalorder %s26, 1
      %p149 = scmp.ne.s32.totalorder %s144, %s146
      %p150 = scmp.eq.s32.totalorder %s26, 0
      %p151 = por %p149, %p150
      %p152 = scmp.ne.s32.totalorder %s144, %s146
      %p153 = scmp.eq.s32.totalorder %s31, 1
      %p154 = por %p152, %p153
      %p155 = scmp.ne.s32.totalorder %s146, %s147
      %p156 = scmp.eq.s32.totalorder %s31, 0
      %p157 = por %p155, %p156
      %p158 = scmp.ne.s32.totalorder %s146, %s147
      %p159 = scmp.eq.s32.totalorder %s32, 1
      %p160 = por %p158, %p159
      %p162 = scmp.ne.s32.totalorder %s147, %s161
      %p163 = scmp.eq.s32.totalorder %s32, 0
      %p164 = por %p162, %p163
      %s166 = sadd.s32 %s165, 1
      %p169 = scmp.eq.s32.totalorder %s26, 1
      %p170 = scmp.ne.s32.totalorder %s165, %s167
      %p171 = scmp.eq.s32.totalorder %s26, 0
      %p172 = por %p170, %p171
      %p173 = scmp.ne.s32.totalorder %s165, %s167
      %p174 = scmp.eq.s32.totalorder %s31, 1
      %p175 = por %p173, %p174
      %p176 = scmp.ne.s32.totalorder %s167, %s168
      %p177 = scmp.eq.s32.totalorder %s31, 0
      %p178 = por %p176, %p177
      %p179 = scmp.ne.s32.totalorder %s167, %s168
      %p180 = scmp.eq.s32.totalorder %s32, 1
      %p181 = por %p179, %p180
      %p183 = scmp.ne.s32.totalorder %s168, %s182
      %p184 = scmp.eq.s32.totalorder %s32, 0
      %p185 = por %p183, %p184
      %s187 = sadd.s32 %s186, 1
      %p190 = scmp.eq.s32.totalorder %s26, 1
      %p191 = scmp.ne.s32.totalorder %s186, %s188
      %p192 = scmp.eq.s32.totalorder %s26, 0
      %p193 = por %p191, %p192
      %p194 = scmp.ne.s32.totalorder %s186, %s188
      %p195 = scmp.eq.s32.totalorder %s31, 1
      %p196 = por %p194, %p195
      %p197 = scmp.ne.s32.totalorder %s188, %s189
      %p198 = scmp.eq.s32.totalorder %s31, 0
      %p199 = por %p197, %p198
      %p200 = scmp.ne.s32.totalorder %s188, %s189
      %p201 = scmp.eq.s32.totalorder %s32, 1
      %p202 = por %p200, %p201
      %p204 = scmp.ne.s32.totalorder %s189, %s203
      %p205 = scmp.eq.s32.totalorder %s32, 0
      %p206 = por %p204, %p205
      %s208 = sadd.s32 %s207, 1
      %p211 = scmp.eq.s32.totalorder %s26, 1
      %p212 = scmp.ne.s32.totalorder %s207, %s209
      %p213 = scmp.eq.s32.totalorder %s26, 0
      %p214 = por %p212, %p213
      %p215 = scmp.ne.s32.totalorder %s207, %s209
      %p216 = scmp.eq.s32.totalorder %s31, 1
      %p217 = por %p215, %p216
      %p218 = scmp.ne.s32.totalorder %s209, %s210
      %p219 = scmp.eq.s32.totalorder %s31, 0
      %p220 = por %p218, %p219
      %p221 = scmp.ne.s32.totalorder %s209, %s210
      %p222 = scmp.eq.s32.totalorder %s32, 1
      %p223 = por %p221, %p222
      %p225 = scmp.ne.s32.totalorder %s210, %s224
      %p226 = scmp.eq.s32.totalorder %s32, 0
      %p227 = por %p225, %p226
      %s229 = sadd.s32 %s228, 1
      %p232 = scmp.eq.s32.totalorder %s26, 1
      %p233 = scmp.ne.s32.totalorder %s228, %s230
      %p234 = scmp.eq.s32.totalorder %s26, 0
      %p235 = por %p233, %p234
      %p236 = scmp.ne.s32.totalorder %s228, %s230
      %p237 = scmp.eq.s32.totalorder %s31, 1
      %p238 = por %p236, %p237
      %p239 = scmp.ne.s32.totalorder %s230, %s231
      %p240 = scmp.eq.s32.totalorder %s31, 0
      %p241 = por %p239, %p240
      %p242 = scmp.ne.s32.totalorder %s230, %s231
      %p243 = scmp.eq.s32.totalorder %s32, 1
      %p244 = por %p242, %p243
      %p246 = scmp.ne.s32.totalorder %s231, %s245
      %p247 = scmp.eq.s32.totalorder %s32, 0
      %p248 = por %p246, %p247
      %s250 = sadd.s32 %s249, 1
      %p253 = scmp.eq.s32.totalorder %s26, 1
      %p254 = scmp.ne.s32.totalorder %s249, %s251
      %p255 = scmp.eq.s32.totalorder %s26, 0
      %p256 = por %p254, %p255
      %p257 = scmp.ne.s32.totalorder %s249, %s251
      %p258 = scmp.eq.s32.totalorder %s31, 1
      %p259 = por %p257, %p258
      %p260 = scmp.ne.s32.totalorder %s251, %s252
      %p261 = scmp.eq.s32.totalorder %s31, 0
      %p262 = por %p260, %p261
      %p263 = scmp.ne.s32.totalorder %s251, %s252
      %p264 = scmp.eq.s32.totalorder %s32, 1
      %p265 = por %p263, %p264
      %p267 = scmp.ne.s32.totalorder %s252, %s266
      %p268 = scmp.eq.s32.totalorder %s32, 0
      %p269 = por %p267, %p268
      %s271 = sadd.s32 %s270, 1
      %p274 = scmp.eq.s32.totalorder %s26, 1
      %p275 = scmp.ne.s32.totalorder %s270, %s272
      %p276 = scmp.eq.s32.totalorder %s26, 0
      %p277 = por %p275, %p276
      %p278 = scmp.ne.s32.totalorder %s270, %s272
      %p279 = scmp.eq.s32.totalorder %s31, 1
      %p280 = por %p278, %p279
      %p281 = scmp.ne.s32.totalorder %s272, %s273
      %p282 = scmp.eq.s32.totalorder %s31, 0
      %p283 = por %p281, %p282
      %p284 = scmp.ne.s32.totalorder %s272, %s273
      %p285 = scmp.eq.s32.totalorder %s32, 1
      %p286 = por %p284, %p285
      %p288 = scmp.ne.s32.totalorder %s273, %s287
      %p289 = scmp.eq.s32.totalorder %s32, 0
      %p290 = por %p288, %p289
      %s292 = sadd.s32 %s291, 1
      %p295 = scmp.eq.s32.totalorder %s26, 1
      %p296 = scmp.ne.s32.totalorder %s291, %s293
      %p297 = scmp.eq.s32.totalorder %s26, 0
      %p298 = por %p296, %p297
      %p299 = scmp.ne.s32.totalorder %s291, %s293
      %p300 = scmp.eq.s32.totalorder %s31, 1
      %p301 = por %p299, %p300
      %p302 = scmp.ne.s32.totalorder %s293, %s294
      %p303 = scmp.eq.s32.totalorder %s31, 0
      %p304 = por %p302, %p303
      %p305 = scmp.ne.s32.totalorder %s293, %s294
      %p306 = scmp.eq.s32.totalorder %s32, 1
      %p307 = por %p305, %p306
      %p309 = scmp.ne.s32.totalorder %s294, %s308
      %p310 = scmp.eq.s32.totalorder %s32, 0
      %p311 = por %p309, %p310
      %s313 = sadd.s32 %s312, 1
      %p316 = scmp.eq.s32.totalorder %s26, 1
      %p317 = scmp.ne.s32.totalorder %s312, %s314
      %p318 = scmp.eq.s32.totalorder %s26, 0
      %p319 = por %p317, %p318
      %p320 = scmp.ne.s32.totalorder %s312, %s314
      %p321 = scmp.eq.s32.totalorder %s31, 1
      %p322 = por %p320, %p321
      %p323 = scmp.ne.s32.totalorder %s314, %s315
      %p324 = scmp.eq.s32.totalorder %s31, 0
      %p325 = por %p323, %p324
      %p326 = scmp.ne.s32.totalorder %s314, %s315
      %p327 = scmp.eq.s32.totalorder %s32, 1
      %p328 = por %p326, %p327
      %p330 = scmp.ne.s32.totalorder %s315, %s329
      %p331 = scmp.eq.s32.totalorder %s32, 0
      %p332 = por %p330, %p331
      %s333 = ssub.s32 %s26, %s33
      %p334 = scmp.eq.s32.totalorder %s333, 0
      %s336 = sadd.s32 %s335, 1
      %s337 = scalar_select %p334, %s335, %s336
      %p340 = pneg %p334
      %p341 = scmp.eq.s32.totalorder %s26, 1
      %p342 = por %p340, %p341
      %p343 = scmp.ne.s32.totalorder %s335, %s338
      %p344 = scmp.eq.s32.totalorder %s26, 0
      %p345 = por %p343, %p344
      %p346 = scmp.ne.s32.totalorder %s335, %s338
      %p347 = scmp.eq.s32.totalorder %s31, 1
      %p348 = por %p346, %p347
      %p349 = scmp.ne.s32.totalorder %s338, %s339
      %p350 = scmp.eq.s32.totalorder %s31, 0
      %p351 = por %p349, %p350
      %p352 = scmp.ne.s32.totalorder %s338, %s339
      %p353 = scmp.eq.s32.totalorder %s32, 1
      %p354 = por %p352, %p353
      %p356 = scmp.ne.s32.totalorder %s339, %s355
      %p357 = scmp.eq.s32.totalorder %s32, 0
      %p358 = por %p356, %p357
      %p359 = scmp.le.s32.totalorder 1, %s26
      %p360 = scmp.lt.s32.totalorder %s26, 3
      %p361 = pnand %p359, %p360
      %p362 = pneg %p361
      // Predicated region
      $region9: #{forward.1} parent=5 // pred_check
        _
      $region10: #{forward.1} parent=5 // pred_check_branch
        %364 = sbr.rel (%p361) target = $region12
      $region11: #{forward.1} parent=5 // pred_region
        %s365 = ssub.s32 %s26, 1
        // Predicated region
        $region13: #{forward.1} parent=11 // pred_check
          %p366 = pneg %p73
        $region14: #{forward.1} parent=11 // pred_check_branch
          %368 = sbr.rel (%p366) target = $region16
        $region15: #{forward.1} parent=11 // pred_region
          _
        $region16: #{forward.1} parent=11 // pred_fallthru
          _
        // Predicated region
        $region17: #{forward.1} parent=11 // pred_check
          %p369 = pneg %p94
        $region18: #{forward.1} parent=11 // pred_check_branch
          %371 = sbr.rel (%p369) target = $region20
        $region19: #{forward.1} parent=11 // pred_region
          _
        $region20: #{forward.1} parent=11 // pred_fallthru
          _
        // Predicated region
        $region21: #{forward.1} parent=11 // pred_check
          %p372 = pneg %p115
        $region22: #{forward.1} parent=11 // pred_check_branch
          %374 = sbr.rel (%p372) target = $region24
        $region23: #{forward.1} parent=11 // pred_region
          %s376 = ssub.s32 1536, 1536
          %377 = vsyncadd [#allocation4], %s376
          %s378 = sshll.u32 [#allocation3], 4
          %s379 = int_to_ptr.vmem [resolvable:$true] %s378
          %384 = dma.hbm_to_vmem [thread:$0]  %s3, 1536, %s379, [#allocation4], 256, 256, 16
        $region24: #{forward.1} parent=11 // pred_fallthru
          _
        // Predicated region
        $region25: #{forward.1} parent=11 // pred_check
          %p385 = pneg %p136
        $region26: #{forward.1} parent=11 // pred_check_branch
          %387 = sbr.rel (%p385) target = $region28
        $region27: #{forward.1} parent=11 // pred_region
          _
        $region28: #{forward.1} parent=11 // pred_fallthru
          _
        // Predicated region
        $region29: #{forward.1} parent=11 // pred_check
          %p388 = pneg %p157
        $region30: #{forward.1} parent=11 // pred_check_branch
          %390 = sbr.rel (%p388) target = $region32
        $region31: #{forward.1} parent=11 // pred_region
          %s392 = ssub.s32 128, 128
          %393 = vsyncadd [#allocation6], %s392
          %s395 = sshll.u32 [#allocation5], 4
          %s396 = int_to_ptr.vmem [resolvable:$true] %s395
          %398 = dma.hbm_to_vmem [thread:$0]  %s5, 128, %s396, [#allocation6]
        $region32: #{forward.1} parent=11 // pred_fallthru
          _
        // Predicated region
        $region33: #{forward.1} parent=11 // pred_check
          %p399 = pneg %p178
        $region34: #{forward.1} parent=11 // pred_check_branch
          %401 = sbr.rel (%p399) target = $region36
        $region35: #{forward.1} parent=11 // pred_region
          %s403 = ssub.s32 256, 256
          %404 = vsyncadd [#allocation6], %s403
          %s405 = sshll.u32 [#allocation7], 4
          %s406 = int_to_ptr.vmem [resolvable:$true] %s405
          %411 = dma.hbm_to_vmem [thread:$0]  %s6, 256, %s406, [#allocation6], 128, 128, 8
        $region36: #{forward.1} parent=11 // pred_fallthru
          _
        // Predicated region
        $region37: #{forward.1} parent=11 // pred_check
          %p412 = pneg %p199
        $region38: #{forward.1} parent=11 // pred_check_branch
          %414 = sbr.rel (%p412) target = $region40
        $region39: #{forward.1} parent=11 // pred_region
          %s416 = ssub.s32 128, 128
          %417 = vsyncadd [#allocation9], %s416
          %s419 = sshll.u32 [#allocation8], 4
          %s420 = int_to_ptr.vmem [resolvable:$true] %s419
          %422 = dma.hbm_to_vmem [thread:$0]  %s7, 128, %s420, [#allocation9]
        $region40: #{forward.1} parent=11 // pred_fallthru
          _
        // Predicated region
        $region41: #{forward.1} parent=11 // pred_check
          %p423 = pneg %p220
        $region42: #{forward.1} parent=11 // pred_check_branch
          %425 = sbr.rel (%p423) target = $region44
        $region43: #{forward.1} parent=11 // pred_region
          %s427 = ssub.s32 8192, 8192
          %428 = vsyncadd [#allocation9], %s427
          %s429 = sshll.u32 [#allocation10], 4
          %s430 = int_to_ptr.vmem [resolvable:$true] %s429
          %435 = dma.hbm_to_vmem [thread:$0]  %s8, 8192, %s430, [#allocation9], 128, 128, 8
        $region44: #{forward.1} parent=11 // pred_fallthru
          _
        // Predicated region
        $region45: #{forward.1} parent=11 // pred_check
          %p436 = pneg %p241
        $region46: #{forward.1} parent=11 // pred_check_branch
          %438 = sbr.rel (%p436) target = $region48
        $region47: #{forward.1} parent=11 // pred_region
          %s440 = ssub.s32 16, 16
          %441 = vsyncadd [#allocation12], %s440
          %s443 = sshll.u32 [#allocation11], 4
          %s444 = int_to_ptr.vmem [resolvable:$true] %s443
          %446 = dma.hbm_to_vmem [thread:$0]  %s9, 16, %s444, [#allocation12]
        $region48: #{forward.1} parent=11 // pred_fallthru
          _
        // Predicated region
        $region49: #{forward.1} parent=11 // pred_check
          %p447 = pneg %p262
        $region50: #{forward.1} parent=11 // pred_check_branch
          %449 = sbr.rel (%p447) target = $region52
        $region51: #{forward.1} parent=11 // pred_region
          _
        $region52: #{forward.1} parent=11 // pred_fallthru
          _
        // Predicated region
        $region53: #{forward.1} parent=11 // pred_check
          %p450 = pneg %p283
        $region54: #{forward.1} parent=11 // pred_check_branch
          %452 = sbr.rel (%p450) target = $region56
        $region55: #{forward.1} parent=11 // pred_region
          _
        $region56: #{forward.1} parent=11 // pred_fallthru
          _
        // Predicated region
        $region57: #{forward.1} parent=11 // pred_check
          %p453 = pneg %p304
        $region58: #{forward.1} parent=11 // pred_check_branch
          %455 = sbr.rel (%p453) target = $region60
        $region59: #{forward.1} parent=11 // pred_region
          _
        $region60: #{forward.1} parent=11 // pred_fallthru
          _
        // Predicated region
        $region61: #{forward.1} parent=11 // pred_check
          %p456 = pneg %p325
        $region62: #{forward.1} parent=11 // pred_check_branch
          %458 = sbr.rel (%p456) target = $region64
        $region63: #{forward.1} parent=11 // pred_region
          _
        $region64: #{forward.1} parent=11 // pred_fallthru
          _
      $region12: #{forward.1} parent=5 // pred_fallthru
        _
      %p459 = scmp.lt.s32.totalorder %s26, 2
      // Predicated region
      $region65: #{forward.1} parent=5 // pred_check
        %p460 = pneg %p459
      $region66: #{forward.1} parent=5 // pred_check_branch
        %462 = sbr.rel (%p460) target = $region68
      $region67: #{forward.1} parent=5 // pred_region
        // Predicated region
        $region69: #{forward.1} parent=67 // pred_check
          %p463 = pneg %p46
        $region70: #{forward.1} parent=67 // pred_check_branch
          %465 = sbr.rel (%p463) target = $region72
        $region71: #{forward.1} parent=67 // pred_region
          %p466 = scmp.lt.s32.totalorder %s26, 1
          %s467 = scalar_select %p466, %s26, 1
          %s468 = smul.addr %s467, 2
          %s469 = smul.addr %s468, 8
          %s470 = scalar_lea.vmem %s0, %s469
        $region72: #{forward.1} parent=67 // pred_fallthru
          _
      $region68: #{forward.1} parent=5 // pred_fallthru
        _
      %p471 = scmp.le.s32.totalorder 1, %s26
      %p472 = scmp.lt.s32.totalorder %s26, 3
      %p473 = pnand %p471, %p472
      %p474 = pneg %p473
      // Predicated region
      $region73: #{forward.1} parent=5 // pred_check
        _
      $region74: #{forward.1} parent=5 // pred_check_branch
        %476 = sbr.rel (%p473) target = $region76
      $region75: #{forward.1} parent=5 // pred_region
        %s477 = ssub.s32 %s26, 1
        // Predicated region
        $region77: #{forward.1} parent=75 // pred_check
          %p478 = pneg %p115
        $region78: #{forward.1} parent=75 // pred_check_branch
          %480 = sbr.rel (%p478) target = $region80
        $region79: #{forward.1} parent=75 // pred_region
          %481 = dma.done [#allocation4], 1536
        $region80: #{forward.1} parent=75 // pred_fallthru
          _
        // Predicated region
        $region81: #{forward.1} parent=75 // pred_check
          %p482 = pneg %p157
        $region82: #{forward.1} parent=75 // pred_check_branch
          %484 = sbr.rel (%p482) target = $region84
        $region83: #{forward.1} parent=75 // pred_region
          %485 = dma.done [#allocation6], 128
        $region84: #{forward.1} parent=75 // pred_fallthru
          _
        // Predicated region
        $region85: #{forward.1} parent=75 // pred_check
          %p486 = pneg %p178
        $region86: #{forward.1} parent=75 // pred_check_branch
          %488 = sbr.rel (%p486) target = $region88
        $region87: #{forward.1} parent=75 // pred_region
          %489 = dma.done [#allocation6], 256
        $region88: #{forward.1} parent=75 // pred_fallthru
          _
        // Predicated region
        $region89: #{forward.1} parent=75 // pred_check
          %p490 = pneg %p199
        $region90: #{forward.1} parent=75 // pred_check_branch
          %492 = sbr.rel (%p490) target = $region92
        $region91: #{forward.1} parent=75 // pred_region
          %493 = dma.done [#allocation9], 128
        $region92: #{forward.1} parent=75 // pred_fallthru
          _
        // Predicated region
        $region93: #{forward.1} parent=75 // pred_check
          %p494 = pneg %p220
        $region94: #{forward.1} parent=75 // pred_check_branch
          %496 = sbr.rel (%p494) target = $region96
        $region95: #{forward.1} parent=75 // pred_region
          %497 = dma.done [#allocation9], 8192
        $region96: #{forward.1} parent=75 // pred_fallthru
          _
        // Predicated region
        $region97: #{forward.1} parent=75 // pred_check
          %p498 = pneg %p241
        $region98: #{forward.1} parent=75 // pred_check_branch
          %500 = sbr.rel (%p498) target = $region100
        $region99: #{forward.1} parent=75 // pred_region
          %501 = dma.done [#allocation12], 16
        $region100: #{forward.1} parent=75 // pred_fallthru
          _
        %p502 = scmp.lt.s32.totalorder %s31, 1
        %s503 = scalar_select %p502, %s31, 1
        %s504 = smul.addr %s503, 2
        %s505 = smul.addr %s504, 8
        %s506 = scalar_lea.vmem %s0, %s505
        %p507 = pneg %p52
        %p508 = pneg %p49
        %p509 = pneg %p73
        %p510 = pneg %p70
        %p511 = pneg %p94
        %p512 = pneg %p91
        %p513 = pneg %p115
        %p514 = pneg %p112
        %p515 = pneg %p136
        %p516 = pneg %p133
        %p517 = pneg %p157
        %p518 = pneg %p154
        %p519 = pneg %p178
        %p520 = pneg %p175
        %p521 = pneg %p199
        %p522 = pneg %p196
        %p523 = pneg %p220
        %p524 = pneg %p217
        %p525 = pneg %p241
        %p526 = pneg %p238
        %p527 = pneg %p262
        %p528 = pneg %p259
        %p529 = pneg %p283
        %p530 = pneg %p280
        %p531 = pneg %p304
        %p532 = pneg %p301
        %p533 = pneg %p325
        %p534 = pneg %p322
        %p535 = pneg %p351
        %p536 = pneg %p348
        %p537 = scmp.lt.s32.totalorder %s31, 1
        %s538 = scalar_select %p537, %s31, 1
        %s539 = smul.addr %s538, 2
        %s540 = scalar_lea.vmem %s14, %s539
        %p541 = scmp.lt.s32.totalorder %s31, 1
        %s542 = scalar_select %p541, %s31, 1
        %s543 = smul.addr %s542, 2
        %s544 = smul.addr %s543, 8
        %s545 = scalar_lea.vmem %s0, %s544
        %p546 = scmp.lt.s32.totalorder %s31, 1
        %s547 = scalar_select %p546, %s31, 1
        %s548 = smul.addr %s547, 2
        %s549 = scalar_lea.vmem %s14, %s548
        %v550 = vld [vmem:[%s1] sm:$0xff]
        %v551 = vld [vmem:[%s1 + $0x8] sm:$0x3]
        %v552 = vld [vmem:[%s545] sm:$0xff]
        %553 = vrot.lane.b32.xlu0 %v552, 9
        %v554 = vpop.permute.xlu0 %553
        %v555 = vlaneseq
        %v556 = vshrl.u32 %v555, 7
        %v557 = vsub.s32 0, %v556
        %v558 = vrot.slane %v550, %v557
        %v559 = vmul.f32 %v554, %v558
        %560 = vrot.lane.b32.xlu0 %v552, 8
        %v561 = vpop.permute.xlu0 %560
        %562 = vrot.lane.b32.xlu0 %v552, 7
        %v563 = vpop.permute.xlu0 %562
        %v564 = vlaneseq
        %v565 = vshrl.u32 %v564, 7
        %v566 = vsub.s32 2, %v565
        %v567 = vrot.slane %v550, %v566
        %v568 = vmul.f32 %v563, %v567
        %569 = vrot.lane.b32.xlu0 %v552, 1
        %v570 = vpop.permute.xlu0 %569
        %v571 = vlaneseq
        %v572 = vshrl.u32 %v571, 7
        %v573 = vsub.s32 3, %v572
        %v574 = vrot.slane %v550, %v573
        %v575 = vmul.f32 %v570, %v574
        %576 = vrot.lane.b32.xlu0 %v552, 127
        %v577 = vpop.permute.xlu0 %576
        %v578 = vlaneseq
        %v579 = vshrl.u32 %v578, 7
        %v580 = vsub.s32 5, %v579
        %v581 = vrot.slane %v550, %v580
        %v582 = vmul.f32 %v577, %v581
        %583 = vrot.lane.b32.xlu0 %v552, 121
        %v584 = vpop.permute.xlu0 %583
        %v585 = vlaneseq
        %v586 = vshrl.u32 %v585, 7
        %v587 = vsub.s32 6, %v586
        %v588 = vrot.slane %v550, %v587
        %v589 = vmul.f32 %v584, %v588
        %590 = vrot.lane.b32.xlu0 %v552, 120
        %v591 = vpop.permute.xlu0 %590
        %592 = vrot.lane.b32.xlu0 %v552, 119
        %v593 = vpop.permute.xlu0 %592
        %v594 = vlaneseq
        %v595 = vshrl.u32 %v594, 7
        %v596 = vsub.s32 0, %v595
        %v597 = vrot.slane %v551, %v596
        %v598 = vmul.f32 %v593, %v597
        %s599 = scalar_lea.vmem %s545, 8
        %v600 = vld [vmem:[%s599] sm:$0xff]
        %601 = vrot.lane.b32.xlu0 %v600, 9
        %v602 = vpop.permute.xlu0 %601
        %v603 = vmul.f32 %v602, %v558
        %604 = vrot.lane.b32.xlu0 %v600, 8
        %v605 = vpop.permute.xlu0 %604
        %606 = vrot.lane.b32.xlu0 %v600, 7
        %v607 = vpop.permute.xlu0 %606
        %v608 = vmul.f32 %v607, %v567
        %609 = vrot.lane.b32.xlu0 %v600, 1
        %v610 = vpop.permute.xlu0 %609
        %v611 = vmul.f32 %v610, %v574
        %612 = vrot.lane.b32.xlu0 %v600, 127
        %v613 = vpop.permute.xlu0 %612
        %v614 = vmul.f32 %v613, %v581
        %615 = vrot.lane.b32.xlu0 %v600, 121
        %v616 = vpop.permute.xlu0 %615
        %v617 = vmul.f32 %v616, %v588
        %618 = vrot.lane.b32.xlu0 %v600, 120
        %v619 = vpop.permute.xlu0 %618
        %620 = vrot.lane.b32.xlu0 %v600, 119
        %v621 = vpop.permute.xlu0 %620
        %v622 = vmul.f32 %v621, %v597
        %v623 = vld [vmem:[%s2] sm:$0xff]
        %v624 = vld [vmem:[%s2 + $0x8] sm:$0xff]
        %v625 = vld [vmem:[%s2 + $0x10] sm:$0xff]
        %v626 = vld [vmem:[%s2 + $0x18] sm:$0xff]
        %v627 = vld [vmem:[%s2 + $0x20] sm:$0xff]
        %v628 = vld [vmem:[%s2 + $0x28] sm:$0xff]
        %v629 = vld [vmem:[#allocation3] sm:$0xff]
        %v630 = vld [vmem:[#allocation3 + $0x8] sm:$0xff]
        %v631 = vld [vmem:[#allocation3 + $0x10] sm:$0xff]
        %v632 = vld [vmem:[#allocation3 + $0x18] sm:$0xff]
        %v633 = vld [vmem:[#allocation3 + $0x20] sm:$0xff]
        %v634 = vld [vmem:[#allocation3 + $0x28] sm:$0xff]
        %v635 = vld [vmem:[#allocation3 + $0x30] sm:$0xff]
        %v636 = vld [vmem:[#allocation3 + $0x38] sm:$0xff]
        %v637 = vld [vmem:[#allocation3 + $0x40] sm:$0xff]
        %v638 = vld [vmem:[#allocation3 + $0x48] sm:$0xff]
        %v639 = vld [vmem:[#allocation3 + $0x50] sm:$0xff]
        %v640 = vld [vmem:[#allocation3 + $0x58] sm:$0xff]
        %vm641 = vcmask 588800
        %v643 = vsel %vm641, %v623, 0
        %v646 = vsel %vm641, %v624, 0
        %v649 = vsel %vm641, %v625, 0
        %v652 = vsel %vm641, %v626, 0
        %v655 = vsel %vm641, %v627, 0
        %v658 = vsel %vm641, %v628, 0
        %660 = vmatprep.subr.mxu0 %v603
        %661 = vmatpush1.msra.mxu0 %v559
        %662 = vmatprep.subr.mxu0 %v605
        %663 = vmatpush1.msra.mxu0 %v561
        %664 = vmatprep.subr.mxu0 %v608
        %665 = vmatpush1.msra.mxu0 %v568
        %666 = vmatprep.subr.mxu0 %v611
        %667 = vmatpush1.msra.mxu0 %v575
        %668 = vmatprep.subr.mxu0 %v600
        %669 = vmatpush1.msra.mxu0 %v552
        %670 = vmatprep.subr.mxu0 %v614
        %671 = vmatpush1.msra.mxu0 %v582
        %672 = vmatprep.subr.mxu0 %v617
        %673 = vmatpush1.msra.mxu0 %v589
        %674 = vmatprep.subr.mxu0 %v619
        %675 = vmatpush1.msra.mxu0 %v591
        %676 = vmatprep.subr.mxu0 %v622
        %677 = vmatpush1.msra.mxu0 %v598
        %678 = vmatprep.subr.mxu0 0.0
        %679 = vmatpush1.msra.mxu0 0.0
        %680 = vmatprep.subr.mxu0 0.0
        %681 = vmatpush1.msra.mxu0 0.0
        %682 = vmatprep.subr.mxu0 0.0
        %683 = vmatpush1.msra.mxu0 0.0
        %684 = vmatprep.subr.mxu0 0.0
        %685 = vmatpush1.msra.mxu0 0.0
        %686 = vmatprep.subr.mxu0 0.0
        %687 = vmatpush1.msra.mxu0 0.0
        %688 = vmatprep.subr.mxu0 0.0
        %689 = vmatpush1.msra.mxu0 0.0
        %690 = vmatprep.subr.mxu0 0.0
        %691 = vmatpush1.msra.mxu0 0.0
        %692 = vmatprep.subr.mxu0 0.0
        %693 = vmatpush1.msra.mxu0 0.0
        %694 = vmatprep.subr.mxu0 0.0
        %695 = vmatpush1.msra.mxu0 0.0
        %696 = vmatprep.subr.mxu0 0.0
        %697 = vmatpush1.msra.mxu0 0.0
        %698 = vmatprep.subr.mxu0 0.0
        %699 = vmatpush1.msra.mxu0 0.0
        %700 = vmatprep.subr.mxu0 0.0
        %701 = vmatpush1.msra.mxu0 0.0
        %702 = vmatprep.subr.mxu0 0.0
        %703 = vmatpush1.msra.mxu0 0.0
        %704 = vmatprep.subr.mxu0 0.0
        %705 = vmatpush1.msra.mxu0 0.0
        %706 = vmatprep.subr.mxu0 0.0
        %707 = vmatpush1.msra.mxu0 0.0
        %708 = vmatprep.subr.mxu0 0.0
        %709 = vmatpush1.msra.mxu0 0.0
        %710 = vmatprep.subr.mxu0 0.0
        %711 = vmatpush1.msra.mxu0 0.0
        %712 = vmatprep.subr.mxu0 0.0
        %713 = vmatpush1.msra.mxu0 0.0
        %714 = vmatprep.subr.mxu0 0.0
        %715 = vmatpush1.msra.mxu0 0.0
        %716 = vmatprep.subr.mxu0 0.0
        %717 = vmatpush1.msra.mxu0 0.0
        %718 = vmatprep.subr.mxu0 0.0
        %719 = vmatpush1.msra.mxu0 0.0
        %720 = vmatprep.subr.mxu0 0.0
        %721 = vmatpush1.msra.mxu0 0.0
        %722 = vmatprep.subr.mxu0 0.0
        %723 = vmatpush1.msra.mxu0 0.0
        %724 = vmatprep.mubr.f32.mxu0 0.0
        %725 = vmatmul.mubr.f32.gmra.mrb[0].mxu0 %v643
        %v726 = vpop.f32.mrb[0].mxu0
        %v727 = vadd.f32 %v629, %v726
        %v728 = vpop.f32.mrb[0].mxu0
        %v729 = vadd.f32 %v630, %v728
        %730 = vmatprep.mubr.f32.mxu0 0.0
        %731 = vmatmul.mubr.f32.gmra.mrb[0].mxu0 %v646
        %v732 = vpop.f32.mrb[0].mxu0
        %v733 = vadd.f32 %v631, %v732
        %v734 = vpop.f32.mrb[0].mxu0
        %v735 = vadd.f32 %v632, %v734
        %736 = vmatprep.mubr.f32.mxu0 0.0
        %737 = vmatmul.mubr.f32.gmra.mrb[0].mxu0 %v649
        %v738 = vpop.f32.mrb[0].mxu0
        %v739 = vadd.f32 %v633, %v738
        %v740 = vpop.f32.mrb[0].mxu0
        %v741 = vadd.f32 %v634, %v740
        %742 = vmatprep.mubr.f32.mxu0 0.0
        %743 = vmatmul.mubr.f32.gmra.mrb[0].mxu0 %v652
        %v744 = vpop.f32.mrb[0].mxu0
        %v745 = vadd.f32 %v635, %v744
        %v746 = vpop.f32.mrb[0].mxu0
        %v747 = vadd.f32 %v636, %v746
        %748 = vmatprep.mubr.f32.mxu0 0.0
        %749 = vmatmul.mubr.f32.gmra.mrb[0].mxu0 %v655
        %v750 = vpop.f32.mrb[0].mxu0
        %v751 = vadd.f32 %v637, %v750
        %v752 = vpop.f32.mrb[0].mxu0
        %v753 = vadd.f32 %v638, %v752
        %754 = vmatprep.mubr.f32.mxu0 0.0
        %755 = vmatmul.mubr.f32.gmra.mrb[0].mxu0 %v658
        %v756 = vpop.f32.mrb[0].mxu0
        %v757 = vadd.f32 %v639, %v756
        %v758 = vpop.f32.mrb[0].mxu0
        %v759 = vadd.f32 %v640, %v758
        %760 = vdwg.mxu0
        %761 = vrot.lane.b32.xlu0 0.0, 9
        %v762 = vpop.permute.xlu0 %761
        %v763 = vmul.f32 %v762, %v558
        %764 = vrot.lane.b32.xlu0 0.0, 8
        %v765 = vpop.permute.xlu0 %764
        %766 = vrot.lane.b32.xlu0 0.0, 7
        %v767 = vpop.permute.xlu0 %766
        %v768 = vmul.f32 %v767, %v567
        %769 = vrot.lane.b32.xlu0 0.0, 1
        %v770 = vpop.permute.xlu0 %769
        %v771 = vmul.f32 %v770, %v574
        %772 = vrot.lane.b32.xlu0 0.0, 127
        %v773 = vpop.permute.xlu0 %772
        %v774 = vmul.f32 %v773, %v581
        %775 = vrot.lane.b32.xlu0 0.0, 121
        %v776 = vpop.permute.xlu0 %775
        %v777 = vmul.f32 %v776, %v588
        %778 = vrot.lane.b32.xlu0 0.0, 120
        %v779 = vpop.permute.xlu0 %778
        %780 = vrot.lane.b32.xlu0 0.0, 119
        %v781 = vpop.permute.xlu0 %780
        %v782 = vmul.f32 %v781, %v597
        %v783 = vld [vmem:[%s4] sm:$0xff]
        %v784 = vld [vmem:[%s4 + $0x8] sm:$0xff]
        %v786 = vsel %vm641, %v783, 0
        %v789 = vsel %vm641, %v784, 0
        %791 = vmatprep.subr.mxu0 0.0
        %792 = vmatpush1.msra.mxu0 %v763
        %793 = vmatprep.subr.mxu0 0.0
        %794 = vmatpush1.msra.mxu0 %v765
        %795 = vmatprep.subr.mxu0 0.0
        %796 = vmatpush1.msra.mxu0 %v768
        %797 = vmatprep.subr.mxu0 0.0
        %798 = vmatpush1.msra.mxu0 %v771
        %799 = vmatprep.subr.mxu0 0.0
        %800 = vmatpush1.msra.mxu0 0.0
        %801 = vmatprep.subr.mxu0 0.0
        %802 = vmatpush1.msra.mxu0 %v774
        %803 = vmatprep.subr.mxu0 0.0
        %804 = vmatpush1.msra.mxu0 %v777
        %805 = vmatprep.subr.mxu0 0.0
        %806 = vmatpush1.msra.mxu0 %v779
        %807 = vmatprep.subr.mxu0 0.0
        %808 = vmatpush1.msra.mxu0 %v782
        %809 = vmatprep.subr.mxu0 0.0
        %810 = vmatpush1.msra.mxu0 0.0
        %811 = vmatprep.subr.mxu0 0.0
        %812 = vmatpush1.msra.mxu0 0.0
        %813 = vmatprep.subr.mxu0 0.0
        %814 = vmatpush1.msra.mxu0 0.0
        %815 = vmatprep.subr.mxu0 0.0
        %816 = vmatpush1.msra.mxu0 0.0
        %817 = vmatprep.subr.mxu0 0.0
        %818 = vmatpush1.msra.mxu0 0.0
        %819 = vmatprep.subr.mxu0 0.0
        %820 = vmatpush1.msra.mxu0 0.0
        %821 = vmatprep.subr.mxu0 0.0
        %822 = vmatpush1.msra.mxu0 0.0
        %823 = vmatprep.subr.mxu0 0.0
        %824 = vmatpush1.msra.mxu0 0.0
        %825 = vmatprep.subr.mxu0 0.0
        %826 = vmatpush1.msra.mxu0 0.0
        %827 = vmatprep.subr.mxu0 0.0
        %828 = vmatpush1.msra.mxu0 0.0
        %829 = vmatprep.subr.mxu0 0.0
        %830 = vmatpush1.msra.mxu0 0.0
        %831 = vmatprep.subr.mxu0 0.0
        %832 = vmatpush1.msra.mxu0 0.0
        %833 = vmatprep.subr.mxu0 0.0
        %834 = vmatpush1.msra.mxu0 0.0
        %835 = vmatprep.subr.mxu0 0.0
        %836 = vmatpush1.msra.mxu0 0.0
        %837 = vmatprep.subr.mxu0 0.0
        %838 = vmatpush1.msra.mxu0 0.0
        %839 = vmatprep.subr.mxu0 0.0
        %840 = vmatpush1.msra.mxu0 0.0
        %841 = vmatprep.subr.mxu0 0.0
        %842 = vmatpush1.msra.mxu0 0.0
        %843 = vmatprep.subr.mxu0 0.0
        %844 = vmatpush1.msra.mxu0 0.0
        %845 = vmatprep.subr.mxu0 0.0
        %846 = vmatpush1.msra.mxu0 0.0
        %847 = vmatprep.subr.mxu0 0.0
        %848 = vmatpush1.msra.mxu0 0.0
        %849 = vmatprep.subr.mxu0 0.0
        %850 = vmatpush1.msra.mxu0 0.0
        %851 = vmatprep.subr.mxu0 0.0
        %852 = vmatpush1.msra.mxu0 0.0
        %853 = vmatprep.subr.mxu0 0.0
        %854 = vmatpush1.msra.mxu0 0.0
        %855 = vmatprep.mubr.f32.mxu0 0.0
        %856 = vmatmul.mubr.f32.gmra.mrb[0].mxu0 %v786
        %v857 = vpop.f32.mrb[0].mxu0
        %v858 = vadd.f32 0.0, %v857
        %v859 = vpop.f32.mrb[0].mxu0
        %860 = vmatprep.mubr.f32.mxu0 0.0
        %861 = vmatmul.mubr.f32.gmra.mrb[0].mxu0 %v789
        %v862 = vpop.f32.mrb[0].mxu0
        %v863 = vadd.f32 0.0, %v862
        %v864 = vpop.f32.mrb[0].mxu0
        %865 = vdwg.mxu0
        %v866 = vadd.f32 %v727, %v858
        %v867 = vxor.u32 %v866, 2147483648
        %v868 = vmul.f32 %v867, 1.442695
        %v869 = vpow.pop %v868
        %v870 = vadd.f32 %v869, 1.0
        %v871 = vrcp.pop %v870
        %v872 = vmul.f32 1.0, %v871
        %v873 = vadd.f32 %v733, %v863
        %v874 = vxor.u32 %v873, 2147483648
        %v875 = vmul.f32 %v874, 1.442695
        %v876 = vpow.pop %v875
        %v877 = vadd.f32 %v876, 1.0
        %v878 = vrcp.pop %v877
        %v879 = vmul.f32 1.0, %v878
        %v880 = vmul.f32 %v872, 0.0
        %881 = vrot.lane.b32.xlu0 %v880, 9
        %v882 = vpop.permute.xlu0 %881
        %v883 = vmul.f32 %v882, %v558
        %884 = vrot.lane.b32.xlu0 %v880, 8
        %v885 = vpop.permute.xlu0 %884
        %886 = vrot.lane.b32.xlu0 %v880, 7
        %v887 = vpop.permute.xlu0 %886
        %v888 = vmul.f32 %v887, %v567
        %889 = vrot.lane.b32.xlu0 %v880, 1
        %v890 = vpop.permute.xlu0 %889
        %v891 = vmul.f32 %v890, %v574
        %892 = vrot.lane.b32.xlu0 %v880, 127
        %v893 = vpop.permute.xlu0 %892
        %v894 = vmul.f32 %v893, %v581
        %895 = vrot.lane.b32.xlu0 %v880, 121
        %v896 = vpop.permute.xlu0 %895
        %v897 = vmul.f32 %v896, %v588
        %898 = vrot.lane.b32.xlu0 %v880, 120
        %v899 = vpop.permute.xlu0 %898
        %900 = vrot.lane.b32.xlu0 %v880, 119
        %v901 = vpop.permute.xlu0 %900
        %v902 = vmul.f32 %v901, %v597
        %v903 = vld [vmem:[#allocation5] sm:$0xff]
        %v905 = vsel %vm641, %v903, 0
        %907 = vmatprep.subr.mxu0 0.0
        %908 = vmatpush1.msra.mxu0 %v883
        %909 = vmatprep.subr.mxu0 0.0
        %910 = vmatpush1.msra.mxu0 %v885
        %911 = vmatprep.subr.mxu0 0.0
        %912 = vmatpush1.msra.mxu0 %v888
        %913 = vmatprep.subr.mxu0 0.0
        %914 = vmatpush1.msra.mxu0 %v891
        %915 = vmatprep.subr.mxu0 0.0
        %916 = vmatpush1.msra.mxu0 %v880
        %917 = vmatprep.subr.mxu0 0.0
        %918 = vmatpush1.msra.mxu0 %v894
        %919 = vmatprep.subr.mxu0 0.0
        %920 = vmatpush1.msra.mxu0 %v897
        %921 = vmatprep.subr.mxu0 0.0
        %922 = vmatpush1.msra.mxu0 %v899
        %923 = vmatprep.subr.mxu0 0.0
        %924 = vmatpush1.msra.mxu0 %v902
        %925 = vmatprep.subr.mxu0 0.0
        %926 = vmatpush1.msra.mxu0 0.0
        %927 = vmatprep.subr.mxu0 0.0
        %928 = vmatpush1.msra.mxu0 0.0
        %929 = vmatprep.subr.mxu0 0.0
        %930 = vmatpush1.msra.mxu0 0.0
        %931 = vmatprep.subr.mxu0 0.0
        %932 = vmatpush1.msra.mxu0 0.0
        %933 = vmatprep.subr.mxu0 0.0
        %934 = vmatpush1.msra.mxu0 0.0
        %935 = vmatprep.subr.mxu0 0.0
        %936 = vmatpush1.msra.mxu0 0.0
        %937 = vmatprep.subr.mxu0 0.0
        %938 = vmatpush1.msra.mxu0 0.0
        %939 = vmatprep.subr.mxu0 0.0
        %940 = vmatpush1.msra.mxu0 0.0
        %941 = vmatprep.subr.mxu0 0.0
        %942 = vmatpush1.msra.mxu0 0.0
        %943 = vmatprep.subr.mxu0 0.0
        %944 = vmatpush1.msra.mxu0 0.0
        %945 = vmatprep.subr.mxu0 0.0
        %946 = vmatpush1.msra.mxu0 0.0
        %947 = vmatprep.subr.mxu0 0.0
        %948 = vmatpush1.msra.mxu0 0.0
        %949 = vmatprep.subr.mxu0 0.0
        %950 = vmatpush1.msra.mxu0 0.0
        %951 = vmatprep.subr.mxu0 0.0
        %952 = vmatpush1.msra.mxu0 0.0
        %953 = vmatprep.subr.mxu0 0.0
        %954 = vmatpush1.msra.mxu0 0.0
        %955 = vmatprep.subr.mxu0 0.0
        %956 = vmatpush1.msra.mxu0 0.0
        %957 = vmatprep.subr.mxu0 0.0
        %958 = vmatpush1.msra.mxu0 0.0
        %959 = vmatprep.subr.mxu0 0.0
        %960 = vmatpush1.msra.mxu0 0.0
        %961 = vmatprep.subr.mxu0 0.0
        %962 = vmatpush1.msra.mxu0 0.0
        %963 = vmatprep.subr.mxu0 0.0
        %964 = vmatpush1.msra.mxu0 0.0
        %965 = vmatprep.subr.mxu0 0.0
        %966 = vmatpush1.msra.mxu0 0.0
        %967 = vmatprep.subr.mxu0 0.0
        %968 = vmatpush1.msra.mxu0 0.0
        %969 = vmatprep.subr.mxu0 0.0
        %970 = vmatpush1.msra.mxu0 0.0
        %971 = vmatprep.mubr.f32.mxu0 0.0
        %972 = vmatmul.mubr.f32.gmra.mrb[0].mxu0 %v905
        %v973 = vpop.f32.mrb[0].mxu0
        %v974 = vadd.f32 0.0, %v973
        %v975 = vpop.f32.mrb[0].mxu0
        %976 = vdwg.mxu0
        %v977 = vadd.f32 %v739, %v974
        %v978 = vtanh.pop %v977
        %v979 = vsub.f32 1.0, %v879
        %v980 = vmul.f32 %v979, 0.0
        %v981 = vmul.f32 %v978, %v879
        %v982 = vadd.f32 %v980, %v981
        %v983 = vlaneseq
        %v984 = vshrl.u32 %v983, 7
        %v985 = vsub.s32 1, %v984
        %v986 = vrot.slane %v551, %v985
        %v987 = vmul.f32 %v982, %v986
        %988 = vrot.lane.b32.xlu0 %v987, 9
        %v989 = vpop.permute.xlu0 %988
        %v990 = vmul.f32 %v989, %v558
        %991 = vrot.lane.b32.xlu0 %v987, 8
        %v992 = vpop.permute.xlu0 %991
        %993 = vrot.lane.b32.xlu0 %v987, 7
        %v994 = vpop.permute.xlu0 %993
        %v995 = vmul.f32 %v994, %v567
        %996 = vrot.lane.b32.xlu0 %v987, 1
        %v997 = vpop.permute.xlu0 %996
        %v998 = vmul.f32 %v997, %v574
        %999 = vrot.lane.b32.xlu0 %v987, 127
        %v1000 = vpop.permute.xlu0 %999
        %v1001 = vmul.f32 %v1000, %v581
        %1002 = vrot.lane.b32.xlu0 %v987, 121
        %v1003 = vpop.permute.xlu0 %1002
        %v1004 = vmul.f32 %v1003, %v588
        %1005 = vrot.lane.b32.xlu0 %v987, 120
        %v1006 = vpop.permute.xlu0 %1005
        %1007 = vrot.lane.b32.xlu0 %v987, 119
        %v1008 = vpop.permute.xlu0 %1007
        %v1009 = vmul.f32 %v1008, %v597
        %1010 = vmatprep.subr.mxu0 0.0
        %1011 = vmatpush1.msra.mxu0 %v990
        %1012 = vmatprep.subr.mxu0 0.0
        %1013 = vmatpush1.msra.mxu0 %v992
        %1014 = vmatprep.subr.mxu0 0.0
        %1015 = vmatpush1.msra.mxu0 %v995
        %1016 = vmatprep.subr.mxu0 0.0
        %1017 = vmatpush1.msra.mxu0 %v998
        %1018 = vmatprep.subr.mxu0 0.0
        %1019 = vmatpush1.msra.mxu0 %v987
        %1020 = vmatprep.subr.mxu0 0.0
        %1021 = vmatpush1.msra.mxu0 %v1001
        %1022 = vmatprep.subr.mxu0 0.0
        %1023 = vmatpush1.msra.mxu0 %v1004
        %1024 = vmatprep.subr.mxu0 0.0
        %1025 = vmatpush1.msra.mxu0 %v1006
        %1026 = vmatprep.subr.mxu0 0.0
        %1027 = vmatpush1.msra.mxu0 %v1009
        %1028 = vmatprep.subr.mxu0 0.0
        %1029 = vmatpush1.msra.mxu0 0.0
        %1030 = vmatprep.subr.mxu0 0.0
        %1031 = vmatpush1.msra.mxu0 0.0
        %1032 = vmatprep.subr.mxu0 0.0
        %1033 = vmatpush1.msra.mxu0 0.0
        %1034 = vmatprep.subr.mxu0 0.0
        %1035 = vmatpush1.msra.mxu0 0.0
        %1036 = vmatprep.subr.mxu0 0.0
        %1037 = vmatpush1.msra.mxu0 0.0
        %1038 = vmatprep.subr.mxu0 0.0
        %1039 = vmatpush1.msra.mxu0 0.0
        %1040 = vmatprep.subr.mxu0 0.0
        %1041 = vmatpush1.msra.mxu0 0.0
        %1042 = vmatprep.subr.mxu0 0.0
        %1043 = vmatpush1.msra.mxu0 0.0
        %1044 = vmatprep.subr.mxu0 0.0
        %1045 = vmatpush1.msra.mxu0 0.0
        %1046 = vmatprep.subr.mxu0 0.0
        %1047 = vmatpush1.msra.mxu0 0.0
        %1048 = vmatprep.subr.mxu0 0.0
        %1049 = vmatpush1.msra.mxu0 0.0
        %1050 = vmatprep.subr.mxu0 0.0
        %1051 = vmatpush1.msra.mxu0 0.0
        %1052 = vmatprep.subr.mxu0 0.0
        %1053 = vmatpush1.msra.mxu0 0.0
        %1054 = vmatprep.subr.mxu0 0.0
        %1055 = vmatpush1.msra.mxu0 0.0
        %1056 = vmatprep.subr.mxu0 0.0
        %1057 = vmatpush1.msra.mxu0 0.0
        %1058 = vmatprep.subr.mxu0 0.0
        %1059 = vmatpush1.msra.mxu0 0.0
        %1060 = vmatprep.subr.mxu0 0.0
        %1061 = vmatpush1.msra.mxu0 0.0
        %1062 = vmatprep.subr.mxu0 0.0
        %1063 = vmatpush1.msra.mxu0 0.0
        %1064 = vmatprep.subr.mxu0 0.0
        %1065 = vmatpush1.msra.mxu0 0.0
        %1066 = vmatprep.subr.mxu0 0.0
        %1067 = vmatpush1.msra.mxu0 0.0
        %1068 = vmatprep.subr.mxu0 0.0
        %1069 = vmatpush1.msra.mxu0 0.0
        %1070 = vmatprep.subr.mxu0 0.0
        %1071 = vmatpush1.msra.mxu0 0.0
        %1072 = vmatprep.subr.mxu0 0.0
        %1073 = vmatpush1.msra.mxu0 0.0
        %1074 = vmatprep.mubr.f32.mxu0 0.0
        %1075 = vmatmul.mubr.f32.gmra.mrb[0].mxu0 %v786
        %v1076 = vpop.f32.mrb[0].mxu0
        %v1077 = vadd.f32 0.0, %v1076
        %v1078 = vpop.f32.mrb[0].mxu0
        %1079 = vmatprep.mubr.f32.mxu0 0.0
        %1080 = vmatmul.mubr.f32.gmra.mrb[0].mxu0 %v789
        %v1081 = vpop.f32.mrb[0].mxu0
        %v1082 = vadd.f32 0.0, %v1081
        %v1083 = vpop.f32.mrb[0].mxu0
        %1084 = vdwg.mxu0
        %v1085 = vadd.f32 %v729, %v1077
        %v1086 = vxor.u32 %v1085, 2147483648
        %v1087 = vmul.f32 %v1086, 1.442695
        %v1088 = vpow.pop %v1087
        %v1089 = vadd.f32 %v1088, 1.0
        %v1090 = vrcp.pop %v1089
        %v1091 = vmul.f32 1.0, %v1090
        %v1092 = vadd.f32 %v735, %v1082
        %v1093 = vxor.u32 %v1092, 2147483648
        %v1094 = vmul.f32 %v1093, 1.442695
        %v1095 = vpow.pop %v1094
        %v1096 = vadd.f32 %v1095, 1.0
        %v1097 = vrcp.pop %v1096
        %v1098 = vmul.f32 1.0, %v1097
        %v1099 = vmul.f32 %v987, %v1091
        %1100 = vrot.lane.b32.xlu0 %v1099, 9
        %v1101 = vpop.permute.xlu0 %1100
        %v1102 = vmul.f32 %v1101, %v558
        %1103 = vrot.lane.b32.xlu0 %v1099, 8
        %v1104 = vpop.permute.xlu0 %1103
        %1105 = vrot.lane.b32.xlu0 %v1099, 7
        %v1106 = vpop.permute.xlu0 %1105
        %v1107 = vmul.f32 %v1106, %v567
        %1108 = vrot.lane.b32.xlu0 %v1099, 1
        %v1109 = vpop.permute.xlu0 %1108
        %v1110 = vmul.f32 %v1109, %v574
        %1111 = vrot.lane.b32.xlu0 %v1099, 127
        %v1112 = vpop.permute.xlu0 %1111
        %v1113 = vmul.f32 %v1112, %v581
        %1114 = vrot.lane.b32.xlu0 %v1099, 121
        %v1115 = vpop.permute.xlu0 %1114
        %v1116 = vmul.f32 %v1115, %v588
        %1117 = vrot.lane.b32.xlu0 %v1099, 120
        %v1118 = vpop.permute.xlu0 %1117
        %1119 = vrot.lane.b32.xlu0 %v1099, 119
        %v1120 = vpop.permute.xlu0 %1119
        %v1121 = vmul.f32 %v1120, %v597
        %1122 = vmatprep.subr.mxu0 0.0
        %1123 = vmatpush1.msra.mxu0 %v1102
        %1124 = vmatprep.subr.mxu0 0.0
        %1125 = vmatpush1.msra.mxu0 %v1104
        %1126 = vmatprep.subr.mxu0 0.0
        %1127 = vmatpush1.msra.mxu0 %v1107
        %1128 = vmatprep.subr.mxu0 0.0
        %1129 = vmatpush1.msra.mxu0 %v1110
        %1130 = vmatprep.subr.mxu0 0.0
        %1131 = vmatpush1.msra.mxu0 %v1099
        %1132 = vmatprep.subr.mxu0 0.0
        %1133 = vmatpush1.msra.mxu0 %v1113
        %1134 = vmatprep.subr.mxu0 0.0
        %1135 = vmatpush1.msra.mxu0 %v1116
        %1136 = vmatprep.subr.mxu0 0.0
        %1137 = vmatpush1.msra.mxu0 %v1118
        %1138 = vmatprep.subr.mxu0 0.0
        %1139 = vmatpush1.msra.mxu0 %v1121
        %1140 = vmatprep.subr.mxu0 0.0
        %1141 = vmatpush1.msra.mxu0 0.0
        %1142 = vmatprep.subr.mxu0 0.0
        %1143 = vmatpush1.msra.mxu0 0.0
        %1144 = vmatprep.subr.mxu0 0.0
        %1145 = vmatpush1.msra.mxu0 0.0
        %1146 = vmatprep.subr.mxu0 0.0
        %1147 = vmatpush1.msra.mxu0 0.0
        %1148 = vmatprep.subr.mxu0 0.0
        %1149 = vmatpush1.msra.mxu0 0.0
        %1150 = vmatprep.subr.mxu0 0.0
        %1151 = vmatpush1.msra.mxu0 0.0
        %1152 = vmatprep.subr.mxu0 0.0
        %1153 = vmatpush1.msra.mxu0 0.0
        %1154 = vmatprep.subr.mxu0 0.0
        %1155 = vmatpush1.msra.mxu0 0.0
        %1156 = vmatprep.subr.mxu0 0.0
        %1157 = vmatpush1.msra.mxu0 0.0
        %1158 = vmatprep.subr.mxu0 0.0
        %1159 = vmatpush1.msra.mxu0 0.0
        %1160 = vmatprep.subr.mxu0 0.0
        %1161 = vmatpush1.msra.mxu0 0.0
        %1162 = vmatprep.subr.mxu0 0.0
        %1163 = vmatpush1.msra.mxu0 0.0
        %1164 = vmatprep.subr.mxu0 0.0
        %1165 = vmatpush1.msra.mxu0 0.0
        %1166 = vmatprep.subr.mxu0 0.0
        %1167 = vmatpush1.msra.mxu0 0.0
        %1168 = vmatprep.subr.mxu0 0.0
        %1169 = vmatpush1.msra.mxu0 0.0
        %1170 = vmatprep.subr.mxu0 0.0
        %1171 = vmatpush1.msra.mxu0 0.0
        %1172 = vmatprep.subr.mxu0 0.0
        %1173 = vmatpush1.msra.mxu0 0.0
        %1174 = vmatprep.subr.mxu0 0.0
        %1175 = vmatpush1.msra.mxu0 0.0
        %1176 = vmatprep.subr.mxu0 0.0
        %1177 = vmatpush1.msra.mxu0 0.0
        %1178 = vmatprep.subr.mxu0 0.0
        %1179 = vmatpush1.msra.mxu0 0.0
        %1180 = vmatprep.subr.mxu0 0.0
        %1181 = vmatpush1.msra.mxu0 0.0
        %1182 = vmatprep.subr.mxu0 0.0
        %1183 = vmatpush1.msra.mxu0 0.0
        %1184 = vmatprep.subr.mxu0 0.0
        %1185 = vmatpush1.msra.mxu0 0.0
        %1186 = vmatprep.mubr.f32.mxu0 0.0
        %1187 = vmatmul.mubr.f32.gmra.mrb[0].mxu0 %v905
        %v1188 = vpop.f32.mrb[0].mxu0
        %v1189 = vadd.f32 0.0, %v1188
        %v1190 = vpop.f32.mrb[0].mxu0
        %1191 = vdwg.mxu0
        %v1192 = vadd.f32 %v741, %v1189
        %v1193 = vtanh.pop %v1192
        %v1194 = vsub.f32 1.0, %v1098
        %v1195 = vmul.f32 %v987, %v1194
        %v1196 = vmul.f32 %v1193, %v1098
        %v1197 = vadd.f32 %v1195, %v1196
        %v1198 = vmul.f32 %v1197, %v986
        %1199 = vrot.lane.b32.xlu0 %v1198, 9
        %v1200 = vpop.permute.xlu0 %1199
        %v1201 = vmul.f32 %v1200, %v558
        %1202 = vrot.lane.b32.xlu0 %v1198, 8
        %v1203 = vpop.permute.xlu0 %1202
        %1204 = vrot.lane.b32.xlu0 %v1198, 7
        %v1205 = vpop.permute.xlu0 %1204
        %v1206 = vmul.f32 %v1205, %v567
        %1207 = vrot.lane.b32.xlu0 %v1198, 1
        %v1208 = vpop.permute.xlu0 %1207
        %v1209 = vmul.f32 %v1208, %v574
        %1210 = vrot.lane.b32.xlu0 %v1198, 127
        %v1211 = vpop.permute.xlu0 %1210
        %v1212 = vmul.f32 %v1211, %v581
        %1213 = vrot.lane.b32.xlu0 %v1198, 121
        %v1214 = vpop.permute.xlu0 %1213
        %v1215 = vmul.f32 %v1214, %v588
        %1216 = vrot.lane.b32.xlu0 %v1198, 120
        %v1217 = vpop.permute.xlu0 %1216
        %1218 = vrot.lane.b32.xlu0 %v1198, 119
        %v1219 = vpop.permute.xlu0 %1218
        %v1220 = vmul.f32 %v1219, %v597
        %v1221 = vld [vmem:[#allocation7] sm:$0xff]
        %v1222 = vld [vmem:[#allocation7 + $0x8] sm:$0xff]
        %v1224 = vsel %vm641, %v1221, 0
        %v1227 = vsel %vm641, %v1222, 0
        %1229 = vmatprep.subr.mxu0 0.0
        %1230 = vmatpush1.msra.mxu0 %v1201
        %1231 = vmatprep.subr.mxu0 0.0
        %1232 = vmatpush1.msra.mxu0 %v1203
        %1233 = vmatprep.subr.mxu0 0.0
        %1234 = vmatpush1.msra.mxu0 %v1206
        %1235 = vmatprep.subr.mxu0 0.0
        %1236 = vmatpush1.msra.mxu0 %v1209
        %1237 = vmatprep.subr.mxu0 0.0
        %1238 = vmatpush1.msra.mxu0 %v1198
        %1239 = vmatprep.subr.mxu0 0.0
        %1240 = vmatpush1.msra.mxu0 %v1212
        %1241 = vmatprep.subr.mxu0 0.0
        %1242 = vmatpush1.msra.mxu0 %v1215
        %1243 = vmatprep.subr.mxu0 0.0
        %1244 = vmatpush1.msra.mxu0 %v1217
        %1245 = vmatprep.subr.mxu0 0.0
        %1246 = vmatpush1.msra.mxu0 %v1220
        %1247 = vmatprep.subr.mxu0 0.0
        %1248 = vmatpush1.msra.mxu0 0.0
        %1249 = vmatprep.subr.mxu0 0.0
        %1250 = vmatpush1.msra.mxu0 0.0
        %1251 = vmatprep.subr.mxu0 0.0
        %1252 = vmatpush1.msra.mxu0 0.0
        %1253 = vmatprep.subr.mxu0 0.0
        %1254 = vmatpush1.msra.mxu0 0.0
        %1255 = vmatprep.subr.mxu0 0.0
        %1256 = vmatpush1.msra.mxu0 0.0
        %1257 = vmatprep.subr.mxu0 0.0
        %1258 = vmatpush1.msra.mxu0 0.0
        %1259 = vmatprep.subr.mxu0 0.0
        %1260 = vmatpush1.msra.mxu0 0.0
        %1261 = vmatprep.subr.mxu0 0.0
        %1262 = vmatpush1.msra.mxu0 0.0
        %1263 = vmatprep.subr.mxu0 0.0
        %1264 = vmatpush1.msra.mxu0 0.0
        %1265 = vmatprep.subr.mxu0 0.0
        %1266 = vmatpush1.msra.mxu0 0.0
        %1267 = vmatprep.subr.mxu0 0.0
        %1268 = vmatpush1.msra.mxu0 0.0
        %1269 = vmatprep.subr.mxu0 0.0
        %1270 = vmatpush1.msra.mxu0 0.0
        %1271 = vmatprep.subr.mxu0 0.0
        %1272 = vmatpush1.msra.mxu0 0.0
        %1273 = vmatprep.subr.mxu0 0.0
        %1274 = vmatpush1.msra.mxu0 0.0
        %1275 = vmatprep.subr.mxu0 0.0
        %1276 = vmatpush1.msra.mxu0 0.0
        %1277 = vmatprep.subr.mxu0 0.0
        %1278 = vmatpush1.msra.mxu0 0.0
        %1279 = vmatprep.subr.mxu0 0.0
        %1280 = vmatpush1.msra.mxu0 0.0
        %1281 = vmatprep.subr.mxu0 0.0
        %1282 = vmatpush1.msra.mxu0 0.0
        %1283 = vmatprep.subr.mxu0 0.0
        %1284 = vmatpush1.msra.mxu0 0.0
        %1285 = vmatprep.subr.mxu0 0.0
        %1286 = vmatpush1.msra.mxu0 0.0
        %1287 = vmatprep.subr.mxu0 0.0
        %1288 = vmatpush1.msra.mxu0 0.0
        %1289 = vmatprep.subr.mxu0 0.0
        %1290 = vmatpush1.msra.mxu0 0.0
        %1291 = vmatprep.subr.mxu0 0.0
        %1292 = vmatpush1.msra.mxu0 0.0
        %1293 = vmatprep.mubr.f32.mxu0 0.0
        %1294 = vmatmul.mubr.f32.gmra.mrb[0].mxu0 %v1224
        %v1295 = vpop.f32.mrb[0].mxu0
        %v1296 = vadd.f32 0.0, %v1295
        %v1297 = vpop.f32.mrb[0].mxu0
        %1298 = vmatprep.mubr.f32.mxu0 0.0
        %1299 = vmatmul.mubr.f32.gmra.mrb[0].mxu0 %v1227
        %v1300 = vpop.f32.mrb[0].mxu0
        %v1301 = vadd.f32 0.0, %v1300
        %v1302 = vpop.f32.mrb[0].mxu0
        %1303 = vdwg.mxu0
        %v1304 = vadd.f32 %v747, %v1296
        %v1305 = vxor.u32 %v1304, 2147483648
        %v1306 = vmul.f32 %v1305, 1.442695
        %v1307 = vpow.pop %v1306
        %v1308 = vadd.f32 %v1307, 1.0
        %v1309 = vrcp.pop %v1308
        %v1310 = vmul.f32 1.0, %v1309
        %v1311 = vadd.f32 %v753, %v1301
        %v1312 = vxor.u32 %v1311, 2147483648
        %v1313 = vmul.f32 %v1312, 1.442695
        %v1314 = vpow.pop %v1313
        %v1315 = vadd.f32 %v1314, 1.0
        %v1316 = vrcp.pop %v1315
        %v1317 = vmul.f32 1.0, %v1316
        %v1318 = vmul.f32 %v1198, %v1310
        %1319 = vrot.lane.b32.xlu0 %v1318, 9
        %v1320 = vpop.permute.xlu0 %1319
        %v1321 = vmul.f32 %v1320, %v558
        %1322 = vrot.lane.b32.xlu0 %v1318, 8
        %v1323 = vpop.permute.xlu0 %1322
        %1324 = vrot.lane.b32.xlu0 %v1318, 7
        %v1325 = vpop.permute.xlu0 %1324
        %v1326 = vmul.f32 %v1325, %v567
        %1327 = vrot.lane.b32.xlu0 %v1318, 1
        %v1328 = vpop.permute.xlu0 %1327
        %v1329 = vmul.f32 %v1328, %v574
        %1330 = vrot.lane.b32.xlu0 %v1318, 127
        %v1331 = vpop.permute.xlu0 %1330
        %v1332 = vmul.f32 %v1331, %v581
        %1333 = vrot.lane.b32.xlu0 %v1318, 121
        %v1334 = vpop.permute.xlu0 %1333
        %v1335 = vmul.f32 %v1334, %v588
        %1336 = vrot.lane.b32.xlu0 %v1318, 120
        %v1337 = vpop.permute.xlu0 %1336
        %1338 = vrot.lane.b32.xlu0 %v1318, 119
        %v1339 = vpop.permute.xlu0 %1338
        %v1340 = vmul.f32 %v1339, %v597
        %v1341 = vld [vmem:[#allocation8] sm:$0xff]
        %v1343 = vsel %vm641, %v1341, 0
        %1345 = vmatprep.subr.mxu0 0.0
        %1346 = vmatpush1.msra.mxu0 %v1321
        %1347 = vmatprep.subr.mxu0 0.0
        %1348 = vmatpush1.msra.mxu0 %v1323
        %1349 = vmatprep.subr.mxu0 0.0
        %1350 = vmatpush1.msra.mxu0 %v1326
        %1351 = vmatprep.subr.mxu0 0.0
        %1352 = vmatpush1.msra.mxu0 %v1329
        %1353 = vmatprep.subr.mxu0 0.0
        %1354 = vmatpush1.msra.mxu0 %v1318
        %1355 = vmatprep.subr.mxu0 0.0
        %1356 = vmatpush1.msra.mxu0 %v1332
        %1357 = vmatprep.subr.mxu0 0.0
        %1358 = vmatpush1.msra.mxu0 %v1335
        %1359 = vmatprep.subr.mxu0 0.0
        %1360 = vmatpush1.msra.mxu0 %v1337
        %1361 = vmatprep.subr.mxu0 0.0
        %1362 = vmatpush1.msra.mxu0 %v1340
        %1363 = vmatprep.subr.mxu0 0.0
        %1364 = vmatpush1.msra.mxu0 0.0
        %1365 = vmatprep.subr.mxu0 0.0
        %1366 = vmatpush1.msra.mxu0 0.0
        %1367 = vmatprep.subr.mxu0 0.0
        %1368 = vmatpush1.msra.mxu0 0.0
        %1369 = vmatprep.subr.mxu0 0.0
        %1370 = vmatpush1.msra.mxu0 0.0
        %1371 = vmatprep.subr.mxu0 0.0
        %1372 = vmatpush1.msra.mxu0 0.0
        %1373 = vmatprep.subr.mxu0 0.0
        %1374 = vmatpush1.msra.mxu0 0.0
        %1375 = vmatprep.subr.mxu0 0.0
        %1376 = vmatpush1.msra.mxu0 0.0
        %1377 = vmatprep.subr.mxu0 0.0
        %1378 = vmatpush1.msra.mxu0 0.0
        %1379 = vmatprep.subr.mxu0 0.0
        %1380 = vmatpush1.msra.mxu0 0.0
        %1381 = vmatprep.subr.mxu0 0.0
        %1382 = vmatpush1.msra.mxu0 0.0
        %1383 = vmatprep.subr.mxu0 0.0
        %1384 = vmatpush1.msra.mxu0 0.0
        %1385 = vmatprep.subr.mxu0 0.0
        %1386 = vmatpush1.msra.mxu0 0.0
        %1387 = vmatprep.subr.mxu0 0.0
        %1388 = vmatpush1.msra.mxu0 0.0
        %1389 = vmatprep.subr.mxu0 0.0
        %1390 = vmatpush1.msra.mxu0 0.0
        %1391 = vmatprep.subr.mxu0 0.0
        %1392 = vmatpush1.msra.mxu0 0.0
        %1393 = vmatprep.subr.mxu0 0.0
        %1394 = vmatpush1.msra.mxu0 0.0
        %1395 = vmatprep.subr.mxu0 0.0
        %1396 = vmatpush1.msra.mxu0 0.0
        %1397 = vmatprep.subr.mxu0 0.0
        %1398 = vmatpush1.msra.mxu0 0.0
        %1399 = vmatprep.subr.mxu0 0.0
        %1400 = vmatpush1.msra.mxu0 0.0
        %1401 = vmatprep.subr.mxu0 0.0
        %1402 = vmatpush1.msra.mxu0 0.0
        %1403 = vmatprep.subr.mxu0 0.0
        %1404 = vmatpush1.msra.mxu0 0.0
        %1405 = vmatprep.subr.mxu0 0.0
        %1406 = vmatpush1.msra.mxu0 0.0
        %1407 = vmatprep.subr.mxu0 0.0
        %1408 = vmatpush1.msra.mxu0 0.0
        %1409 = vmatprep.mubr.f32.mxu0 0.0
        %1410 = vmatmul.mubr.f32.gmra.mrb[0].mxu0 %v1343
        %v1411 = vpop.f32.mrb[0].mxu0
        %v1412 = vadd.f32 0.0, %v1411
        %v1413 = vpop.f32.mrb[0].mxu0
        %1414 = vdwg.mxu0
        %v1415 = vadd.f32 %v759, %v1412
        %v1416 = vtanh.pop %v1415
        %v1417 = vsub.f32 1.0, %v1317
        %v1418 = vmul.f32 %v1198, %v1417
        %v1419 = vmul.f32 %v1416, %v1317
        %v1420 = vadd.f32 %v1418, %v1419
        %v1421 = vmul.f32 %v1420, %v986
        %1422 = vrot.lane.b32.xlu0 %v1421, 9
        %v1423 = vpop.permute.xlu0 %1422
        %v1424 = vmul.f32 %v1423, %v558
        %1425 = vrot.lane.b32.xlu0 %v1421, 8
        %v1426 = vpop.permute.xlu0 %1425
        %1427 = vrot.lane.b32.xlu0 %v1421, 7
        %v1428 = vpop.permute.xlu0 %1427
        %v1429 = vmul.f32 %v1428, %v567
        %1430 = vrot.lane.b32.xlu0 %v1421, 1
        %v1431 = vpop.permute.xlu0 %1430
        %v1432 = vmul.f32 %v1431, %v574
        %1433 = vrot.lane.b32.xlu0 %v1421, 127
        %v1434 = vpop.permute.xlu0 %1433
        %v1435 = vmul.f32 %v1434, %v581
        %1436 = vrot.lane.b32.xlu0 %v1421, 121
        %v1437 = vpop.permute.xlu0 %1436
        %v1438 = vmul.f32 %v1437, %v588
        %1439 = vrot.lane.b32.xlu0 %v1421, 120
        %v1440 = vpop.permute.xlu0 %1439
        %1441 = vrot.lane.b32.xlu0 %v1421, 119
        %v1442 = vpop.permute.xlu0 %1441
        %v1443 = vmul.f32 %v1442, %v597
        %1444 = vmatprep.subr.mxu0 0.0
        %1445 = vmatpush1.msra.mxu0 %v1424
        %1446 = vmatprep.subr.mxu0 0.0
        %1447 = vmatpush1.msra.mxu0 %v1426
        %1448 = vmatprep.subr.mxu0 0.0
        %1449 = vmatpush1.msra.mxu0 %v1429
        %1450 = vmatprep.subr.mxu0 0.0
        %1451 = vmatpush1.msra.mxu0 %v1432
        %1452 = vmatprep.subr.mxu0 0.0
        %1453 = vmatpush1.msra.mxu0 %v1421
        %1454 = vmatprep.subr.mxu0 0.0
        %1455 = vmatpush1.msra.mxu0 %v1435
        %1456 = vmatprep.subr.mxu0 0.0
        %1457 = vmatpush1.msra.mxu0 %v1438
        %1458 = vmatprep.subr.mxu0 0.0
        %1459 = vmatpush1.msra.mxu0 %v1440
        %1460 = vmatprep.subr.mxu0 0.0
        %1461 = vmatpush1.msra.mxu0 %v1443
        %1462 = vmatprep.subr.mxu0 0.0
        %1463 = vmatpush1.msra.mxu0 0.0
        %1464 = vmatprep.subr.mxu0 0.0
        %1465 = vmatpush1.msra.mxu0 0.0
        %1466 = vmatprep.subr.mxu0 0.0
        %1467 = vmatpush1.msra.mxu0 0.0
        %1468 = vmatprep.subr.mxu0 0.0
        %1469 = vmatpush1.msra.mxu0 0.0
        %1470 = vmatprep.subr.mxu0 0.0
        %1471 = vmatpush1.msra.mxu0 0.0
        %1472 = vmatprep.subr.mxu0 0.0
        %1473 = vmatpush1.msra.mxu0 0.0
        %1474 = vmatprep.subr.mxu0 0.0
        %1475 = vmatpush1.msra.mxu0 0.0
        %1476 = vmatprep.subr.mxu0 0.0
        %1477 = vmatpush1.msra.mxu0 0.0
        %1478 = vmatprep.subr.mxu0 0.0
        %1479 = vmatpush1.msra.mxu0 0.0
        %1480 = vmatprep.subr.mxu0 0.0
        %1481 = vmatpush1.msra.mxu0 0.0
        %1482 = vmatprep.subr.mxu0 0.0
        %1483 = vmatpush1.msra.mxu0 0.0
        %1484 = vmatprep.subr.mxu0 0.0
        %1485 = vmatpush1.msra.mxu0 0.0
        %1486 = vmatprep.subr.mxu0 0.0
        %1487 = vmatpush1.msra.mxu0 0.0
        %1488 = vmatprep.subr.mxu0 0.0
        %1489 = vmatpush1.msra.mxu0 0.0
        %1490 = vmatprep.subr.mxu0 0.0
        %1491 = vmatpush1.msra.mxu0 0.0
        %1492 = vmatprep.subr.mxu0 0.0
        %1493 = vmatpush1.msra.mxu0 0.0
        %1494 = vmatprep.subr.mxu0 0.0
        %1495 = vmatpush1.msra.mxu0 0.0
        %1496 = vmatprep.subr.mxu0 0.0
        %1497 = vmatpush1.msra.mxu0 0.0
        %1498 = vmatprep.subr.mxu0 0.0
        %1499 = vmatpush1.msra.mxu0 0.0
        %1500 = vmatprep.subr.mxu0 0.0
        %1501 = vmatpush1.msra.mxu0 0.0
        %1502 = vmatprep.subr.mxu0 0.0
        %1503 = vmatpush1.msra.mxu0 0.0
        %1504 = vmatprep.subr.mxu0 0.0
        %1505 = vmatpush1.msra.mxu0 0.0
        %1506 = vmatprep.subr.mxu0 0.0
        %1507 = vmatpush1.msra.mxu0 0.0
        %1508 = vmatprep.mubr.f32.mxu0 0.0
        %1509 = vmatmul.mubr.f32.gmra.mrb[0].mxu0 %v1224
        %v1510 = vpop.f32.mrb[0].mxu0
        %v1511 = vadd.f32 0.0, %v1510
        %v1512 = vpop.f32.mrb[0].mxu0
        %1513 = vmatprep.mubr.f32.mxu0 0.0
        %1514 = vmatmul.mubr.f32.gmra.mrb[0].mxu0 %v1227
        %v1515 = vpop.f32.mrb[0].mxu0
        %v1516 = vadd.f32 0.0, %v1515
        %v1517 = vpop.f32.mrb[0].mxu0
        %1518 = vdwg.mxu0
        %v1519 = vadd.f32 %v745, %v1511
        %v1520 = vxor.u32 %v1519, 2147483648
        %v1521 = vmul.f32 %v1520, 1.442695
        %v1522 = vpow.pop %v1521
        %v1523 = vadd.f32 %v1522, 1.0
        %v1524 = vrcp.pop %v1523
        %v1525 = vmul.f32 1.0, %v1524
        %v1526 = vadd.f32 %v751, %v1516
        %v1527 = vxor.u32 %v1526, 2147483648
        %v1528 = vmul.f32 %v1527, 1.442695
        %v1529 = vpow.pop %v1528
        %v1530 = vadd.f32 %v1529, 1.0
        %v1531 = vrcp.pop %v1530
        %v1532 = vmul.f32 1.0, %v1531
        %v1533 = vmul.f32 %v1421, %v1525
        %1534 = vrot.lane.b32.xlu0 %v1533, 9
        %v1535 = vpop.permute.xlu0 %1534
        %v1536 = vmul.f32 %v1535, %v558
        %1537 = vrot.lane.b32.xlu0 %v1533, 8
        %v1538 = vpop.permute.xlu0 %1537
        %1539 = vrot.lane.b32.xlu0 %v1533, 7
        %v1540 = vpop.permute.xlu0 %1539
        %v1541 = vmul.f32 %v1540, %v567
        %1542 = vrot.lane.b32.xlu0 %v1533, 1
        %v1543 = vpop.permute.xlu0 %1542
        %v1544 = vmul.f32 %v1543, %v574
        %1545 = vrot.lane.b32.xlu0 %v1533, 127
        %v1546 = vpop.permute.xlu0 %1545
        %v1547 = vmul.f32 %v1546, %v581
        %1548 = vrot.lane.b32.xlu0 %v1533, 121
        %v1549 = vpop.permute.xlu0 %1548
        %v1550 = vmul.f32 %v1549, %v588
        %1551 = vrot.lane.b32.xlu0 %v1533, 120
        %v1552 = vpop.permute.xlu0 %1551
        %1553 = vrot.lane.b32.xlu0 %v1533, 119
        %v1554 = vpop.permute.xlu0 %1553
        %v1555 = vmul.f32 %v1554, %v597
        %1556 = vmatprep.subr.mxu0 0.0
        %1557 = vmatpush1.msra.mxu0 %v1536
        %1558 = vmatprep.subr.mxu0 0.0
        %1559 = vmatpush1.msra.mxu0 %v1538
        %1560 = vmatprep.subr.mxu0 0.0
        %1561 = vmatpush1.msra.mxu0 %v1541
        %1562 = vmatprep.subr.mxu0 0.0
        %1563 = vmatpush1.msra.mxu0 %v1544
        %1564 = vmatprep.subr.mxu0 0.0
        %1565 = vmatpush1.msra.mxu0 %v1533
        %1566 = vmatprep.subr.mxu0 0.0
        %1567 = vmatpush1.msra.mxu0 %v1547
        %1568 = vmatprep.subr.mxu0 0.0
        %1569 = vmatpush1.msra.mxu0 %v1550
        %1570 = vmatprep.subr.mxu0 0.0
        %1571 = vmatpush1.msra.mxu0 %v1552
        %1572 = vmatprep.subr.mxu0 0.0
        %1573 = vmatpush1.msra.mxu0 %v1555
        %1574 = vmatprep.subr.mxu0 0.0
        %1575 = vmatpush1.msra.mxu0 0.0
        %1576 = vmatprep.subr.mxu0 0.0
        %1577 = vmatpush1.msra.mxu0 0.0
        %1578 = vmatprep.subr.mxu0 0.0
        %1579 = vmatpush1.msra.mxu0 0.0
        %1580 = vmatprep.subr.mxu0 0.0
        %1581 = vmatpush1.msra.mxu0 0.0
        %1582 = vmatprep.subr.mxu0 0.0
        %1583 = vmatpush1.msra.mxu0 0.0
        %1584 = vmatprep.subr.mxu0 0.0
        %1585 = vmatpush1.msra.mxu0 0.0
        %1586 = vmatprep.subr.mxu0 0.0
        %1587 = vmatpush1.msra.mxu0 0.0
        %1588 = vmatprep.subr.mxu0 0.0
        %1589 = vmatpush1.msra.mxu0 0.0
        %1590 = vmatprep.subr.mxu0 0.0
        %1591 = vmatpush1.msra.mxu0 0.0
        %1592 = vmatprep.subr.mxu0 0.0
        %1593 = vmatpush1.msra.mxu0 0.0
        %1594 = vmatprep.subr.mxu0 0.0
        %1595 = vmatpush1.msra.mxu0 0.0
        %1596 = vmatprep.subr.mxu0 0.0
        %1597 = vmatpush1.msra.mxu0 0.0
        %1598 = vmatprep.subr.mxu0 0.0
        %1599 = vmatpush1.msra.mxu0 0.0
        %1600 = vmatprep.subr.mxu0 0.0
        %1601 = vmatpush1.msra.mxu0 0.0
        %1602 = vmatprep.subr.mxu0 0.0
        %1603 = vmatpush1.msra.mxu0 0.0
        %1604 = vmatprep.subr.mxu0 0.0
        %1605 = vmatpush1.msra.mxu0 0.0
        %1606 = vmatprep.subr.mxu0 0.0
        %1607 = vmatpush1.msra.mxu0 0.0
        %1608 = vmatprep.subr.mxu0 0.0
        %1609 = vmatpush1.msra.mxu0 0.0
        %1610 = vmatprep.subr.mxu0 0.0
        %1611 = vmatpush1.msra.mxu0 0.0
        %1612 = vmatprep.subr.mxu0 0.0
        %1613 = vmatpush1.msra.mxu0 0.0
        %1614 = vmatprep.subr.mxu0 0.0
        %1615 = vmatpush1.msra.mxu0 0.0
        %1616 = vmatprep.subr.mxu0 0.0
        %1617 = vmatpush1.msra.mxu0 0.0
        %1618 = vmatprep.subr.mxu0 0.0
        %1619 = vmatpush1.msra.mxu0 0.0
        %1620 = vmatprep.mubr.f32.mxu0 0.0
        %1621 = vmatmul.mubr.f32.gmra.mrb[0].mxu0 %v1343
        %v1622 = vpop.f32.mrb[0].mxu0
        %v1623 = vadd.f32 0.0, %v1622
        %v1624 = vpop.f32.mrb[0].mxu0
        %1625 = vdwg.mxu0
        %v1626 = vadd.f32 %v757, %v1623
        %v1627 = vtanh.pop %v1626
        %v1628 = vsub.f32 1.0, %v1532
        %v1629 = vmul.f32 %v1421, %v1628
        %v1630 = vmul.f32 %v1627, %v1532
        %v1631 = vadd.f32 %v1629, %v1630
        %v1632 = vmul.f32 %v1631, %v986
        %v1634 = vrot.slane %v987, 1
        %1635 = vrot.lane.b32.xlu0 %v1634, 64
        %v1636 = vpop.permute.xlu0 %1635
        %v1638 = vrot.slane %v987, 2
        %v1640 = vrot.slane %v987, 3
        %1641 = vrot.lane.b32.xlu0 %v1640, 64
        %v1642 = vpop.permute.xlu0 %1641
        %v1645 = vrot.slane %v1421, 1
        %1646 = vrot.lane.b32.xlu0 %v1645, 64
        %v1647 = vpop.permute.xlu0 %1646
        %v1649 = vrot.slane %v1421, 2
        %v1651 = vrot.slane %v1421, 3
        %1652 = vrot.lane.b32.xlu0 %v1651, 64
        %v1653 = vpop.permute.xlu0 %1652
        %vm1655 = vcmask 523264
        %v1656 = vsel %vm1655, %v987, %v1636
        %v1657 = vsel %vm1655, %v1638, %v1642
        %v1658 = vsel %vm1655, %v1421, %v1647
        %v1659 = vsel %vm1655, %v1649, %v1653
        %v1661 = vrot.slane %v1198, 1
        %1662 = vrot.lane.b32.xlu0 %v1661, 64
        %v1663 = vpop.permute.xlu0 %1662
        %v1665 = vrot.slane %v1198, 2
        %v1667 = vrot.slane %v1198, 3
        %1668 = vrot.lane.b32.xlu0 %v1667, 64
        %v1669 = vpop.permute.xlu0 %1668
        %v1672 = vrot.slane %v1632, 1
        %1673 = vrot.lane.b32.xlu0 %v1672, 64
        %v1674 = vpop.permute.xlu0 %1673
        %v1676 = vrot.slane %v1632, 2
        %v1678 = vrot.slane %v1632, 3
        %1679 = vrot.lane.b32.xlu0 %v1678, 64
        %v1680 = vpop.permute.xlu0 %1679
        %v1682 = vsel %vm1655, %v1198, %v1663
        %v1683 = vsel %vm1655, %v1665, %v1669
        %v1684 = vsel %vm1655, %v1632, %v1674
        %v1685 = vsel %vm1655, %v1676, %v1680
        %v1690 = vrot.slane %v1682, 7
        %v1691 = vrot.slane %v1683, 7
        %v1692 = vrot.slane %v1684, 7
        %v1693 = vrot.slane %v1685, 7
        %vm1698 = vcmask 1040384
        %v1699 = vsel %vm1698, %v1656, %v1690
        %v1700 = vsel %vm1698, %v1657, %v1691
        %v1701 = vsel %vm1698, %v1658, %v1692
        %v1702 = vsel %vm1698, %v1659, %v1693
        %v1703 = vld [vmem:[#allocation10] sm:$0xff]
        %v1704 = vld [vmem:[#allocation10 + $0x8] sm:$0xff]
        %v1705 = vld [vmem:[#allocation10 + $0x10] sm:$0xff]
        %v1706 = vld [vmem:[#allocation10 + $0x18] sm:$0xff]
        %v1707 = vld [vmem:[#allocation10 + $0x20] sm:$0xff]
        %v1708 = vld [vmem:[#allocation10 + $0x28] sm:$0xff]
        %v1709 = vld [vmem:[#allocation10 + $0x30] sm:$0xff]
        %v1710 = vld [vmem:[#allocation10 + $0x38] sm:$0xff]
        %v1711 = vld [vmem:[#allocation10 + $0x40] sm:$0xff]
        %v1712 = vld [vmem:[#allocation10 + $0x48] sm:$0xff]
        %v1713 = vld [vmem:[#allocation10 + $0x50] sm:$0xff]
        %v1714 = vld [vmem:[#allocation10 + $0x58] sm:$0xff]
        %v1715 = vld [vmem:[#allocation10 + $0x60] sm:$0xff]
        %v1716 = vld [vmem:[#allocation10 + $0x68] sm:$0xff]
        %v1717 = vld [vmem:[#allocation10 + $0x70] sm:$0xff]
        %v1718 = vld [vmem:[#allocation10 + $0x78] sm:$0xff]
        %v1719 = vld [vmem:[#allocation10 + $0x80] sm:$0xff]
        %v1720 = vld [vmem:[#allocation10 + $0x88] sm:$0xff]
        %v1721 = vld [vmem:[#allocation10 + $0x90] sm:$0xff]
        %v1722 = vld [vmem:[#allocation10 + $0x98] sm:$0xff]
        %v1723 = vld [vmem:[#allocation10 + $0xa0] sm:$0xff]
        %v1724 = vld [vmem:[#allocation10 + $0xa8] sm:$0xff]
        %v1725 = vld [vmem:[#allocation10 + $0xb0] sm:$0xff]
        %v1726 = vld [vmem:[#allocation10 + $0xb8] sm:$0xff]
        %v1727 = vld [vmem:[#allocation10 + $0xc0] sm:$0xff]
        %v1728 = vld [vmem:[#allocation10 + $0xc8] sm:$0xff]
        %v1729 = vld [vmem:[#allocation10 + $0xd0] sm:$0xff]
        %v1730 = vld [vmem:[#allocation10 + $0xd8] sm:$0xff]
        %v1731 = vld [vmem:[#allocation10 + $0xe0] sm:$0xff]
        %v1732 = vld [vmem:[#allocation10 + $0xe8] sm:$0xff]
        %v1733 = vld [vmem:[#allocation10 + $0xf0] sm:$0xff]
        %v1734 = vld [vmem:[#allocation10 + $0xf8] sm:$0xff]
        %v1735 = vld [vmem:[#allocation10 + $0x100] sm:$0xff]
        %v1736 = vld [vmem:[#allocation10 + $0x108] sm:$0xff]
        %v1737 = vld [vmem:[#allocation10 + $0x110] sm:$0xff]
        %v1738 = vld [vmem:[#allocation10 + $0x118] sm:$0xff]
        %v1739 = vld [vmem:[#allocation10 + $0x120] sm:$0xff]
        %v1740 = vld [vmem:[#allocation10 + $0x128] sm:$0xff]
        %v1741 = vld [vmem:[#allocation10 + $0x130] sm:$0xff]
        %v1742 = vld [vmem:[#allocation10 + $0x138] sm:$0xff]
        %v1743 = vld [vmem:[#allocation10 + $0x140] sm:$0xff]
        %v1744 = vld [vmem:[#allocation10 + $0x148] sm:$0xff]
        %v1745 = vld [vmem:[#allocation10 + $0x150] sm:$0xff]
        %v1746 = vld [vmem:[#allocation10 + $0x158] sm:$0xff]
        %v1747 = vld [vmem:[#allocation10 + $0x160] sm:$0xff]
        %v1748 = vld [vmem:[#allocation10 + $0x168] sm:$0xff]
        %v1749 = vld [vmem:[#allocation10 + $0x170] sm:$0xff]
        %v1750 = vld [vmem:[#allocation10 + $0x178] sm:$0xff]
        %v1751 = vld [vmem:[#allocation10 + $0x180] sm:$0xff]
        %v1752 = vld [vmem:[#allocation10 + $0x188] sm:$0xff]
        %v1753 = vld [vmem:[#allocation10 + $0x190] sm:$0xff]
        %v1754 = vld [vmem:[#allocation10 + $0x198] sm:$0xff]
        %v1755 = vld [vmem:[#allocation10 + $0x1a0] sm:$0xff]
        %v1756 = vld [vmem:[#allocation10 + $0x1a8] sm:$0xff]
        %v1757 = vld [vmem:[#allocation10 + $0x1b0] sm:$0xff]
        %v1758 = vld [vmem:[#allocation10 + $0x1b8] sm:$0xff]
        %v1759 = vld [vmem:[#allocation10 + $0x1c0] sm:$0xff]
        %v1760 = vld [vmem:[#allocation10 + $0x1c8] sm:$0xff]
        %v1761 = vld [vmem:[#allocation10 + $0x1d0] sm:$0xff]
        %v1762 = vld [vmem:[#allocation10 + $0x1d8] sm:$0xff]
        %v1763 = vld [vmem:[#allocation10 + $0x1e0] sm:$0xff]
        %v1764 = vld [vmem:[#allocation10 + $0x1e8] sm:$0xff]
        %v1765 = vld [vmem:[#allocation10 + $0x1f0] sm:$0xff]
        %v1766 = vld [vmem:[#allocation10 + $0x1f8] sm:$0xff]
        %v1767 = vld [vmem:[#allocation11] sm:$0x1]
        %v1769 = vlaneseq
        %v1770 = vshrl.u32 %v1769, 7
        %v1771 = vsub.s32 0, %v1770
        %v1772 = vrot.slane %v1767, %v1771
        %1774 = vmatprep.subr.mxu0 0.0
        %1775 = vmatpush1.msra.mxu0 %v1703
        %1776 = vmatprep.subr.mxu0 0.0
        %1777 = vmatpush1.msra.mxu0 %v1704
        %1778 = vmatprep.subr.mxu0 0.0
        %1779 = vmatpush1.msra.mxu0 %v1705
        %1780 = vmatprep.subr.mxu0 0.0
        %1781 = vmatpush1.msra.mxu0 %v1706
        %1782 = vmatprep.subr.mxu0 0.0
        %1783 = vmatpush1.msra.mxu0 %v1707
        %1784 = vmatprep.subr.mxu0 0.0
        %1785 = vmatpush1.msra.mxu0 %v1708
        %1786 = vmatprep.subr.mxu0 0.0
        %1787 = vmatpush1.msra.mxu0 %v1709
        %1788 = vmatprep.subr.mxu0 0.0
        %1789 = vmatpush1.msra.mxu0 %v1710
        %1790 = vmatprep.subr.mxu0 0.0
        %1791 = vmatpush1.msra.mxu0 %v1711
        %1792 = vmatprep.subr.mxu0 0.0
        %1793 = vmatpush1.msra.mxu0 %v1712
        %1794 = vmatprep.subr.mxu0 0.0
        %1795 = vmatpush1.msra.mxu0 %v1713
        %1796 = vmatprep.subr.mxu0 0.0
        %1797 = vmatpush1.msra.mxu0 %v1714
        %1798 = vmatprep.subr.mxu0 0.0
        %1799 = vmatpush1.msra.mxu0 %v1715
        %1800 = vmatprep.subr.mxu0 0.0
        %1801 = vmatpush1.msra.mxu0 %v1716
        %1802 = vmatprep.subr.mxu0 0.0
        %1803 = vmatpush1.msra.mxu0 %v1717
        %1804 = vmatprep.subr.mxu0 0.0
        %1805 = vmatpush1.msra.mxu0 %v1718
        %1806 = vmatprep.subr.mxu0 0.0
        %1807 = vmatpush1.msra.mxu0 %v1719
        %1808 = vmatprep.subr.mxu0 0.0
        %1809 = vmatpush1.msra.mxu0 %v1720
        %1810 = vmatprep.subr.mxu0 0.0
        %1811 = vmatpush1.msra.mxu0 %v1721
        %1812 = vmatprep.subr.mxu0 0.0
        %1813 = vmatpush1.msra.mxu0 %v1722
        %1814 = vmatprep.subr.mxu0 0.0
        %1815 = vmatpush1.msra.mxu0 %v1723
        %1816 = vmatprep.subr.mxu0 0.0
        %1817 = vmatpush1.msra.mxu0 %v1724
        %1818 = vmatprep.subr.mxu0 0.0
        %1819 = vmatpush1.msra.mxu0 %v1725
        %1820 = vmatprep.subr.mxu0 0.0
        %1821 = vmatpush1.msra.mxu0 %v1726
        %1822 = vmatprep.subr.mxu0 0.0
        %1823 = vmatpush1.msra.mxu0 %v1727
        %1824 = vmatprep.subr.mxu0 0.0
        %1825 = vmatpush1.msra.mxu0 %v1728
        %1826 = vmatprep.subr.mxu0 0.0
        %1827 = vmatpush1.msra.mxu0 %v1729
        %1828 = vmatprep.subr.mxu0 0.0
        %1829 = vmatpush1.msra.mxu0 %v1730
        %1830 = vmatprep.subr.mxu0 0.0
        %1831 = vmatpush1.msra.mxu0 %v1731
        %1832 = vmatprep.subr.mxu0 0.0
        %1833 = vmatpush1.msra.mxu0 %v1732
        %1834 = vmatprep.subr.mxu0 0.0
        %1835 = vmatpush1.msra.mxu0 %v1733
        %1836 = vmatprep.subr.mxu0 0.0
        %1837 = vmatpush1.msra.mxu0 %v1734
        %1838 = vmatprep.mubr.f32.mxu0 %v1700
        %1839 = vmatmul.mubr.f32.gmra.mrb[0].mxu0 %v1699
        %v1840 = vpop.f32.mrb[0].mxu0
        %v1841 = vadd.f32 %v1772, %v1840
        %v1842 = vpop.f32.mrb[0].mxu0
        %1843 = vdwg.mxu0
        %1844 = vmatprep.subr.mxu0 0.0
        %1845 = vmatpush1.msra.mxu0 %v1735
        %1846 = vmatprep.subr.mxu0 0.0
        %1847 = vmatpush1.msra.mxu0 %v1736
        %1848 = vmatprep.subr.mxu0 0.0
        %1849 = vmatpush1.msra.mxu0 %v1737
        %1850 = vmatprep.subr.mxu0 0.0
        %1851 = vmatpush1.msra.mxu0 %v1738
        %1852 = vmatprep.subr.mxu0 0.0
        %1853 = vmatpush1.msra.mxu0 %v1739
        %1854 = vmatprep.subr.mxu0 0.0
        %1855 = vmatpush1.msra.mxu0 %v1740
        %1856 = vmatprep.subr.mxu0 0.0
        %1857 = vmatpush1.msra.mxu0 %v1741
        %1858 = vmatprep.subr.mxu0 0.0
        %1859 = vmatpush1.msra.mxu0 %v1742
        %1860 = vmatprep.subr.mxu0 0.0
        %1861 = vmatpush1.msra.mxu0 %v1743
        %1862 = vmatprep.subr.mxu0 0.0
        %1863 = vmatpush1.msra.mxu0 %v1744
        %1864 = vmatprep.subr.mxu0 0.0
        %1865 = vmatpush1.msra.mxu0 %v1745
        %1866 = vmatprep.subr.mxu0 0.0
        %1867 = vmatpush1.msra.mxu0 %v1746
        %1868 = vmatprep.subr.mxu0 0.0
        %1869 = vmatpush1.msra.mxu0 %v1747
        %1870 = vmatprep.subr.mxu0 0.0
        %1871 = vmatpush1.msra.mxu0 %v1748
        %1872 = vmatprep.subr.mxu0 0.0
        %1873 = vmatpush1.msra.mxu0 %v1749
        %1874 = vmatprep.subr.mxu0 0.0
        %1875 = vmatpush1.msra.mxu0 %v1750
        %1876 = vmatprep.subr.mxu0 0.0
        %1877 = vmatpush1.msra.mxu0 %v1751
        %1878 = vmatprep.subr.mxu0 0.0
        %1879 = vmatpush1.msra.mxu0 %v1752
        %1880 = vmatprep.subr.mxu0 0.0
        %1881 = vmatpush1.msra.mxu0 %v1753
        %1882 = vmatprep.subr.mxu0 0.0
        %1883 = vmatpush1.msra.mxu0 %v1754
        %1884 = vmatprep.subr.mxu0 0.0
        %1885 = vmatpush1.msra.mxu0 %v1755
        %1886 = vmatprep.subr.mxu0 0.0
        %1887 = vmatpush1.msra.mxu0 %v1756
        %1888 = vmatprep.subr.mxu0 0.0
        %1889 = vmatpush1.msra.mxu0 %v1757
        %1890 = vmatprep.subr.mxu0 0.0
        %1891 = vmatpush1.msra.mxu0 %v1758
        %1892 = vmatprep.subr.mxu0 0.0
        %1893 = vmatpush1.msra.mxu0 %v1759
        %1894 = vmatprep.subr.mxu0 0.0
        %1895 = vmatpush1.msra.mxu0 %v1760
        %1896 = vmatprep.subr.mxu0 0.0
        %1897 = vmatpush1.msra.mxu0 %v1761
        %1898 = vmatprep.subr.mxu0 0.0
        %1899 = vmatpush1.msra.mxu0 %v1762
        %1900 = vmatprep.subr.mxu0 0.0
        %1901 = vmatpush1.msra.mxu0 %v1763
        %1902 = vmatprep.subr.mxu0 0.0
        %1903 = vmatpush1.msra.mxu0 %v1764
        %1904 = vmatprep.subr.mxu0 0.0
        %1905 = vmatpush1.msra.mxu0 %v1765
        %1906 = vmatprep.subr.mxu0 0.0
        %1907 = vmatpush1.msra.mxu0 %v1766
        %1908 = vmatprep.mubr.f32.mxu0 %v1702
        %1909 = vmatmul.mubr.f32.gmra.mrb[0].mxu0 %v1701
        %v1910 = vpop.f32.mrb[0].mxu0
        %v1911 = vadd.f32 %v1841, %v1910
        %v1912 = vpop.f32.mrb[0].mxu0
        %1913 = vdwg.mxu0
        %v1914 = vmax.f32 %v1911, 0.0
        %v1915 = vld [vmem:[%s10] sm:$0xff]
        %v1916 = vld [vmem:[%s10 + $0x8] sm:$0xff]
        %v1917 = vld [vmem:[%s10 + $0x10] sm:$0xff]
        %v1918 = vld [vmem:[%s10 + $0x18] sm:$0xff]
        %v1919 = vld [vmem:[%s10 + $0x20] sm:$0xff]
        %v1920 = vld [vmem:[%s10 + $0x28] sm:$0xff]
        %v1921 = vld [vmem:[%s10 + $0x30] sm:$0xff]
        %v1922 = vld [vmem:[%s10 + $0x38] sm:$0xff]
        %v1923 = vld [vmem:[%s10 + $0x40] sm:$0xff]
        %v1924 = vld [vmem:[%s10 + $0x48] sm:$0xff]
        %v1925 = vld [vmem:[%s10 + $0x50] sm:$0xff]
        %v1926 = vld [vmem:[%s10 + $0x58] sm:$0xff]
        %v1927 = vld [vmem:[%s10 + $0x60] sm:$0xff]
        %v1928 = vld [vmem:[%s10 + $0x68] sm:$0xff]
        %v1929 = vld [vmem:[%s10 + $0x70] sm:$0xff]
        %v1930 = vld [vmem:[%s10 + $0x78] sm:$0xff]
        %v1931 = vld [vmem:[%s11] sm:$0x1]
        %v1933 = vlaneseq
        %v1934 = vshrl.u32 %v1933, 7
        %v1935 = vsub.s32 0, %v1934
        %v1936 = vrot.slane %v1931, %v1935
        %1938 = vmatprep.subr.mxu0 0.0
        %1939 = vmatpush1.msra.mxu0 %v1915
        %1940 = vmatprep.subr.mxu0 0.0
        %1941 = vmatpush1.msra.mxu0 %v1916
        %1942 = vmatprep.subr.mxu0 0.0
        %1943 = vmatpush1.msra.mxu0 %v1917
        %1944 = vmatprep.subr.mxu0 0.0
        %1945 = vmatpush1.msra.mxu0 %v1918
        %1946 = vmatprep.subr.mxu0 0.0
        %1947 = vmatpush1.msra.mxu0 %v1919
        %1948 = vmatprep.subr.mxu0 0.0
        %1949 = vmatpush1.msra.mxu0 %v1920
        %1950 = vmatprep.subr.mxu0 0.0
        %1951 = vmatpush1.msra.mxu0 %v1921
        %1952 = vmatprep.subr.mxu0 0.0
        %1953 = vmatpush1.msra.mxu0 %v1922
        %1954 = vmatprep.subr.mxu0 0.0
        %1955 = vmatpush1.msra.mxu0 %v1923
        %1956 = vmatprep.subr.mxu0 0.0
        %1957 = vmatpush1.msra.mxu0 %v1924
        %1958 = vmatprep.subr.mxu0 0.0
        %1959 = vmatpush1.msra.mxu0 %v1925
        %1960 = vmatprep.subr.mxu0 0.0
        %1961 = vmatpush1.msra.mxu0 %v1926
        %1962 = vmatprep.subr.mxu0 0.0
        %1963 = vmatpush1.msra.mxu0 %v1927
        %1964 = vmatprep.subr.mxu0 0.0
        %1965 = vmatpush1.msra.mxu0 %v1928
        %1966 = vmatprep.subr.mxu0 0.0
        %1967 = vmatpush1.msra.mxu0 %v1929
        %1968 = vmatprep.subr.mxu0 0.0
        %1969 = vmatpush1.msra.mxu0 %v1930
        %1970 = vmatprep.subr.mxu0 0.0
        %1971 = vmatpush1.msra.mxu0 0.0
        %1972 = vmatprep.subr.mxu0 0.0
        %1973 = vmatpush1.msra.mxu0 0.0
        %1974 = vmatprep.subr.mxu0 0.0
        %1975 = vmatpush1.msra.mxu0 0.0
        %1976 = vmatprep.subr.mxu0 0.0
        %1977 = vmatpush1.msra.mxu0 0.0
        %1978 = vmatprep.subr.mxu0 0.0
        %1979 = vmatpush1.msra.mxu0 0.0
        %1980 = vmatprep.subr.mxu0 0.0
        %1981 = vmatpush1.msra.mxu0 0.0
        %1982 = vmatprep.subr.mxu0 0.0
        %1983 = vmatpush1.msra.mxu0 0.0
        %1984 = vmatprep.subr.mxu0 0.0
        %1985 = vmatpush1.msra.mxu0 0.0
        %1986 = vmatprep.subr.mxu0 0.0
        %1987 = vmatpush1.msra.mxu0 0.0
        %1988 = vmatprep.subr.mxu0 0.0
        %1989 = vmatpush1.msra.mxu0 0.0
        %1990 = vmatprep.subr.mxu0 0.0
        %1991 = vmatpush1.msra.mxu0 0.0
        %1992 = vmatprep.subr.mxu0 0.0
        %1993 = vmatpush1.msra.mxu0 0.0
        %1994 = vmatprep.subr.mxu0 0.0
        %1995 = vmatpush1.msra.mxu0 0.0
        %1996 = vmatprep.subr.mxu0 0.0
        %1997 = vmatpush1.msra.mxu0 0.0
        %1998 = vmatprep.subr.mxu0 0.0
        %1999 = vmatpush1.msra.mxu0 0.0
        %2000 = vmatprep.subr.mxu0 0.0
        %2001 = vmatpush1.msra.mxu0 0.0
        %2002 = vmatprep.mubr.f32.mxu0 0.0
        %2003 = vmatmul.mubr.f32.gmra.mrb[0].mxu0 %v1914
        %v2004 = vpop.f32.mrb[0].mxu0
        %v2005 = vadd.f32 %v1936, %v2004
        %v2006 = vpop.f32.mrb[0].mxu0
        %2007 = vdwg.mxu0
        %v2008 = vmax.f32 %v2005, 0.0
        %v2009 = vld [vmem:[%s12] sm:$0x1]
        %v2011 = vlaneseq
        %v2012 = vshrl.u32 %v2011, 7
        %v2013 = vsub.s32 0, %v2012
        %v2014 = vrot.slane %v2009, %v2013
        %v2016 = vmul.f32 %v2008, %v2014
        %vm2017 = vcmask 1041408
        %v2018 = vsel %vm2017, %v2016, 0.0
        %2019 = vadd.xlane.f32.xlu0 %v2018
        %v2020 = vpop.xlane.xlu0 %2019
        %v2021 = vld [vmem:[#allocation2] sm:$0x1]
        %v2023 = vlaneseq
        %v2024 = vshrl.u32 %v2023, 7
        %v2025 = vsub.s32 0, %v2024
        %v2026 = vrot.slane %v2021, %v2025
        %v2028 = vadd.f32 %v2020, %v2026
        %vm2029 = vcmask 1024
        %2030 = vst.msk [vmem:[%s549] sm:$0x3] %vm2029, %v2028
        %p2031 = scmp.lt.s32.totalorder %s31, 1
        %s2032 = scalar_select %p2031, %s31, 1
        %s2033 = smul.addr %s2032, 2
        %s2034 = scalar_lea.vmem %s14, %s2033
        // Predicated region
        $region101: #{forward.1} parent=75 // pred_check
          %p2035 = pneg %p348
        $region102: #{forward.1} parent=75 // pred_check_branch
          %2037 = sbr.rel (%p2035) target = $region104
        $region103: #{forward.1} parent=75 // pred_region
          _
        $region104: #{forward.1} parent=75 // pred_fallthru
          _
      $region76: #{forward.1} parent=5 // pred_fallthru
        _
      %p2038 = scmp.le.s32.totalorder 2, %s26
      // Predicated region
      $region105: #{forward.1} parent=5 // pred_check
        %p2039 = pneg %p2038
      $region106: #{forward.1} parent=5 // pred_check_branch
        %2041 = sbr.rel (%p2039) target = $region108
      $region107: #{forward.1} parent=5 // pred_region
        %s2042 = ssub.s32 %s26, 2
        // Predicated region
        $region109: #{forward.1} parent=107 // pred_check
          %p2043 = pneg %p354
        $region110: #{forward.1} parent=107 // pred_check_branch
          %2045 = sbr.rel (%p2043) target = $region112
        $region111: #{forward.1} parent=107 // pred_region
          %p2046 = scmp.lt.s32.totalorder %s32, 1
          %s2047 = scalar_select %p2046, %s32, 1
          %s2048 = smul.addr %s2047, 2
          %s2049 = scalar_lea.vmem %s14, %s2048
        $region112: #{forward.1} parent=107 // pred_fallthru
          _
      $region108: #{forward.1} parent=5 // pred_fallthru
        _
    $region6: #{forward.1} parent=1 // loop_footer
      %s30 = sadd.s32 1, %s26
    $region7: #{forward.1} parent=1 // loop_footer_branch
      %25 = sbr.rel target = $region3
    $region8: #{forward.1} parent=1 // loop_exit
      _
    %2050 = vsyncpa [#allocation4], 1
    %s2051 = scalar_lea.sflag [#allocation4], 1
    %2052 = vsyncpa %s2051, 1
    %2053 = vsyncpa [#allocation6], 1
    %2054 = vsyncpa [#allocation9], 1
    %2055 = vsyncpa [#allocation12], 1

</llo_original>
